<compile_context>
chip_gen: v6e
topology: v6e:2x2x1
jax: 0.10.0
libtpu: 0.0.40
codegen_flags: <defaults>
</compile_context>

<pallas_src>
import jax
import jax.numpy as jnp
from jax import lax
from jax.experimental import pallas as pl
from jax.experimental.pallas import tpu as pltpu  # noqa: F401  (TPU backend)

# ----------------------------- config (small, synthetic) -----------------------------
B = 2          # batch
T = 8          # seq length
H = 32         # hidden_size
H2 = H // 2    # per-direction GRU hidden
V = 50         # vocab size
K = 7          # tagset size (e.g. PAD/O/B-PER/I-PER/B-LOC/I-LOC/B-ORG)
KP = 8         # tagset padded to 8 lanes
P = 64         # max positions
NEG = -1e9     # "forbidden" CRF score for padded tag lanes


# =============================== fused Pallas kernel ==================================

def gru_crf_fused_kernel(xcat_ref, mcat_ref, maskk_ref,
                         wih_ref, bih_ref, whh_ref, bhh_ref,
                         wout_ref, bout_ref,
                         start_ref, end_ref, transT_ref,
                         em_ref, logz_ref, hist_ref, fin_ref):
    """BiGRU + output projection + CRF logZ + Viterbi forward, one invocation.

    Weight layout: per gate g in (r, z, n), columns [2g*H2:(2g+1)*H2] are the forward
    direction and [(2g+1)*H2:(2g+2)*H2] the backward direction, so one matmul against
    hcat = [h_f | h_b] produces gate pre-activations lane-aligned with hcat.
    """
    Tn, Bn, twoH2 = mcat_ref.shape
    nH2 = twoH2 // 2
    Kp = transT_ref.shape[0]
    f32 = jnp.float32
    bf16 = jnp.bfloat16

    # ---------- stage 1: input projection hoisted off the serial recurrence ----------
    # bf16 x bf16 MXU matmul, f32 accumulation.
    gi_all = jnp.dot(xcat_ref[...], wih_ref[...],
                     preferred_element_type=f32) + bih_ref[...]        # (T*B, 6*H2) f32

    whhT = whh_ref[...]                                                # (2*H2, 6*H2) bf16
    bhh = jnp.broadcast_to(bhh_ref[...], (Bn, 3 * twoH2))              # hoisted broadcast

    # ---------- stage 2: serial bidirectional GRU recurrence (fully unrolled) ----------
    hcat = jnp.zeros((Bn, twoH2), f32)
    hm_steps = [None] * Tn
    for t in range(Tn):
        gi = gi_all[t * Bn:(t + 1) * Bn, :]                            # (B, 6*H2)
        gh = jnp.dot(hcat.astype(bf16), whhT,
                     preferred_element_type=f32) + bhh                 # (B, 6*H2)
        r = jax.nn.sigmoid(gi[:, 0:twoH2] + gh[:, 0:twoH2])
        z = jax.nn.sigmoid(gi[:, twoH2:2 * twoH2] + gh[:, twoH2:2 * twoH2])
        n = jnp.tanh(gi[:, 2 * twoH2:3 * twoH2] + r * gh[:, 2 * twoH2:3 * twoH2])
        h_new = (1.0 - z) * n + z * hcat
        # pack_padded_sequence semantics: padded steps keep the previous hidden;
        # pad_packed_sequence semantics: padded outputs are zero.
        m_cat = mcat_ref[t]                                            # (B, 2*H2), precomputed
        hcat = m_cat * h_new + (1.0 - m_cat) * hcat
        hm_steps[t] = m_cat * hcat                                     # fwd@t | bwd@(T-1-t)

    # ---------- stage 3: output projection — ONE matmul over all timesteps ----------
    # Re-pair halves so row block s holds [h_fwd at time s | h_bwd at time s].
    hm_rows = [jnp.concatenate([hm_steps[s][:, 0:nH2],
                                hm_steps[Tn - 1 - s][:, nH2:twoH2]], axis=-1)
               for s in range(Tn)]
    hm_all = jnp.concatenate(hm_rows, axis=0)                          # (T*B, 2*H2) f32
    em_all = (jnp.dot(hm_all.astype(bf16), wout_ref[...],
                      preferred_element_type=f32) + bout_ref[...])     # (T*B, Kp) f32
    em_ref[...] = em_all                                               # single slab store

    # ---------- stage 4: CRF partition function (logZ) + Viterbi forward ----------
    transT = transT_ref[...]                          # transT[j, i] = trans[i -> j], pad=NEG
    transT_b = jnp.broadcast_to(transT[None, :, :], (Bn, Kp, Kp))      # hoisted
    iota3 = lax.broadcasted_iota(jnp.int32, (Bn, Kp, Kp), 2)           # hoisted
    BIG = jnp.int32(2 ** 30)
    start = start_ref[...]                                             # (1, Kp)
    end = end_ref[...]                                                 # (1, Kp)

    em0 = em_all[0:Bn, :]
    s_lz = start + em0
    s_v = start + em0
    hist_rows = [jnp.zeros((Bn, Kp), jnp.int32)]
    for t in range(1, Tn):
        em_t = em_all[t * Bn:(t + 1) * Bn, :]
        m_t = maskk_ref[t]                                             # (B, Kp), precomputed
        # log-sum-exp recursion (masked: padded steps carry the score through)
        broad = s_lz[:, None, :] + transT_b                            # (B, Knext, Kprev)
        mx = jnp.max(broad, axis=-1, keepdims=True)
        lse = mx[..., 0] + jnp.log(jnp.sum(jnp.exp(broad - mx), axis=-1))
        s_lz = jnp.where(m_t > 0.5, lse + em_t, s_lz)
        # Viterbi max/argmax recursion (decode uses mask=None, as in the reference)
        broad_v = s_v[:, None, :] + transT_b
        mxv = jnp.max(broad_v, axis=-1, keepdims=True)
        cand = jnp.where(broad_v >= mxv, iota3, BIG)
        hist_rows.append(jnp.min(cand, axis=-1))                       # first-occurrence argmax
        s_v = mxv[..., 0] + em_t
    hist_ref[...] = jnp.concatenate(hist_rows, axis=0)                 # (T*B, Kp) single store

    final = s_lz + end
    mxl = jnp.max(final, axis=-1, keepdims=True)
    logz = mxl + jnp.log(jnp.sum(jnp.exp(final - mxl), axis=-1, keepdims=True))
    logz_ref[...] = jnp.broadcast_to(logz, (Bn, Kp))                   # lane-padded store
    fin_ref[...] = s_v + end


def run_fused(xcat2d, mcat, maskk, p):
    em, logz, hist, fin = pl.pallas_call(
        gru_crf_fused_kernel,
        out_shape=[jax.ShapeDtypeStruct((T * B, KP), jnp.float32),   # emissions slab
                   jax.ShapeDtypeStruct((B, KP), jnp.float32),       # log Z (lane-padded)
                   jax.ShapeDtypeStruct((T * B, KP), jnp.int32),     # viterbi backpointers
                   jax.ShapeDtypeStruct((B, KP), jnp.float32)],      # final viterbi scores
    )(xcat2d, mcat, maskk,
      p["wih_cat"], p["bih_cat"], p["whh_cat"], p["bhh_cat"],
      p["wout_cat"], p["bout_p"],
      p["start_p"], p["end_p"], p["transT_p"])
    return em, logz[:, 0], hist, fin


# =============================== glue (gathers / backtrack) ============================

def viterbi_backtrack(hist, fin):
    """Backtrack the Viterbi path (tiny, static T) — plain JAX glue."""
    best = jnp.argmax(fin, axis=-1).astype(jnp.int32)         # (B,)  pad lanes are -2e9
    bidx = jnp.arange(B)
    tags_rev = [best]
    for t in range(T - 1, 0, -1):
        best = hist[t, bidx, best]
        tags_rev.append(best)
    pred_tb = jnp.stack(tags_rev[::-1], axis=0)               # (T, B)
    return pred_tb.T                                          # (B, T)


def crf_gold_score(emissions, tags, maskf, start, end, trans):
    """Numerator of the CRF log-likelihood (gathers only -> plain JAX glue)."""
    bidx = jnp.arange(B)
    em_t = jnp.take_along_axis(emissions, tags[:, :, None], axis=2)[..., 0]   # (T, B)
    score = start[tags[0]] + em_t[0]
    trans_t = trans[tags[:-1], tags[1:]]                                      # (T-1, B)
    score = score + jnp.sum((trans_t + em_t[1:]) * maskf[1:], axis=0)
    seq_ends = jnp.sum(maskf, axis=0).astype(jnp.int32) - 1
    last_tags = tags[seq_ends, bidx]
    return score + end[last_tags]


# =============================== full forward ==========================================

@jax.jit
def gru_crf_forward(params, src, label, padding_mask):
    """Reproduces gruCrf.forward (eval mode): returns (loss, correct, predict, label)."""
    # ----- embedding (word + position + LayerNorm)  [glue]
    # TODO(synk): exact UER WordEmbedding internals (segment emb / emb dropout) approximated.
    emb = params["word_emb"][src] + params["pos_emb"][jnp.arange(T)][None, :, :]  # (B,T,H)
    mu = jnp.mean(emb, axis=-1, keepdims=True)
    var = jnp.mean((emb - mu) ** 2, axis=-1, keepdims=True)
    emb = (emb - mu) / jnp.sqrt(var + 1e-6) * params["ln_g"] + params["ln_b"]
    x = jnp.transpose(emb, (1, 0, 2)).astype(jnp.float32)                          # (T,B,H)

    maskf = padding_mask.T.astype(jnp.float32)                                     # (T,B)

    # time-aligned fused input: row t = [x[t] | x[T-1-t]] so fwd & bwd share one matmul
    # (bf16 operands for the MXU; accumulation stays f32 inside the kernel)
    xcat2d = (jnp.concatenate([x, x[::-1]], axis=-1)
              .reshape(T * B, 2 * H).astype(jnp.bfloat16))                         # (T*B,2H)

    # hoisted per-step mask blend for the fused hidden state: [mask[t] | mask[T-1-t]]
    m_f = jnp.broadcast_to(maskf[:, :, None], (T, B, H2))
    m_b = jnp.broadcast_to(maskf[::-1][:, :, None], (T, B, H2))
    mcat = jnp.concatenate([m_f, m_b], axis=-1)                                    # (T,B,2*H2)
    # hoisted lane-broadcast mask for the CRF recursion
    maskk = jnp.broadcast_to(maskf[:, :, None], (T, B, KP))                        # (T,B,Kp)

    # ----- ONE fused Pallas call: biGRU + projection + CRF logZ + Viterbi forward
    em_slab, log_z, hist_slab, fin = run_fused(xcat2d, mcat, maskk, params)
    emissions = em_slab.reshape(T, B, KP)[..., :K]                                 # (T,B,K)
    hist = hist_slab.reshape(T, B, KP)                                             # (T,B,Kp)

    # ----- CRF log-likelihood (reduction='sum'), loss = -llh / batch
    tags = label.T.astype(jnp.int32)                                               # (T,B)
    gold = crf_gold_score(emissions, tags, maskf, params["start"], params["end"],
                          params["trans"])
    llh = jnp.sum(gold - log_z)
    loss = -llh / B

    # ----- CRF decode (mask=None in the reference code -> full length)
    predict_bt = viterbi_backtrack(hist, fin)                                      # (B,T)

    label_flat = label.reshape(-1).astype(jnp.int32)
    predict_flat = predict_bt.reshape(-1).astype(jnp.int32)
    label_mask = (label_flat > 0).astype(jnp.int32)
    predict_flat = predict_flat * label_mask
    correct = jnp.sum((predict_flat == label_flat).astype(jnp.float32))
    return loss, correct, predict_flat, label_flat


# =============================== param init ============================================

def _combine_weights_T(wT_f, wT_b, h2):
    """Build the gate-major block matrix: per gate g, cols [fwd | bwd]."""
    in_f = wT_f.shape[0]
    in_b = wT_b.shape[0]
    out = jnp.zeros((in_f + in_b, 6 * h2), jnp.float32)
    for g in range(3):
        out = out.at[:in_f, (2 * g) * h2:(2 * g + 1) * h2].set(wT_f[:, g * h2:(g + 1) * h2])
        out = out.at[in_f:, (2 * g + 1) * h2:(2 * g + 2) * h2].set(wT_b[:, g * h2:(g + 1) * h2])
    return out


def _combine_bias(b_f, b_b, h2):
    parts = []
    for g in range(3):
        parts.append(b_f[:, g * h2:(g + 1) * h2])
        parts.append(b_b[:, g * h2:(g + 1) * h2])
    return jnp.concatenate(parts, axis=1)     # (1, 6*h2)


def init_params(key):
    ks = jax.random.split(key, 16)
    u = lambda k, shape, s: jax.random.uniform(k, shape, jnp.float32, -s, s)
    sg = 1.0 / jnp.sqrt(H2)
    p = {
        "word_emb": jax.random.normal(ks[0], (V, H), jnp.float32) * 0.02,
        "pos_emb": jax.random.normal(ks[1], (P, H), jnp.float32) * 0.02,
        "ln_g": jnp.ones((H,), jnp.float32),
        "ln_b": jnp.zeros((H,), jnp.float32),
    }
    # GRU weights in PyTorch layout (3*H2, in), gate order [r|z|n]; transpose and fuse
    # fwd/bwd directions into gate-major block matrices; matmul operands stored as bf16.
    w_ih_f, w_hh_f = u(ks[2], (3 * H2, H), sg), u(ks[3], (3 * H2, H2), sg)
    w_ih_b, w_hh_b = u(ks[4], (3 * H2, H), sg), u(ks[5], (3 * H2, H2), sg)
    bih_f, bhh_f = u(ks[6], (1, 3 * H2), sg), u(ks[7], (1, 3 * H2), sg)
    bih_b, bhh_b = u(ks[8], (1, 3 * H2), sg), u(ks[9], (1, 3 * H2), sg)
    p.update({
        "wih_cat": _combine_weights_T(w_ih_f.T, w_ih_b.T, H2).astype(jnp.bfloat16),  # (2H,6H2)
        "whh_cat": _combine_weights_T(w_hh_f.T, w_hh_b.T, H2).astype(jnp.bfloat16),  # (2H2,6H2)
        "bih_cat": _combine_bias(bih_f, bih_b, H2),                                  # (1,6H2) f32
        "bhh_cat": _combine_bias(bhh_f, bhh_b, H2),                                  # (1,6H2) f32
    })
    # output projection (K, H): transpose, pad tag lanes to KP, keep as bf16 MXU operand.
    w_out = u(ks[10], (K, H), 1.0 / jnp.sqrt(H))
    b_out = u(ks[11], (K,), 1.0 / jnp.sqrt(H))
    wout_pad = jnp.zeros((H, KP), jnp.float32).at[:, :K].set(w_out.T)
    p["wout_cat"] = wout_pad.astype(jnp.bfloat16)                 # rows 0:H2 fwd, H2:H bwd
    p["bout_p"] = jnp.zeros((1, KP), jnp.float32).at[0, :K].set(b_out)
    # CRF params (torchcrf init: uniform(-0.1, 0.1)); padded tag lanes get NEG (forbidden).
    start = u(ks[12], (K,), 0.1)
    end = u(ks[13], (K,), 0.1)
    trans = u(ks[14], (K, K), 0.1)
    p.update({"start": start, "end": end, "trans": trans})
    p["start_p"] = jnp.full((1, KP), NEG, jnp.float32).at[0, :K].set(start)
    p["end_p"] = jnp.full((1, KP), NEG, jnp.float32).at[0, :K].set(end)
    p["transT_p"] = jnp.full((KP, KP), NEG, jnp.float32).at[:K, :K].set(trans.T)
    return p


# =============================== main ===================================================

if __name__ == "__main__":
    key = jax.random.PRNGKey(0)
    kp, ks, kl = jax.random.split(key, 3)
    params = init_params(kp)

    src = jax.random.randint(ks, (B, T), 1, V, dtype=jnp.int32)
    label = jax.random.randint(kl, (B, T), 1, K, dtype=jnp.int32)
    lengths = jnp.array([T, T - 2], dtype=jnp.int32)
    padding_mask = (jnp.arange(T)[None, :] < lengths[:, None]).astype(jnp.int32)
    # zero out padded tokens / labels like a real pipeline would
    src = src * padding_mask
    label = label * padding_mask

    loss, correct, predict, label_flat = gru_crf_forward(params, src, label, padding_mask)
    jax.block_until_ready((loss, correct, predict, label_flat))
    assert jnp.isfinite(loss)
    print("KERNEL_OK")
</pallas_src>

<mosaic_0001>
module attributes {stable_mosaic.version = 11 : i64} {
  func.func @gru_crf_fused_kernel(%arg0: memref<16x64xbf16, #tpu.memory_space<vmem>>, %arg1: memref<8x2x32xf32, #tpu.memory_space<vmem>>, %arg2: memref<8x2x8xf32, #tpu.memory_space<vmem>>, %arg3: memref<64x96xbf16, #tpu.memory_space<vmem>>, %arg4: memref<1x96xf32, #tpu.memory_space<vmem>>, %arg5: memref<32x96xbf16, #tpu.memory_space<vmem>>, %arg6: memref<1x96xf32, #tpu.memory_space<vmem>>, %arg7: memref<32x8xbf16, #tpu.memory_space<vmem>>, %arg8: memref<1x8xf32, #tpu.memory_space<vmem>>, %arg9: memref<1x8xf32, #tpu.memory_space<vmem>>, %arg10: memref<1x8xf32, #tpu.memory_space<vmem>>, %arg11: memref<8x8xf32, #tpu.memory_space<vmem>>, %arg12: memref<16x8xf32, #tpu.memory_space<vmem>>, %arg13: memref<2x8xf32, #tpu.memory_space<vmem>>, %arg14: memref<16x8xi32, #tpu.memory_space<vmem>>, %arg15: memref<2x8xf32, #tpu.memory_space<vmem>>) attributes {dimension_semantics = [], scalar_prefetch = 0 : i64, scratch_operands = 0 : i64, tpu.core_type = #tpu.core_type<tc>} {
    %c0 = arith.constant 0 : index
    %c0_0 = arith.constant 0 : index
    %0 = vector.load %arg0[%c0, %c0_0] : memref<16x64xbf16, #tpu.memory_space<vmem>>, vector<16x64xbf16>
    %c0_1 = arith.constant 0 : index
    %c0_2 = arith.constant 0 : index
    %1 = vector.load %arg3[%c0_1, %c0_2] : memref<64x96xbf16, #tpu.memory_space<vmem>>, vector<64x96xbf16>
    %cst = arith.constant dense<0.000000e+00> : vector<16x96xf32>
    %2 = tpu.matmul %0, %1, %cst {dimension_numbers = #tpu.dot_dimension_numbers<[1], [0], [0], [1], [0, 0, 1, 1], [], []>} : vector<16x64xbf16>, vector<64x96xbf16>, vector<16x96xf32> -> vector<16x96xf32>
    %c0_3 = arith.constant 0 : index
    %c0_4 = arith.constant 0 : index
    %3 = vector.load %arg4[%c0_3, %c0_4] : memref<1x96xf32, #tpu.memory_space<vmem>>, vector<1x96xf32>
    %4 = vector.broadcast %3 : vector<1x96xf32> to vector<16x96xf32>
    %5 = arith.addf %2, %4 : vector<16x96xf32>
    %c0_5 = arith.constant 0 : index
    %c0_6 = arith.constant 0 : index
    %6 = vector.load %arg5[%c0_5, %c0_6] : memref<32x96xbf16, #tpu.memory_space<vmem>>, vector<32x96xbf16>
    %c0_7 = arith.constant 0 : index
    %c0_8 = arith.constant 0 : index
    %7 = vector.load %arg6[%c0_7, %c0_8] : memref<1x96xf32, #tpu.memory_space<vmem>>, vector<1x96xf32>
    %8 = vector.shape_cast %7 : vector<1x96xf32> to vector<1x96xf32>
    %9 = vector.broadcast %8 : vector<1x96xf32> to vector<2x96xf32>
    %cst_9 = arith.constant 0.000000e+00 : f32
    %10 = vector.broadcast %cst_9 : f32 to vector<2x32xf32>
    %11 = vector.extract_strided_slice %5 {offsets = [0, 0], sizes = [2, 96], strides = [1, 1]} : vector<16x96xf32> to vector<2x96xf32>
    %12 = arith.truncf %10 : vector<2x32xf32> to vector<2x32xbf16>
    %cst_10 = arith.constant dense<0.000000e+00> : vector<2x96xf32>
    %13 = tpu.matmul %12, %6, %cst_10 {dimension_numbers = #tpu.dot_dimension_numbers<[1], [0], [0], [1], [0, 0, 1, 1], [], []>} : vector<2x32xbf16>, vector<32x96xbf16>, vector<2x96xf32> -> vector<2x96xf32>
    %14 = arith.addf %13, %9 : vector<2x96xf32>
    %15 = vector.extract_strided_slice %11 {offsets = [0, 0], sizes = [2, 32], strides = [1, 1]} : vector<2x96xf32> to vector<2x32xf32>
    %16 = vector.extract_strided_slice %14 {offsets = [0, 0], sizes = [2, 32], strides = [1, 1]} : vector<2x96xf32> to vector<2x32xf32>
    %17 = arith.addf %15, %16 : vector<2x32xf32>
    %18 = arith.negf %17 : vector<2x32xf32>
    %19 = math.exp %18 : vector<2x32xf32>
    %cst_11 = arith.constant 1.000000e+00 : f32
    %20 = vector.broadcast %cst_11 : f32 to vector<2x32xf32>
    %21 = arith.addf %20, %19 : vector<2x32xf32>
    %22 = arith.divf %20, %21 : vector<2x32xf32>
    %23 = vector.extract_strided_slice %11 {offsets = [0, 32], sizes = [2, 32], strides = [1, 1]} : vector<2x96xf32> to vector<2x32xf32>
    %24 = vector.extract_strided_slice %14 {offsets = [0, 32], sizes = [2, 32], strides = [1, 1]} : vector<2x96xf32> to vector<2x32xf32>
    %25 = arith.addf %23, %24 : vector<2x32xf32>
    %26 = arith.negf %25 : vector<2x32xf32>
    %27 = math.exp %26 : vector<2x32xf32>
    %cst_12 = arith.constant 1.000000e+00 : f32
    %28 = vector.broadcast %cst_12 : f32 to vector<2x32xf32>
    %29 = arith.addf %28, %27 : vector<2x32xf32>
    %30 = arith.divf %28, %29 : vector<2x32xf32>
    %31 = vector.extract_strided_slice %11 {offsets = [0, 64], sizes = [2, 32], strides = [1, 1]} : vector<2x96xf32> to vector<2x32xf32>
    %32 = vector.extract_strided_slice %14 {offsets = [0, 64], sizes = [2, 32], strides = [1, 1]} : vector<2x96xf32> to vector<2x32xf32>
    %33 = arith.mulf %22, %32 : vector<2x32xf32>
    %34 = arith.addf %31, %33 : vector<2x32xf32>
    %35 = math.tanh %34 : vector<2x32xf32>
    %cst_13 = arith.constant 1.000000e+00 : f32
    %36 = vector.broadcast %cst_13 : f32 to vector<2x32xf32>
    %37 = arith.subf %36, %30 : vector<2x32xf32>
    %38 = arith.mulf %37, %35 : vector<2x32xf32>
    %39 = arith.mulf %30, %10 : vector<2x32xf32>
    %40 = arith.addf %38, %39 : vector<2x32xf32>
    %c0_14 = arith.constant 0 : index
    %c0_15 = arith.constant 0 : index
    %c0_16 = arith.constant 0 : index
    %41 = vector.load %arg1[%c0_14, %c0_15, %c0_16] : memref<8x2x32xf32, #tpu.memory_space<vmem>>, vector<1x2x32xf32>
    %42 = vector.shape_cast %41 : vector<1x2x32xf32> to vector<2x32xf32>
    %43 = arith.mulf %42, %40 : vector<2x32xf32>
    %cst_17 = arith.constant 1.000000e+00 : f32
    %44 = vector.broadcast %cst_17 : f32 to vector<2x32xf32>
    %45 = arith.subf %44, %42 : vector<2x32xf32>
    %46 = arith.mulf %45, %10 : vector<2x32xf32>
    %47 = arith.addf %43, %46 : vector<2x32xf32>
    %48 = arith.mulf %42, %47 : vector<2x32xf32>
    %49 = vector.extract_strided_slice %5 {offsets = [2, 0], sizes = [2, 96], strides = [1, 1]} : vector<16x96xf32> to vector<2x96xf32>
    %50 = arith.truncf %47 : vector<2x32xf32> to vector<2x32xbf16>
    %cst_18 = arith.constant dense<0.000000e+00> : vector<2x96xf32>
    %51 = tpu.matmul %50, %6, %cst_18 {dimension_numbers = #tpu.dot_dimension_numbers<[1], [0], [0], [1], [0, 0, 1, 1], [], []>} : vector<2x32xbf16>, vector<32x96xbf16>, vector<2x96xf32> -> vector<2x96xf32>
    %52 = arith.addf %51, %9 : vector<2x96xf32>
    %53 = vector.extract_strided_slice %49 {offsets = [0, 0], sizes = [2, 32], strides = [1, 1]} : vector<2x96xf32> to vector<2x32xf32>
    %54 = vector.extract_strided_slice %52 {offsets = [0, 0], sizes = [2, 32], strides = [1, 1]} : vector<2x96xf32> to vector<2x32xf32>
    %55 = arith.addf %53, %54 : vector<2x32xf32>
    %56 = arith.negf %55 : vector<2x32xf32>
    %57 = math.exp %56 : vector<2x32xf32>
    %cst_19 = arith.constant 1.000000e+00 : f32
    %58 = vector.broadcast %cst_19 : f32 to vector<2x32xf32>
    %59 = arith.addf %58, %57 : vector<2x32xf32>
    %60 = arith.divf %58, %59 : vector<2x32xf32>
    %61 = vector.extract_strided_slice %49 {offsets = [0, 32], sizes = [2, 32], strides = [1, 1]} : vector<2x96xf32> to vector<2x32xf32>
    %62 = vector.extract_strided_slice %52 {offsets = [0, 32], sizes = [2, 32], strides = [1, 1]} : vector<2x96xf32> to vector<2x32xf32>
    %63 = arith.addf %61, %62 : vector<2x32xf32>
    %64 = arith.negf %63 : vector<2x32xf32>
    %65 = math.exp %64 : vector<2x32xf32>
    %cst_20 = arith.constant 1.000000e+00 : f32
    %66 = vector.broadcast %cst_20 : f32 to vector<2x32xf32>
    %67 = arith.addf %66, %65 : vector<2x32xf32>
    %68 = arith.divf %66, %67 : vector<2x32xf32>
    %69 = vector.extract_strided_slice %49 {offsets = [0, 64], sizes = [2, 32], strides = [1, 1]} : vector<2x96xf32> to vector<2x32xf32>
    %70 = vector.extract_strided_slice %52 {offsets = [0, 64], sizes = [2, 32], strides = [1, 1]} : vector<2x96xf32> to vector<2x32xf32>
    %71 = arith.mulf %60, %70 : vector<2x32xf32>
    %72 = arith.addf %69, %71 : vector<2x32xf32>
    %73 = math.tanh %72 : vector<2x32xf32>
    %cst_21 = arith.constant 1.000000e+00 : f32
    %74 = vector.broadcast %cst_21 : f32 to vector<2x32xf32>
    %75 = arith.subf %74, %68 : vector<2x32xf32>
    %76 = arith.mulf %75, %73 : vector<2x32xf32>
    %77 = arith.mulf %68, %47 : vector<2x32xf32>
    %78 = arith.addf %76, %77 : vector<2x32xf32>
    %c1 = arith.constant 1 : index
    %c0_22 = arith.constant 0 : index
    %c0_23 = arith.constant 0 : index
    %79 = vector.load %arg1[%c1, %c0_22, %c0_23] : memref<8x2x32xf32, #tpu.memory_space<vmem>>, vector<1x2x32xf32>
    %80 = vector.shape_cast %79 : vector<1x2x32xf32> to vector<2x32xf32>
    %81 = arith.mulf %80, %78 : vector<2x32xf32>
    %cst_24 = arith.constant 1.000000e+00 : f32
    %82 = vector.broadcast %cst_24 : f32 to vector<2x32xf32>
    %83 = arith.subf %82, %80 : vector<2x32xf32>
    %84 = arith.mulf %83, %47 : vector<2x32xf32>
    %85 = arith.addf %81, %84 : vector<2x32xf32>
    %86 = arith.mulf %80, %85 : vector<2x32xf32>
    %87 = vector.extract_strided_slice %5 {offsets = [4, 0], sizes = [2, 96], strides = [1, 1]} : vector<16x96xf32> to vector<2x96xf32>
    %88 = arith.truncf %85 : vector<2x32xf32> to vector<2x32xbf16>
    %cst_25 = arith.constant dense<0.000000e+00> : vector<2x96xf32>
    %89 = tpu.matmul %88, %6, %cst_25 {dimension_numbers = #tpu.dot_dimension_numbers<[1], [0], [0], [1], [0, 0, 1, 1], [], []>} : vector<2x32xbf16>, vector<32x96xbf16>, vector<2x96xf32> -> vector<2x96xf32>
    %90 = arith.addf %89, %9 : vector<2x96xf32>
    %91 = vector.extract_strided_slice %87 {offsets = [0, 0], sizes = [2, 32], strides = [1, 1]} : vector<2x96xf32> to vector<2x32xf32>
    %92 = vector.extract_strided_slice %90 {offsets = [0, 0], sizes = [2, 32], strides = [1, 1]} : vector<2x96xf32> to vector<2x32xf32>
    %93 = arith.addf %91, %92 : vector<2x32xf32>
    %94 = arith.negf %93 : vector<2x32xf32>
    %95 = math.exp %94 : vector<2x32xf32>
    %cst_26 = arith.constant 1.000000e+00 : f32
    %96 = vector.broadcast %cst_26 : f32 to vector<2x32xf32>
    %97 = arith.addf %96, %95 : vector<2x32xf32>
    %98 = arith.divf %96, %97 : vector<2x32xf32>
    %99 = vector.extract_strided_slice %87 {offsets = [0, 32], sizes = [2, 32], strides = [1, 1]} : vector<2x96xf32> to vector<2x32xf32>
    %100 = vector.extract_strided_slice %90 {offsets = [0, 32], sizes = [2, 32], strides = [1, 1]} : vector<2x96xf32> to vector<2x32xf32>
    %101 = arith.addf %99, %100 : vector<2x32xf32>
    %102 = arith.negf %101 : vector<2x32xf32>
    %103 = math.exp %102 : vector<2x32xf32>
    %cst_27 = arith.constant 1.000000e+00 : f32
    %104 = vector.broadcast %cst_27 : f32 to vector<2x32xf32>
    %105 = arith.addf %104, %103 : vector<2x32xf32>
    %106 = arith.divf %104, %105 : vector<2x32xf32>
    %107 = vector.extract_strided_slice %87 {offsets = [0, 64], sizes = [2, 32], strides = [1, 1]} : vector<2x96xf32> to vector<2x32xf32>
    %108 = vector.extract_strided_slice %90 {offsets = [0, 64], sizes = [2, 32], strides = [1, 1]} : vector<2x96xf32> to vector<2x32xf32>
    %109 = arith.mulf %98, %108 : vector<2x32xf32>
    %110 = arith.addf %107, %109 : vector<2x32xf32>
    %111 = math.tanh %110 : vector<2x32xf32>
    %cst_28 = arith.constant 1.000000e+00 : f32
    %112 = vector.broadcast %cst_28 : f32 to vector<2x32xf32>
    %113 = arith.subf %112, %106 : vector<2x32xf32>
    %114 = arith.mulf %113, %111 : vector<2x32xf32>
    %115 = arith.mulf %106, %85 : vector<2x32xf32>
    %116 = arith.addf %114, %115 : vector<2x32xf32>
    %c2 = arith.constant 2 : index
    %c0_29 = arith.constant 0 : index
    %c0_30 = arith.constant 0 : index
    %117 = vector.load %arg1[%c2, %c0_29, %c0_30] : memref<8x2x32xf32, #tpu.memory_space<vmem>>, vector<1x2x32xf32>
    %118 = vector.shape_cast %117 : vector<1x2x32xf32> to vector<2x32xf32>
    %119 = arith.mulf %118, %116 : vector<2x32xf32>
    %cst_31 = arith.constant 1.000000e+00 : f32
    %120 = vector.broadcast %cst_31 : f32 to vector<2x32xf32>
    %121 = arith.subf %120, %118 : vector<2x32xf32>
    %122 = arith.mulf %121, %85 : vector<2x32xf32>
    %123 = arith.addf %119, %122 : vector<2x32xf32>
    %124 = arith.mulf %118, %123 : vector<2x32xf32>
    %125 = vector.extract_strided_slice %5 {offsets = [6, 0], sizes = [2, 96], strides = [1, 1]} : vector<16x96xf32> to vector<2x96xf32>
    %126 = arith.truncf %123 : vector<2x32xf32> to vector<2x32xbf16>
    %cst_32 = arith.constant dense<0.000000e+00> : vector<2x96xf32>
    %127 = tpu.matmul %126, %6, %cst_32 {dimension_numbers = #tpu.dot_dimension_numbers<[1], [0], [0], [1], [0, 0, 1, 1], [], []>} : vector<2x32xbf16>, vector<32x96xbf16>, vector<2x96xf32> -> vector<2x96xf32>
    %128 = arith.addf %127, %9 : vector<2x96xf32>
    %129 = vector.extract_strided_slice %125 {offsets = [0, 0], sizes = [2, 32], strides = [1, 1]} : vector<2x96xf32> to vector<2x32xf32>
    %130 = vector.extract_strided_slice %128 {offsets = [0, 0], sizes = [2, 32], strides = [1, 1]} : vector<2x96xf32> to vector<2x32xf32>
    %131 = arith.addf %129, %130 : vector<2x32xf32>
    %132 = arith.negf %131 : vector<2x32xf32>
    %133 = math.exp %132 : vector<2x32xf32>
    %cst_33 = arith.constant 1.000000e+00 : f32
    %134 = vector.broadcast %cst_33 : f32 to vector<2x32xf32>
    %135 = arith.addf %134, %133 : vector<2x32xf32>
    %136 = arith.divf %134, %135 : vector<2x32xf32>
    %137 = vector.extract_strided_slice %125 {offsets = [0, 32], sizes = [2, 32], strides = [1, 1]} : vector<2x96xf32> to vector<2x32xf32>
    %138 = vector.extract_strided_slice %128 {offsets = [0, 32], sizes = [2, 32], strides = [1, 1]} : vector<2x96xf32> to vector<2x32xf32>
    %139 = arith.addf %137, %138 : vector<2x32xf32>
    %140 = arith.negf %139 : vector<2x32xf32>
    %141 = math.exp %140 : vector<2x32xf32>
    %cst_34 = arith.constant 1.000000e+00 : f32
    %142 = vector.broadcast %cst_34 : f32 to vector<2x32xf32>
    %143 = arith.addf %142, %141 : vector<2x32xf32>
    %144 = arith.divf %142, %143 : vector<2x32xf32>
    %145 = vector.extract_strided_slice %125 {offsets = [0, 64], sizes = [2, 32], strides = [1, 1]} : vector<2x96xf32> to vector<2x32xf32>
    %146 = vector.extract_strided_slice %128 {offsets = [0, 64], sizes = [2, 32], strides = [1, 1]} : vector<2x96xf32> to vector<2x32xf32>
    %147 = arith.mulf %136, %146 : vector<2x32xf32>
    %148 = arith.addf %145, %147 : vector<2x32xf32>
    %149 = math.tanh %148 : vector<2x32xf32>
    %cst_35 = arith.constant 1.000000e+00 : f32
    %150 = vector.broadcast %cst_35 : f32 to vector<2x32xf32>
    %151 = arith.subf %150, %144 : vector<2x32xf32>
    %152 = arith.mulf %151, %149 : vector<2x32xf32>
    %153 = arith.mulf %144, %123 : vector<2x32xf32>
    %154 = arith.addf %152, %153 : vector<2x32xf32>
    %c3 = arith.constant 3 : index
    %c0_36 = arith.constant 0 : index
    %c0_37 = arith.constant 0 : index
    %155 = vector.load %arg1[%c3, %c0_36, %c0_37] : memref<8x2x32xf32, #tpu.memory_space<vmem>>, vector<1x2x32xf32>
    %156 = vector.shape_cast %155 : vector<1x2x32xf32> to vector<2x32xf32>
    %157 = arith.mulf %156, %154 : vector<2x32xf32>
    %cst_38 = arith.constant 1.000000e+00 : f32
    %158 = vector.broadcast %cst_38 : f32 to vector<2x32xf32>
    %159 = arith.subf %158, %156 : vector<2x32xf32>
    %160 = arith.mulf %159, %123 : vector<2x32xf32>
    %161 = arith.addf %157, %160 : vector<2x32xf32>
    %162 = arith.mulf %156, %161 : vector<2x32xf32>
    %163 = vector.extract_strided_slice %5 {offsets = [8, 0], sizes = [2, 96], strides = [1, 1]} : vector<16x96xf32> to vector<2x96xf32>
    %164 = arith.truncf %161 : vector<2x32xf32> to vector<2x32xbf16>
    %cst_39 = arith.constant dense<0.000000e+00> : vector<2x96xf32>
    %165 = tpu.matmul %164, %6, %cst_39 {dimension_numbers = #tpu.dot_dimension_numbers<[1], [0], [0], [1], [0, 0, 1, 1], [], []>} : vector<2x32xbf16>, vector<32x96xbf16>, vector<2x96xf32> -> vector<2x96xf32>
    %166 = arith.addf %165, %9 : vector<2x96xf32>
    %167 = vector.extract_strided_slice %163 {offsets = [0, 0], sizes = [2, 32], strides = [1, 1]} : vector<2x96xf32> to vector<2x32xf32>
    %168 = vector.extract_strided_slice %166 {offsets = [0, 0], sizes = [2, 32], strides = [1, 1]} : vector<2x96xf32> to vector<2x32xf32>
    %169 = arith.addf %167, %168 : vector<2x32xf32>
    %170 = arith.negf %169 : vector<2x32xf32>
    %171 = math.exp %170 : vector<2x32xf32>
    %cst_40 = arith.constant 1.000000e+00 : f32
    %172 = vector.broadcast %cst_40 : f32 to vector<2x32xf32>
    %173 = arith.addf %172, %171 : vector<2x32xf32>
    %174 = arith.divf %172, %173 : vector<2x32xf32>
    %175 = vector.extract_strided_slice %163 {offsets = [0, 32], sizes = [2, 32], strides = [1, 1]} : vector<2x96xf32> to vector<2x32xf32>
    %176 = vector.extract_strided_slice %166 {offsets = [0, 32], sizes = [2, 32], strides = [1, 1]} : vector<2x96xf32> to vector<2x32xf32>
    %177 = arith.addf %175, %176 : vector<2x32xf32>
    %178 = arith.negf %177 : vector<2x32xf32>
    %179 = math.exp %178 : vector<2x32xf32>
    %cst_41 = arith.constant 1.000000e+00 : f32
    %180 = vector.broadcast %cst_41 : f32 to vector<2x32xf32>
    %181 = arith.addf %180, %179 : vector<2x32xf32>
    %182 = arith.divf %180, %181 : vector<2x32xf32>
    %183 = vector.extract_strided_slice %163 {offsets = [0, 64], sizes = [2, 32], strides = [1, 1]} : vector<2x96xf32> to vector<2x32xf32>
    %184 = vector.extract_strided_slice %166 {offsets = [0, 64], sizes = [2, 32], strides = [1, 1]} : vector<2x96xf32> to vector<2x32xf32>
    %185 = arith.mulf %174, %184 : vector<2x32xf32>
    %186 = arith.addf %183, %185 : vector<2x32xf32>
    %187 = math.tanh %186 : vector<2x32xf32>
    %cst_42 = arith.constant 1.000000e+00 : f32
    %188 = vector.broadcast %cst_42 : f32 to vector<2x32xf32>
    %189 = arith.subf %188, %182 : vector<2x32xf32>
    %190 = arith.mulf %189, %187 : vector<2x32xf32>
    %191 = arith.mulf %182, %161 : vector<2x32xf32>
    %192 = arith.addf %190, %191 : vector<2x32xf32>
    %c4 = arith.constant 4 : index
    %c0_43 = arith.constant 0 : index
    %c0_44 = arith.constant 0 : index
    %193 = vector.load %arg1[%c4, %c0_43, %c0_44] : memref<8x2x32xf32, #tpu.memory_space<vmem>>, vector<1x2x32xf32>
    %194 = vector.shape_cast %193 : vector<1x2x32xf32> to vector<2x32xf32>
    %195 = arith.mulf %194, %192 : vector<2x32xf32>
    %cst_45 = arith.constant 1.000000e+00 : f32
    %196 = vector.broadcast %cst_45 : f32 to vector<2x32xf32>
    %197 = arith.subf %196, %194 : vector<2x32xf32>
    %198 = arith.mulf %197, %161 : vector<2x32xf32>
    %199 = arith.addf %195, %198 : vector<2x32xf32>
    %200 = arith.mulf %194, %199 : vector<2x32xf32>
    %201 = vector.extract_strided_slice %5 {offsets = [10, 0], sizes = [2, 96], strides = [1, 1]} : vector<16x96xf32> to vector<2x96xf32>
    %202 = arith.truncf %199 : vector<2x32xf32> to vector<2x32xbf16>
    %cst_46 = arith.constant dense<0.000000e+00> : vector<2x96xf32>
    %203 = tpu.matmul %202, %6, %cst_46 {dimension_numbers = #tpu.dot_dimension_numbers<[1], [0], [0], [1], [0, 0, 1, 1], [], []>} : vector<2x32xbf16>, vector<32x96xbf16>, vector<2x96xf32> -> vector<2x96xf32>
    %204 = arith.addf %203, %9 : vector<2x96xf32>
    %205 = vector.extract_strided_slice %201 {offsets = [0, 0], sizes = [2, 32], strides = [1, 1]} : vector<2x96xf32> to vector<2x32xf32>
    %206 = vector.extract_strided_slice %204 {offsets = [0, 0], sizes = [2, 32], strides = [1, 1]} : vector<2x96xf32> to vector<2x32xf32>
    %207 = arith.addf %205, %206 : vector<2x32xf32>
    %208 = arith.negf %207 : vector<2x32xf32>
    %209 = math.exp %208 : vector<2x32xf32>
    %cst_47 = arith.constant 1.000000e+00 : f32
    %210 = vector.broadcast %cst_47 : f32 to vector<2x32xf32>
    %211 = arith.addf %210, %209 : vector<2x32xf32>
    %212 = arith.divf %210, %211 : vector<2x32xf32>
    %213 = vector.extract_strided_slice %201 {offsets = [0, 32], sizes = [2, 32], strides = [1, 1]} : vector<2x96xf32> to vector<2x32xf32>
    %214 = vector.extract_strided_slice %204 {offsets = [0, 32], sizes = [2, 32], strides = [1, 1]} : vector<2x96xf32> to vector<2x32xf32>
    %215 = arith.addf %213, %214 : vector<2x32xf32>
    %216 = arith.negf %215 : vector<2x32xf32>
    %217 = math.exp %216 : vector<2x32xf32>
    %cst_48 = arith.constant 1.000000e+00 : f32
    %218 = vector.broadcast %cst_48 : f32 to vector<2x32xf32>
    %219 = arith.addf %218, %217 : vector<2x32xf32>
    %220 = arith.divf %218, %219 : vector<2x32xf32>
    %221 = vector.extract_strided_slice %201 {offsets = [0, 64], sizes = [2, 32], strides = [1, 1]} : vector<2x96xf32> to vector<2x32xf32>
    %222 = vector.extract_strided_slice %204 {offsets = [0, 64], sizes = [2, 32], strides = [1, 1]} : vector<2x96xf32> to vector<2x32xf32>
    %223 = arith.mulf %212, %222 : vector<2x32xf32>
    %224 = arith.addf %221, %223 : vector<2x32xf32>
    %225 = math.tanh %224 : vector<2x32xf32>
    %cst_49 = arith.constant 1.000000e+00 : f32
    %226 = vector.broadcast %cst_49 : f32 to vector<2x32xf32>
    %227 = arith.subf %226, %220 : vector<2x32xf32>
    %228 = arith.mulf %227, %225 : vector<2x32xf32>
    %229 = arith.mulf %220, %199 : vector<2x32xf32>
    %230 = arith.addf %228, %229 : vector<2x32xf32>
    %c5 = arith.constant 5 : index
    %c0_50 = arith.constant 0 : index
    %c0_51 = arith.constant 0 : index
    %231 = vector.load %arg1[%c5, %c0_50, %c0_51] : memref<8x2x32xf32, #tpu.memory_space<vmem>>, vector<1x2x32xf32>
    %232 = vector.shape_cast %231 : vector<1x2x32xf32> to vector<2x32xf32>
    %233 = arith.mulf %232, %230 : vector<2x32xf32>
    %cst_52 = arith.constant 1.000000e+00 : f32
    %234 = vector.broadcast %cst_52 : f32 to vector<2x32xf32>
    %235 = arith.subf %234, %232 : vector<2x32xf32>
    %236 = arith.mulf %235, %199 : vector<2x32xf32>
    %237 = arith.addf %233, %236 : vector<2x32xf32>
    %238 = arith.mulf %232, %237 : vector<2x32xf32>
    %239 = vector.extract_strided_slice %5 {offsets = [12, 0], sizes = [2, 96], strides = [1, 1]} : vector<16x96xf32> to vector<2x96xf32>
    %240 = arith.truncf %237 : vector<2x32xf32> to vector<2x32xbf16>
    %cst_53 = arith.constant dense<0.000000e+00> : vector<2x96xf32>
    %241 = tpu.matmul %240, %6, %cst_53 {dimension_numbers = #tpu.dot_dimension_numbers<[1], [0], [0], [1], [0, 0, 1, 1], [], []>} : vector<2x32xbf16>, vector<32x96xbf16>, vector<2x96xf32> -> vector<2x96xf32>
    %242 = arith.addf %241, %9 : vector<2x96xf32>
    %243 = vector.extract_strided_slice %239 {offsets = [0, 0], sizes = [2, 32], strides = [1, 1]} : vector<2x96xf32> to vector<2x32xf32>
    %244 = vector.extract_strided_slice %242 {offsets = [0, 0], sizes = [2, 32], strides = [1, 1]} : vector<2x96xf32> to vector<2x32xf32>
    %245 = arith.addf %243, %244 : vector<2x32xf32>
    %246 = arith.negf %245 : vector<2x32xf32>
    %247 = math.exp %246 : vector<2x32xf32>
    %cst_54 = arith.constant 1.000000e+00 : f32
    %248 = vector.broadcast %cst_54 : f32 to vector<2x32xf32>
    %249 = arith.addf %248, %247 : vector<2x32xf32>
    %250 = arith.divf %248, %249 : vector<2x32xf32>
    %251 = vector.extract_strided_slice %239 {offsets = [0, 32], sizes = [2, 32], strides = [1, 1]} : vector<2x96xf32> to vector<2x32xf32>
    %252 = vector.extract_strided_slice %242 {offsets = [0, 32], sizes = [2, 32], strides = [1, 1]} : vector<2x96xf32> to vector<2x32xf32>
    %253 = arith.addf %251, %252 : vector<2x32xf32>
    %254 = arith.negf %253 : vector<2x32xf32>
    %255 = math.exp %254 : vector<2x32xf32>
    %cst_55 = arith.constant 1.000000e+00 : f32
    %256 = vector.broadcast %cst_55 : f32 to vector<2x32xf32>
    %257 = arith.addf %256, %255 : vector<2x32xf32>
    %258 = arith.divf %256, %257 : vector<2x32xf32>
    %259 = vector.extract_strided_slice %239 {offsets = [0, 64], sizes = [2, 32], strides = [1, 1]} : vector<2x96xf32> to vector<2x32xf32>
    %260 = vector.extract_strided_slice %242 {offsets = [0, 64], sizes = [2, 32], strides = [1, 1]} : vector<2x96xf32> to vector<2x32xf32>
    %261 = arith.mulf %250, %260 : vector<2x32xf32>
    %262 = arith.addf %259, %261 : vector<2x32xf32>
    %263 = math.tanh %262 : vector<2x32xf32>
    %cst_56 = arith.constant 1.000000e+00 : f32
    %264 = vector.broadcast %cst_56 : f32 to vector<2x32xf32>
    %265 = arith.subf %264, %258 : vector<2x32xf32>
    %266 = arith.mulf %265, %263 : vector<2x32xf32>
    %267 = arith.mulf %258, %237 : vector<2x32xf32>
    %268 = arith.addf %266, %267 : vector<2x32xf32>
    %c6 = arith.constant 6 : index
    %c0_57 = arith.constant 0 : index
    %c0_58 = arith.constant 0 : index
    %269 = vector.load %arg1[%c6, %c0_57, %c0_58] : memref<8x2x32xf32, #tpu.memory_space<vmem>>, vector<1x2x32xf32>
    %270 = vector.shape_cast %269 : vector<1x2x32xf32> to vector<2x32xf32>
    %271 = arith.mulf %270, %268 : vector<2x32xf32>
    %cst_59 = arith.constant 1.000000e+00 : f32
    %272 = vector.broadcast %cst_59 : f32 to vector<2x32xf32>
    %273 = arith.subf %272, %270 : vector<2x32xf32>
    %274 = arith.mulf %273, %237 : vector<2x32xf32>
    %275 = arith.addf %271, %274 : vector<2x32xf32>
    %276 = arith.mulf %270, %275 : vector<2x32xf32>
    %277 = vector.extract_strided_slice %5 {offsets = [14, 0], sizes = [2, 96], strides = [1, 1]} : vector<16x96xf32> to vector<2x96xf32>
    %278 = arith.truncf %275 : vector<2x32xf32> to vector<2x32xbf16>
    %cst_60 = arith.constant dense<0.000000e+00> : vector<2x96xf32>
    %279 = tpu.matmul %278, %6, %cst_60 {dimension_numbers = #tpu.dot_dimension_numbers<[1], [0], [0], [1], [0, 0, 1, 1], [], []>} : vector<2x32xbf16>, vector<32x96xbf16>, vector<2x96xf32> -> vector<2x96xf32>
    %280 = arith.addf %279, %9 : vector<2x96xf32>
    %281 = vector.extract_strided_slice %277 {offsets = [0, 0], sizes = [2, 32], strides = [1, 1]} : vector<2x96xf32> to vector<2x32xf32>
    %282 = vector.extract_strided_slice %280 {offsets = [0, 0], sizes = [2, 32], strides = [1, 1]} : vector<2x96xf32> to vector<2x32xf32>
    %283 = arith.addf %281, %282 : vector<2x32xf32>
    %284 = arith.negf %283 : vector<2x32xf32>
    %285 = math.exp %284 : vector<2x32xf32>
    %cst_61 = arith.constant 1.000000e+00 : f32
    %286 = vector.broadcast %cst_61 : f32 to vector<2x32xf32>
    %287 = arith.addf %286, %285 : vector<2x32xf32>
    %288 = arith.divf %286, %287 : vector<2x32xf32>
    %289 = vector.extract_strided_slice %277 {offsets = [0, 32], sizes = [2, 32], strides = [1, 1]} : vector<2x96xf32> to vector<2x32xf32>
    %290 = vector.extract_strided_slice %280 {offsets = [0, 32], sizes = [2, 32], strides = [1, 1]} : vector<2x96xf32> to vector<2x32xf32>
    %291 = arith.addf %289, %290 : vector<2x32xf32>
    %292 = arith.negf %291 : vector<2x32xf32>
    %293 = math.exp %292 : vector<2x32xf32>
    %cst_62 = arith.constant 1.000000e+00 : f32
    %294 = vector.broadcast %cst_62 : f32 to vector<2x32xf32>
    %295 = arith.addf %294, %293 : vector<2x32xf32>
    %296 = arith.divf %294, %295 : vector<2x32xf32>
    %297 = vector.extract_strided_slice %277 {offsets = [0, 64], sizes = [2, 32], strides = [1, 1]} : vector<2x96xf32> to vector<2x32xf32>
    %298 = vector.extract_strided_slice %280 {offsets = [0, 64], sizes = [2, 32], strides = [1, 1]} : vector<2x96xf32> to vector<2x32xf32>
    %299 = arith.mulf %288, %298 : vector<2x32xf32>
    %300 = arith.addf %297, %299 : vector<2x32xf32>
    %301 = math.tanh %300 : vector<2x32xf32>
    %cst_63 = arith.constant 1.000000e+00 : f32
    %302 = vector.broadcast %cst_63 : f32 to vector<2x32xf32>
    %303 = arith.subf %302, %296 : vector<2x32xf32>
    %304 = arith.mulf %303, %301 : vector<2x32xf32>
    %305 = arith.mulf %296, %275 : vector<2x32xf32>
    %306 = arith.addf %304, %305 : vector<2x32xf32>
    %c7 = arith.constant 7 : index
    %c0_64 = arith.constant 0 : index
    %c0_65 = arith.constant 0 : index
    %307 = vector.load %arg1[%c7, %c0_64, %c0_65] : memref<8x2x32xf32, #tpu.memory_space<vmem>>, vector<1x2x32xf32>
    %308 = vector.shape_cast %307 : vector<1x2x32xf32> to vector<2x32xf32>
    %309 = arith.mulf %308, %306 : vector<2x32xf32>
    %cst_66 = arith.constant 1.000000e+00 : f32
    %310 = vector.broadcast %cst_66 : f32 to vector<2x32xf32>
    %311 = arith.subf %310, %308 : vector<2x32xf32>
    %312 = arith.mulf %311, %275 : vector<2x32xf32>
    %313 = arith.addf %309, %312 : vector<2x32xf32>
    %314 = arith.mulf %308, %313 : vector<2x32xf32>
    %315 = vector.extract_strided_slice %48 {offsets = [0, 0], sizes = [2, 16], strides = [1, 1]} : vector<2x32xf32> to vector<2x16xf32>
    %316 = vector.extract_strided_slice %314 {offsets = [0, 16], sizes = [2, 16], strides = [1, 1]} : vector<2x32xf32> to vector<2x16xf32>
    %317 = tpu.concatenate %315, %316 in 1 : vector<2x16xf32>, vector<2x16xf32> -> vector<2x32xf32>
    %318 = vector.extract_strided_slice %86 {offsets = [0, 0], sizes = [2, 16], strides = [1, 1]} : vector<2x32xf32> to vector<2x16xf32>
    %319 = vector.extract_strided_slice %276 {offsets = [0, 16], sizes = [2, 16], strides = [1, 1]} : vector<2x32xf32> to vector<2x16xf32>
    %320 = tpu.concatenate %318, %319 in 1 : vector<2x16xf32>, vector<2x16xf32> -> vector<2x32xf32>
    %321 = vector.extract_strided_slice %124 {offsets = [0, 0], sizes = [2, 16], strides = [1, 1]} : vector<2x32xf32> to vector<2x16xf32>
    %322 = vector.extract_strided_slice %238 {offsets = [0, 16], sizes = [2, 16], strides = [1, 1]} : vector<2x32xf32> to vector<2x16xf32>
    %323 = tpu.concatenate %321, %322 in 1 : vector<2x16xf32>, vector<2x16xf32> -> vector<2x32xf32>
    %324 = vector.extract_strided_slice %162 {offsets = [0, 0], sizes = [2, 16], strides = [1, 1]} : vector<2x32xf32> to vector<2x16xf32>
    %325 = vector.extract_strided_slice %200 {offsets = [0, 16], sizes = [2, 16], strides = [1, 1]} : vector<2x32xf32> to vector<2x16xf32>
    %326 = tpu.concatenate %324, %325 in 1 : vector<2x16xf32>, vector<2x16xf32> -> vector<2x32xf32>
    %327 = vector.extract_strided_slice %200 {offsets = [0, 0], sizes = [2, 16], strides = [1, 1]} : vector<2x32xf32> to vector<2x16xf32>
    %328 = vector.extract_strided_slice %162 {offsets = [0, 16], sizes = [2, 16], strides = [1, 1]} : vector<2x32xf32> to vector<2x16xf32>
    %329 = tpu.concatenate %327, %328 in 1 : vector<2x16xf32>, vector<2x16xf32> -> vector<2x32xf32>
    %330 = vector.extract_strided_slice %238 {offsets = [0, 0], sizes = [2, 16], strides = [1, 1]} : vector<2x32xf32> to vector<2x16xf32>
    %331 = vector.extract_strided_slice %124 {offsets = [0, 16], sizes = [2, 16], strides = [1, 1]} : vector<2x32xf32> to vector<2x16xf32>
    %332 = tpu.concatenate %330, %331 in 1 : vector<2x16xf32>, vector<2x16xf32> -> vector<2x32xf32>
    %333 = vector.extract_strided_slice %276 {offsets = [0, 0], sizes = [2, 16], strides = [1, 1]} : vector<2x32xf32> to vector<2x16xf32>
    %334 = vector.extract_strided_slice %86 {offsets = [0, 16], sizes = [2, 16], strides = [1, 1]} : vector<2x32xf32> to vector<2x16xf32>
    %335 = tpu.concatenate %333, %334 in 1 : vector<2x16xf32>, vector<2x16xf32> -> vector<2x32xf32>
    %336 = vector.extract_strided_slice %314 {offsets = [0, 0], sizes = [2, 16], strides = [1, 1]} : vector<2x32xf32> to vector<2x16xf32>
    %337 = vector.extract_strided_slice %48 {offsets = [0, 16], sizes = [2, 16], strides = [1, 1]} : vector<2x32xf32> to vector<2x16xf32>
    %338 = tpu.concatenate %336, %337 in 1 : vector<2x16xf32>, vector<2x16xf32> -> vector<2x32xf32>
    %339 = tpu.concatenate %317, %320, %323, %326, %329, %332, %335, %338 in 0 : vector<2x32xf32>, vector<2x32xf32>, vector<2x32xf32>, vector<2x32xf32>, vector<2x32xf32>, vector<2x32xf32>, vector<2x32xf32>, vector<2x32xf32> -> vector<16x32xf32>
    %340 = arith.truncf %339 : vector<16x32xf32> to vector<16x32xbf16>
    %c0_67 = arith.constant 0 : index
    %c0_68 = arith.constant 0 : index
    %341 = vector.load %arg7[%c0_67, %c0_68] : memref<32x8xbf16, #tpu.memory_space<vmem>>, vector<32x8xbf16>
    %cst_69 = arith.constant dense<0.000000e+00> : vector<16x8xf32>
    %342 = tpu.matmul %340, %341, %cst_69 {dimension_numbers = #tpu.dot_dimension_numbers<[1], [0], [0], [1], [0, 0, 1, 1], [], []>} : vector<16x32xbf16>, vector<32x8xbf16>, vector<16x8xf32> -> vector<16x8xf32>
    %c0_70 = arith.constant 0 : index
    %c0_71 = arith.constant 0 : index
    %343 = vector.load %arg8[%c0_70, %c0_71] : memref<1x8xf32, #tpu.memory_space<vmem>>, vector<1x8xf32>
    %344 = vector.broadcast %343 : vector<1x8xf32> to vector<16x8xf32>
    %345 = arith.addf %342, %344 : vector<16x8xf32>
    %c0_72 = arith.constant 0 : index
    %c0_73 = arith.constant 0 : index
    %346 = vector.load %arg12[%c0_72, %c0_73] : memref<16x8xf32, #tpu.memory_space<vmem>>, vector<16x8xf32>
    tpu.vector_store %arg12[%c0_72, %c0_73], %345 {strides = array<i32>} : memref<16x8xf32, #tpu.memory_space<vmem>>, vector<16x8xf32>,
    %c0_74 = arith.constant 0 : index
    %c0_75 = arith.constant 0 : index
    %347 = vector.load %arg11[%c0_74, %c0_75] : memref<8x8xf32, #tpu.memory_space<vmem>>, vector<8x8xf32>
    %348 = vector.shape_cast %347 : vector<8x8xf32> to vector<1x8x8xf32>
    %349 = vector.shape_cast %348 : vector<1x8x8xf32> to vector<1x8x8xf32>
    %350 = vector.broadcast %349 : vector<1x8x8xf32> to vector<2x8x8xf32>
    %351 = tpu.iota {dimensions = array<i32: 2>} : vector<2x8x8xi32>
    %c0_76 = arith.constant 0 : index
    %c0_77 = arith.constant 0 : index
    %352 = vector.load %arg9[%c0_76, %c0_77] : memref<1x8xf32, #tpu.memory_space<vmem>>, vector<1x8xf32>
    %c0_78 = arith.constant 0 : index
    %c0_79 = arith.constant 0 : index
    %353 = vector.load %arg10[%c0_78, %c0_79] : memref<1x8xf32, #tpu.memory_space<vmem>>, vector<1x8xf32>
    %354 = vector.extract_strided_slice %345 {offsets = [0, 0], sizes = [2, 8], strides = [1, 1]} : vector<16x8xf32> to vector<2x8xf32>
    %355 = vector.broadcast %352 : vector<1x8xf32> to vector<2x8xf32>
    %356 = arith.addf %355, %354 : vector<2x8xf32>
    %357 = vector.broadcast %352 : vector<1x8xf32> to vector<2x8xf32>
    %358 = arith.addf %357, %354 : vector<2x8xf32>
    %c0_i32 = arith.constant 0 : i32
    %359 = vector.broadcast %c0_i32 : i32 to vector<2x8xi32>
    %360 = vector.extract_strided_slice %345 {offsets = [2, 0], sizes = [2, 8], strides = [1, 1]} : vector<16x8xf32> to vector<2x8xf32>
    %c1_80 = arith.constant 1 : index
    %c0_81 = arith.constant 0 : index
    %c0_82 = arith.constant 0 : index
    %361 = vector.load %arg2[%c1_80, %c0_81, %c0_82] : memref<8x2x8xf32, #tpu.memory_space<vmem>>, vector<1x2x8xf32>
    %362 = vector.shape_cast %361 : vector<1x2x8xf32> to vector<2x8xf32>
    %363 = vector.shape_cast %356 : vector<2x8xf32> to vector<2x1x8xf32>
    %364 = vector.broadcast %363 : vector<2x1x8xf32> to vector<2x8x8xf32>
    %365 = arith.addf %364, %350 : vector<2x8x8xf32>
    %cst_83 = arith.constant dense<0xFF800000> : vector<2x8xf32>
    %366 = vector.multi_reduction <maximumf>, %365, %cst_83 [2] : vector<2x8x8xf32> to vector<2x8xf32>
    %367 = vector.shape_cast %366 : vector<2x8xf32> to vector<2x8x1xf32>
    %368 = vector.shape_cast %367 : vector<2x8x1xf32> to vector<2x8xf32>
    %369 = vector.broadcast %367 : vector<2x8x1xf32> to vector<2x8x8xf32>
    %370 = arith.subf %365, %369 : vector<2x8x8xf32>
    %371 = math.exp %370 : vector<2x8x8xf32>
    %cst_84 = arith.constant dense<0.000000e+00> : vector<2x8xf32>
    %372 = vector.multi_reduction <add>, %371, %cst_84 [2] : vector<2x8x8xf32> to vector<2x8xf32>
    %373 = math.log %372 : vector<2x8xf32>
    %374 = arith.addf %368, %373 : vector<2x8xf32>
    %cst_85 = arith.constant 5.000000e-01 : f32
    %375 = vector.broadcast %cst_85 : f32 to vector<2x8xf32>
    %376 = arith.cmpf ogt, %362, %375 : vector<2x8xf32>
    %377 = arith.addf %374, %360 : vector<2x8xf32>
    %378 = arith.select %376, %377, %356 : vector<2x8xi1>, vector<2x8xf32>
    %379 = vector.shape_cast %358 : vector<2x8xf32> to vector<2x1x8xf32>
    %380 = vector.broadcast %379 : vector<2x1x8xf32> to vector<2x8x8xf32>
    %381 = arith.addf %380, %350 : vector<2x8x8xf32>
    %cst_86 = arith.constant dense<0xFF800000> : vector<2x8xf32>
    %382 = vector.multi_reduction <maximumf>, %381, %cst_86 [2] : vector<2x8x8xf32> to vector<2x8xf32>
    %383 = vector.shape_cast %382 : vector<2x8xf32> to vector<2x8x1xf32>
    %384 = vector.broadcast %383 : vector<2x8x1xf32> to vector<2x8x8xf32>
    %385 = arith.cmpf oge, %381, %384 : vector<2x8x8xf32>
    %c1073741824_i32 = arith.constant 1073741824 : i32
    %386 = vector.broadcast %c1073741824_i32 : i32 to vector<2x8x8xi32>
    %387 = arith.select %385, %351, %386 : vector<2x8x8xi1>, vector<2x8x8xi32>
    %cst_87 = arith.constant dense<2147483647> : vector<2x8xi32>
    %388 = vector.multi_reduction <minsi>, %387, %cst_87 [2] : vector<2x8x8xi32> to vector<2x8xi32>
    %389 = vector.shape_cast %383 : vector<2x8x1xf32> to vector<2x8xf32>
    %390 = arith.addf %389, %360 : vector<2x8xf32>
    %391 = vector.extract_strided_slice %345 {offsets = [4, 0], sizes = [2, 8], strides = [1, 1]} : vector<16x8xf32> to vector<2x8xf32>
    %c2_88 = arith.constant 2 : index
    %c0_89 = arith.constant 0 : index
    %c0_90 = arith.constant 0 : index
    %392 = vector.load %arg2[%c2_88, %c0_89, %c0_90] : memref<8x2x8xf32, #tpu.memory_space<vmem>>, vector<1x2x8xf32>
    %393 = vector.shape_cast %392 : vector<1x2x8xf32> to vector<2x8xf32>
    %394 = vector.shape_cast %378 : vector<2x8xf32> to vector<2x1x8xf32>
    %395 = vector.broadcast %394 : vector<2x1x8xf32> to vector<2x8x8xf32>
    %396 = arith.addf %395, %350 : vector<2x8x8xf32>
    %cst_91 = arith.constant dense<0xFF800000> : vector<2x8xf32>
    %397 = vector.multi_reduction <maximumf>, %396, %cst_91 [2] : vector<2x8x8xf32> to vector<2x8xf32>
    %398 = vector.shape_cast %397 : vector<2x8xf32> to vector<2x8x1xf32>
    %399 = vector.shape_cast %398 : vector<2x8x1xf32> to vector<2x8xf32>
    %400 = vector.broadcast %398 : vector<2x8x1xf32> to vector<2x8x8xf32>
    %401 = arith.subf %396, %400 : vector<2x8x8xf32>
    %402 = math.exp %401 : vector<2x8x8xf32>
    %cst_92 = arith.constant dense<0.000000e+00> : vector<2x8xf32>
    %403 = vector.multi_reduction <add>, %402, %cst_92 [2] : vector<2x8x8xf32> to vector<2x8xf32>
    %404 = math.log %403 : vector<2x8xf32>
    %405 = arith.addf %399, %404 : vector<2x8xf32>
    %cst_93 = arith.constant 5.000000e-01 : f32
    %406 = vector.broadcast %cst_93 : f32 to vector<2x8xf32>
    %407 = arith.cmpf ogt, %393, %406 : vector<2x8xf32>
    %408 = arith.addf %405, %391 : vector<2x8xf32>
    %409 = arith.select %407, %408, %378 : vector<2x8xi1>, vector<2x8xf32>
    %410 = vector.shape_cast %390 : vector<2x8xf32> to vector<2x1x8xf32>
    %411 = vector.broadcast %410 : vector<2x1x8xf32> to vector<2x8x8xf32>
    %412 = arith.addf %411, %350 : vector<2x8x8xf32>
    %cst_94 = arith.constant dense<0xFF800000> : vector<2x8xf32>
    %413 = vector.multi_reduction <maximumf>, %412, %cst_94 [2] : vector<2x8x8xf32> to vector<2x8xf32>
    %414 = vector.shape_cast %413 : vector<2x8xf32> to vector<2x8x1xf32>
    %415 = vector.broadcast %414 : vector<2x8x1xf32> to vector<2x8x8xf32>
    %416 = arith.cmpf oge, %412, %415 : vector<2x8x8xf32>
    %c1073741824_i32_95 = arith.constant 1073741824 : i32
    %417 = vector.broadcast %c1073741824_i32_95 : i32 to vector<2x8x8xi32>
    %418 = arith.select %416, %351, %417 : vector<2x8x8xi1>, vector<2x8x8xi32>
    %cst_96 = arith.constant dense<2147483647> : vector<2x8xi32>
    %419 = vector.multi_reduction <minsi>, %418, %cst_96 [2] : vector<2x8x8xi32> to vector<2x8xi32>
    %420 = vector.shape_cast %414 : vector<2x8x1xf32> to vector<2x8xf32>
    %421 = arith.addf %420, %391 : vector<2x8xf32>
    %422 = vector.extract_strided_slice %345 {offsets = [6, 0], sizes = [2, 8], strides = [1, 1]} : vector<16x8xf32> to vector<2x8xf32>
    %c3_97 = arith.constant 3 : index
    %c0_98 = arith.constant 0 : index
    %c0_99 = arith.constant 0 : index
    %423 = vector.load %arg2[%c3_97, %c0_98, %c0_99] : memref<8x2x8xf32, #tpu.memory_space<vmem>>, vector<1x2x8xf32>
    %424 = vector.shape_cast %423 : vector<1x2x8xf32> to vector<2x8xf32>
    %425 = vector.shape_cast %409 : vector<2x8xf32> to vector<2x1x8xf32>
    %426 = vector.broadcast %425 : vector<2x1x8xf32> to vector<2x8x8xf32>
    %427 = arith.addf %426, %350 : vector<2x8x8xf32>
    %cst_100 = arith.constant dense<0xFF800000> : vector<2x8xf32>
    %428 = vector.multi_reduction <maximumf>, %427, %cst_100 [2] : vector<2x8x8xf32> to vector<2x8xf32>
    %429 = vector.shape_cast %428 : vector<2x8xf32> to vector<2x8x1xf32>
    %430 = vector.shape_cast %429 : vector<2x8x1xf32> to vector<2x8xf32>
    %431 = vector.broadcast %429 : vector<2x8x1xf32> to vector<2x8x8xf32>
    %432 = arith.subf %427, %431 : vector<2x8x8xf32>
    %433 = math.exp %432 : vector<2x8x8xf32>
    %cst_101 = arith.constant dense<0.000000e+00> : vector<2x8xf32>
    %434 = vector.multi_reduction <add>, %433, %cst_101 [2] : vector<2x8x8xf32> to vector<2x8xf32>
    %435 = math.log %434 : vector<2x8xf32>
    %436 = arith.addf %430, %435 : vector<2x8xf32>
    %cst_102 = arith.constant 5.000000e-01 : f32
    %437 = vector.broadcast %cst_102 : f32 to vector<2x8xf32>
    %438 = arith.cmpf ogt, %424, %437 : vector<2x8xf32>
    %439 = arith.addf %436, %422 : vector<2x8xf32>
    %440 = arith.select %438, %439, %409 : vector<2x8xi1>, vector<2x8xf32>
    %441 = vector.shape_cast %421 : vector<2x8xf32> to vector<2x1x8xf32>
    %442 = vector.broadcast %441 : vector<2x1x8xf32> to vector<2x8x8xf32>
    %443 = arith.addf %442, %350 : vector<2x8x8xf32>
    %cst_103 = arith.constant dense<0xFF800000> : vector<2x8xf32>
    %444 = vector.multi_reduction <maximumf>, %443, %cst_103 [2] : vector<2x8x8xf32> to vector<2x8xf32>
    %445 = vector.shape_cast %444 : vector<2x8xf32> to vector<2x8x1xf32>
    %446 = vector.broadcast %445 : vector<2x8x1xf32> to vector<2x8x8xf32>
    %447 = arith.cmpf oge, %443, %446 : vector<2x8x8xf32>
    %c1073741824_i32_104 = arith.constant 1073741824 : i32
    %448 = vector.broadcast %c1073741824_i32_104 : i32 to vector<2x8x8xi32>
    %449 = arith.select %447, %351, %448 : vector<2x8x8xi1>, vector<2x8x8xi32>
    %cst_105 = arith.constant dense<2147483647> : vector<2x8xi32>
    %450 = vector.multi_reduction <minsi>, %449, %cst_105 [2] : vector<2x8x8xi32> to vector<2x8xi32>
    %451 = vector.shape_cast %445 : vector<2x8x1xf32> to vector<2x8xf32>
    %452 = arith.addf %451, %422 : vector<2x8xf32>
    %453 = vector.extract_strided_slice %345 {offsets = [8, 0], sizes = [2, 8], strides = [1, 1]} : vector<16x8xf32> to vector<2x8xf32>
    %c4_106 = arith.constant 4 : index
    %c0_107 = arith.constant 0 : index
    %c0_108 = arith.constant 0 : index
    %454 = vector.load %arg2[%c4_106, %c0_107, %c0_108] : memref<8x2x8xf32, #tpu.memory_space<vmem>>, vector<1x2x8xf32>
    %455 = vector.shape_cast %454 : vector<1x2x8xf32> to vector<2x8xf32>
    %456 = vector.shape_cast %440 : vector<2x8xf32> to vector<2x1x8xf32>
    %457 = vector.broadcast %456 : vector<2x1x8xf32> to vector<2x8x8xf32>
    %458 = arith.addf %457, %350 : vector<2x8x8xf32>
    %cst_109 = arith.constant dense<0xFF800000> : vector<2x8xf32>
    %459 = vector.multi_reduction <maximumf>, %458, %cst_109 [2] : vector<2x8x8xf32> to vector<2x8xf32>
    %460 = vector.shape_cast %459 : vector<2x8xf32> to vector<2x8x1xf32>
    %461 = vector.shape_cast %460 : vector<2x8x1xf32> to vector<2x8xf32>
    %462 = vector.broadcast %460 : vector<2x8x1xf32> to vector<2x8x8xf32>
    %463 = arith.subf %458, %462 : vector<2x8x8xf32>
    %464 = math.exp %463 : vector<2x8x8xf32>
    %cst_110 = arith.constant dense<0.000000e+00> : vector<2x8xf32>
    %465 = vector.multi_reduction <add>, %464, %cst_110 [2] : vector<2x8x8xf32> to vector<2x8xf32>
    %466 = math.log %465 : vector<2x8xf32>
    %467 = arith.addf %461, %466 : vector<2x8xf32>
    %cst_111 = arith.constant 5.000000e-01 : f32
    %468 = vector.broadcast %cst_111 : f32 to vector<2x8xf32>
    %469 = arith.cmpf ogt, %455, %468 : vector<2x8xf32>
    %470 = arith.addf %467, %453 : vector<2x8xf32>
    %471 = arith.select %469, %470, %440 : vector<2x8xi1>, vector<2x8xf32>
    %472 = vector.shape_cast %452 : vector<2x8xf32> to vector<2x1x8xf32>
    %473 = vector.broadcast %472 : vector<2x1x8xf32> to vector<2x8x8xf32>
    %474 = arith.addf %473, %350 : vector<2x8x8xf32>
    %cst_112 = arith.constant dense<0xFF800000> : vector<2x8xf32>
    %475 = vector.multi_reduction <maximumf>, %474, %cst_112 [2] : vector<2x8x8xf32> to vector<2x8xf32>
    %476 = vector.shape_cast %475 : vector<2x8xf32> to vector<2x8x1xf32>
    %477 = vector.broadcast %476 : vector<2x8x1xf32> to vector<2x8x8xf32>
    %478 = arith.cmpf oge, %474, %477 : vector<2x8x8xf32>
    %c1073741824_i32_113 = arith.constant 1073741824 : i32
    %479 = vector.broadcast %c1073741824_i32_113 : i32 to vector<2x8x8xi32>
    %480 = arith.select %478, %351, %479 : vector<2x8x8xi1>, vector<2x8x8xi32>
    %cst_114 = arith.constant dense<2147483647> : vector<2x8xi32>
    %481 = vector.multi_reduction <minsi>, %480, %cst_114 [2] : vector<2x8x8xi32> to vector<2x8xi32>
    %482 = vector.shape_cast %476 : vector<2x8x1xf32> to vector<2x8xf32>
    %483 = arith.addf %482, %453 : vector<2x8xf32>
    %484 = vector.extract_strided_slice %345 {offsets = [10, 0], sizes = [2, 8], strides = [1, 1]} : vector<16x8xf32> to vector<2x8xf32>
    %c5_115 = arith.constant 5 : index
    %c0_116 = arith.constant 0 : index
    %c0_117 = arith.constant 0 : index
    %485 = vector.load %arg2[%c5_115, %c0_116, %c0_117] : memref<8x2x8xf32, #tpu.memory_space<vmem>>, vector<1x2x8xf32>
    %486 = vector.shape_cast %485 : vector<1x2x8xf32> to vector<2x8xf32>
    %487 = vector.shape_cast %471 : vector<2x8xf32> to vector<2x1x8xf32>
    %488 = vector.broadcast %487 : vector<2x1x8xf32> to vector<2x8x8xf32>
    %489 = arith.addf %488, %350 : vector<2x8x8xf32>
    %cst_118 = arith.constant dense<0xFF800000> : vector<2x8xf32>
    %490 = vector.multi_reduction <maximumf>, %489, %cst_118 [2] : vector<2x8x8xf32> to vector<2x8xf32>
    %491 = vector.shape_cast %490 : vector<2x8xf32> to vector<2x8x1xf32>
    %492 = vector.shape_cast %491 : vector<2x8x1xf32> to vector<2x8xf32>
    %493 = vector.broadcast %491 : vector<2x8x1xf32> to vector<2x8x8xf32>
    %494 = arith.subf %489, %493 : vector<2x8x8xf32>
    %495 = math.exp %494 : vector<2x8x8xf32>
    %cst_119 = arith.constant dense<0.000000e+00> : vector<2x8xf32>
    %496 = vector.multi_reduction <add>, %495, %cst_119 [2] : vector<2x8x8xf32> to vector<2x8xf32>
    %497 = math.log %496 : vector<2x8xf32>
    %498 = arith.addf %492, %497 : vector<2x8xf32>
    %cst_120 = arith.constant 5.000000e-01 : f32
    %499 = vector.broadcast %cst_120 : f32 to vector<2x8xf32>
    %500 = arith.cmpf ogt, %486, %499 : vector<2x8xf32>
    %501 = arith.addf %498, %484 : vector<2x8xf32>
    %502 = arith.select %500, %501, %471 : vector<2x8xi1>, vector<2x8xf32>
    %503 = vector.shape_cast %483 : vector<2x8xf32> to vector<2x1x8xf32>
    %504 = vector.broadcast %503 : vector<2x1x8xf32> to vector<2x8x8xf32>
    %505 = arith.addf %504, %350 : vector<2x8x8xf32>
    %cst_121 = arith.constant dense<0xFF800000> : vector<2x8xf32>
    %506 = vector.multi_reduction <maximumf>, %505, %cst_121 [2] : vector<2x8x8xf32> to vector<2x8xf32>
    %507 = vector.shape_cast %506 : vector<2x8xf32> to vector<2x8x1xf32>
    %508 = vector.broadcast %507 : vector<2x8x1xf32> to vector<2x8x8xf32>
    %509 = arith.cmpf oge, %505, %508 : vector<2x8x8xf32>
    %c1073741824_i32_122 = arith.constant 1073741824 : i32
    %510 = vector.broadcast %c1073741824_i32_122 : i32 to vector<2x8x8xi32>
    %511 = arith.select %509, %351, %510 : vector<2x8x8xi1>, vector<2x8x8xi32>
    %cst_123 = arith.constant dense<2147483647> : vector<2x8xi32>
    %512 = vector.multi_reduction <minsi>, %511, %cst_123 [2] : vector<2x8x8xi32> to vector<2x8xi32>
    %513 = vector.shape_cast %507 : vector<2x8x1xf32> to vector<2x8xf32>
    %514 = arith.addf %513, %484 : vector<2x8xf32>
    %515 = vector.extract_strided_slice %345 {offsets = [12, 0], sizes = [2, 8], strides = [1, 1]} : vector<16x8xf32> to vector<2x8xf32>
    %c6_124 = arith.constant 6 : index
    %c0_125 = arith.constant 0 : index
    %c0_126 = arith.constant 0 : index
    %516 = vector.load %arg2[%c6_124, %c0_125, %c0_126] : memref<8x2x8xf32, #tpu.memory_space<vmem>>, vector<1x2x8xf32>
    %517 = vector.shape_cast %516 : vector<1x2x8xf32> to vector<2x8xf32>
    %518 = vector.shape_cast %502 : vector<2x8xf32> to vector<2x1x8xf32>
    %519 = vector.broadcast %518 : vector<2x1x8xf32> to vector<2x8x8xf32>
    %520 = arith.addf %519, %350 : vector<2x8x8xf32>
    %cst_127 = arith.constant dense<0xFF800000> : vector<2x8xf32>
    %521 = vector.multi_reduction <maximumf>, %520, %cst_127 [2] : vector<2x8x8xf32> to vector<2x8xf32>
    %522 = vector.shape_cast %521 : vector<2x8xf32> to vector<2x8x1xf32>
    %523 = vector.shape_cast %522 : vector<2x8x1xf32> to vector<2x8xf32>
    %524 = vector.broadcast %522 : vector<2x8x1xf32> to vector<2x8x8xf32>
    %525 = arith.subf %520, %524 : vector<2x8x8xf32>
    %526 = math.exp %525 : vector<2x8x8xf32>
    %cst_128 = arith.constant dense<0.000000e+00> : vector<2x8xf32>
    %527 = vector.multi_reduction <add>, %526, %cst_128 [2] : vector<2x8x8xf32> to vector<2x8xf32>
    %528 = math.log %527 : vector<2x8xf32>
    %529 = arith.addf %523, %528 : vector<2x8xf32>
    %cst_129 = arith.constant 5.000000e-01 : f32
    %530 = vector.broadcast %cst_129 : f32 to vector<2x8xf32>
    %531 = arith.cmpf ogt, %517, %530 : vector<2x8xf32>
    %532 = arith.addf %529, %515 : vector<2x8xf32>
    %533 = arith.select %531, %532, %502 : vector<2x8xi1>, vector<2x8xf32>
    %534 = vector.shape_cast %514 : vector<2x8xf32> to vector<2x1x8xf32>
    %535 = vector.broadcast %534 : vector<2x1x8xf32> to vector<2x8x8xf32>
    %536 = arith.addf %535, %350 : vector<2x8x8xf32>
    %cst_130 = arith.constant dense<0xFF800000> : vector<2x8xf32>
    %537 = vector.multi_reduction <maximumf>, %536, %cst_130 [2] : vector<2x8x8xf32> to vector<2x8xf32>
    %538 = vector.shape_cast %537 : vector<2x8xf32> to vector<2x8x1xf32>
    %539 = vector.broadcast %538 : vector<2x8x1xf32> to vector<2x8x8xf32>
    %540 = arith.cmpf oge, %536, %539 : vector<2x8x8xf32>
    %c1073741824_i32_131 = arith.constant 1073741824 : i32
    %541 = vector.broadcast %c1073741824_i32_131 : i32 to vector<2x8x8xi32>
    %542 = arith.select %540, %351, %541 : vector<2x8x8xi1>, vector<2x8x8xi32>
    %cst_132 = arith.constant dense<2147483647> : vector<2x8xi32>
    %543 = vector.multi_reduction <minsi>, %542, %cst_132 [2] : vector<2x8x8xi32> to vector<2x8xi32>
    %544 = vector.shape_cast %538 : vector<2x8x1xf32> to vector<2x8xf32>
    %545 = arith.addf %544, %515 : vector<2x8xf32>
    %546 = vector.extract_strided_slice %345 {offsets = [14, 0], sizes = [2, 8], strides = [1, 1]} : vector<16x8xf32> to vector<2x8xf32>
    %c7_133 = arith.constant 7 : index
    %c0_134 = arith.constant 0 : index
    %c0_135 = arith.constant 0 : index
    %547 = vector.load %arg2[%c7_133, %c0_134, %c0_135] : memref<8x2x8xf32, #tpu.memory_space<vmem>>, vector<1x2x8xf32>
    %548 = vector.shape_cast %547 : vector<1x2x8xf32> to vector<2x8xf32>
    %549 = vector.shape_cast %533 : vector<2x8xf32> to vector<2x1x8xf32>
    %550 = vector.broadcast %549 : vector<2x1x8xf32> to vector<2x8x8xf32>
    %551 = arith.addf %550, %350 : vector<2x8x8xf32>
    %cst_136 = arith.constant dense<0xFF800000> : vector<2x8xf32>
    %552 = vector.multi_reduction <maximumf>, %551, %cst_136 [2] : vector<2x8x8xf32> to vector<2x8xf32>
    %553 = vector.shape_cast %552 : vector<2x8xf32> to vector<2x8x1xf32>
    %554 = vector.shape_cast %553 : vector<2x8x1xf32> to vector<2x8xf32>
    %555 = vector.broadcast %553 : vector<2x8x1xf32> to vector<2x8x8xf32>
    %556 = arith.subf %551, %555 : vector<2x8x8xf32>
    %557 = math.exp %556 : vector<2x8x8xf32>
    %cst_137 = arith.constant dense<0.000000e+00> : vector<2x8xf32>
    %558 = vector.multi_reduction <add>, %557, %cst_137 [2] : vector<2x8x8xf32> to vector<2x8xf32>
    %559 = math.log %558 : vector<2x8xf32>
    %560 = arith.addf %554, %559 : vector<2x8xf32>
    %cst_138 = arith.constant 5.000000e-01 : f32
    %561 = vector.broadcast %cst_138 : f32 to vector<2x8xf32>
    %562 = arith.cmpf ogt, %548, %561 : vector<2x8xf32>
    %563 = arith.addf %560, %546 : vector<2x8xf32>
    %564 = arith.select %562, %563, %533 : vector<2x8xi1>, vector<2x8xf32>
    %565 = vector.shape_cast %545 : vector<2x8xf32> to vector<2x1x8xf32>
    %566 = vector.broadcast %565 : vector<2x1x8xf32> to vector<2x8x8xf32>
    %567 = arith.addf %566, %350 : vector<2x8x8xf32>
    %cst_139 = arith.constant dense<0xFF800000> : vector<2x8xf32>
    %568 = vector.multi_reduction <maximumf>, %567, %cst_139 [2] : vector<2x8x8xf32> to vector<2x8xf32>
    %569 = vector.shape_cast %568 : vector<2x8xf32> to vector<2x8x1xf32>
    %570 = vector.broadcast %569 : vector<2x8x1xf32> to vector<2x8x8xf32>
    %571 = arith.cmpf oge, %567, %570 : vector<2x8x8xf32>
    %c1073741824_i32_140 = arith.constant 1073741824 : i32
    %572 = vector.broadcast %c1073741824_i32_140 : i32 to vector<2x8x8xi32>
    %573 = arith.select %571, %351, %572 : vector<2x8x8xi1>, vector<2x8x8xi32>
    %cst_141 = arith.constant dense<2147483647> : vector<2x8xi32>
    %574 = vector.multi_reduction <minsi>, %573, %cst_141 [2] : vector<2x8x8xi32> to vector<2x8xi32>
    %575 = vector.shape_cast %569 : vector<2x8x1xf32> to vector<2x8xf32>
    %576 = arith.addf %575, %546 : vector<2x8xf32>
    %577 = tpu.concatenate %359, %388, %419, %450, %481, %512, %543, %574 in 0 : vector<2x8xi32>, vector<2x8xi32>, vector<2x8xi32>, vector<2x8xi32>, vector<2x8xi32>, vector<2x8xi32>, vector<2x8xi32>, vector<2x8xi32> -> vector<16x8xi32>
    %c0_142 = arith.constant 0 : index
    %c0_143 = arith.constant 0 : index
    %578 = vector.load %arg14[%c0_142, %c0_143] : memref<16x8xi32, #tpu.memory_space<vmem>>, vector<16x8xi32>
    tpu.vector_store %arg14[%c0_142, %c0_143], %577 {strides = array<i32>} : memref<16x8xi32, #tpu.memory_space<vmem>>, vector<16x8xi32>,
    %579 = vector.broadcast %353 : vector<1x8xf32> to vector<2x8xf32>
    %580 = arith.addf %564, %579 : vector<2x8xf32>
    %cst_144 = arith.constant dense<0xFF800000> : vector<2xf32>
    %581 = vector.multi_reduction <maximumf>, %580, %cst_144 [1] : vector<2x8xf32> to vector<2xf32>
    %582 = vector.shape_cast %581 : vector<2xf32> to vector<2x1xf32>
    %583 = vector.broadcast %582 : vector<2x1xf32> to vector<2x8xf32>
    %584 = arith.subf %580, %583 : vector<2x8xf32>
    %585 = math.exp %584 : vector<2x8xf32>
    %cst_145 = arith.constant dense<0.000000e+00> : vector<2xf32>
    %586 = vector.multi_reduction <add>, %585, %cst_145 [1] : vector<2x8xf32> to vector<2xf32>
    %587 = vector.shape_cast %586 : vector<2xf32> to vector<2x1xf32>
    %588 = math.log %587 : vector<2x1xf32>
    %589 = arith.addf %582, %588 : vector<2x1xf32>
    %590 = vector.shape_cast %589 : vector<2x1xf32> to vector<2x1xf32>
    %591 = vector.broadcast %590 : vector<2x1xf32> to vector<2x8xf32>
    %c0_146 = arith.constant 0 : index
    %c0_147 = arith.constant 0 : index
    %592 = vector.load %arg13[%c0_146, %c0_147] : memref<2x8xf32, #tpu.memory_space<vmem>>, vector<2x8xf32>
    tpu.vector_store %arg13[%c0_146, %c0_147], %591 {strides = array<i32>} : memref<2x8xf32, #tpu.memory_space<vmem>>, vector<2x8xf32>,
    %593 = vector.broadcast %353 : vector<1x8xf32> to vector<2x8xf32>
    %594 = arith.addf %576, %593 : vector<2x8xf32>
    %c0_148 = arith.constant 0 : index
    %c0_149 = arith.constant 0 : index
    %595 = vector.load %arg15[%c0_148, %c0_149] : memref<2x8xf32, #tpu.memory_space<vmem>>, vector<2x8xf32>
    tpu.vector_store %arg15[%c0_148, %c0_149], %594 {strides = array<i32>} : memref<2x8xf32, #tpu.memory_space<vmem>>, vector<2x8xf32>,
    return
  }
}

</mosaic_0001>

<llo_original>
// kernel: gru_crf_forward.1
$region0: #{gru_crf_forward.1}
  #allocation0 [shape = 'u32[]', space=smem, size = 0x4, offset = 0x4, fixed_abs, tag = 'smem constant byte address 0x4 - core index']
  #allocation1 [shape = 'u32[144,128]{1,0:T(1,128)}', space=vmem, size = 0x12000, scoped, tag = 'internal scratch']
  %s0 = inlined_call_operand.vmem [shape: bf16[16,64], index: 0, kind: input, shape index: {}]
  %s1 = inlined_call_operand.vmem [shape: f32[8,2,32], index: 1, kind: input, shape index: {}]
  %s2 = inlined_call_operand.vmem [shape: f32[8,2,8], index: 2, kind: input, shape index: {}]
  %s3 = inlined_call_operand.vmem [shape: bf16[64,96], index: 3, kind: input, shape index: {}]
  %s4 = inlined_call_operand.vmem [shape: f32[1,96], index: 4, kind: input, shape index: {}]
  %s5 = inlined_call_operand.vmem [shape: bf16[32,96], index: 5, kind: input, shape index: {}]
  %s6 = inlined_call_operand.vmem [shape: f32[1,96], index: 6, kind: input, shape index: {}]
  %s7 = inlined_call_operand.vmem [shape: bf16[32,8], index: 7, kind: input, shape index: {}]
  %s8 = inlined_call_operand.vmem [shape: f32[1,8], index: 8, kind: input, shape index: {}]
  %s9 = inlined_call_operand.vmem [shape: f32[1,8], index: 9, kind: input, shape index: {}]
  %s10 = inlined_call_operand.vmem [shape: f32[1,8], index: 10, kind: input, shape index: {}]
  %s11 = inlined_call_operand.vmem [shape: f32[8,8], index: 11, kind: input, shape index: {}]
  %s12 = inlined_call_operand.vmem [shape: f32[16,8], index: 12, kind: output, shape index: {0}]
  %s13 = inlined_call_operand.vmem [shape: f32[2,8], index: 13, kind: output, shape index: {1}]
  %s14 = inlined_call_operand.vmem [shape: s32[16,8], index: 14, kind: output, shape index: {2}]
  %s15 = inlined_call_operand.vmem [shape: f32[2,8], index: 15, kind: output, shape index: {3}]
  %16 = xla_tuple %s12, %s13, %s14, %s15
  %s17 = sld [smem:[#allocation0]]
  $region82: #{gru_crf_forward.1} parent=0
    _
  %s19 = ssub.s32 1, %s17
  %s20 = scalar_select 0, %s19, %s17
  // Predicated region
  $region2: #{gru_crf_forward.1} parent=0 // pred_check
    _
  $region3: #{gru_crf_forward.1} parent=0 // pred_check_branch
    %22 = sbr.rel (0) target = $region5
  $region4: #{gru_crf_forward.1} parent=0 // pred_region
    _
  $region5: #{gru_crf_forward.1} parent=0 // pred_fallthru
    _
  // Predicated region
  $region6: #{gru_crf_forward.1} parent=0 // pred_check
    _
  $region7: #{gru_crf_forward.1} parent=0 // pred_check_branch
    %24 = sbr.rel (0) target = $region9
  $region8: #{gru_crf_forward.1} parent=0 // pred_region
    _
  $region9: #{gru_crf_forward.1} parent=0 // pred_fallthru
    _
  // Predicated region
  $region10: #{gru_crf_forward.1} parent=0 // pred_check
    _
  $region11: #{gru_crf_forward.1} parent=0 // pred_check_branch
    %26 = sbr.rel (0) target = $region13
  $region12: #{gru_crf_forward.1} parent=0 // pred_region
    _
  $region13: #{gru_crf_forward.1} parent=0 // pred_fallthru
    _
  // Predicated region
  $region14: #{gru_crf_forward.1} parent=0 // pred_check
    _
  $region15: #{gru_crf_forward.1} parent=0 // pred_check_branch
    %28 = sbr.rel (0) target = $region17
  $region16: #{gru_crf_forward.1} parent=0 // pred_region
    _
  $region17: #{gru_crf_forward.1} parent=0 // pred_fallthru
    _
  // Predicated region
  $region18: #{gru_crf_forward.1} parent=0 // pred_check
    _
  $region19: #{gru_crf_forward.1} parent=0 // pred_check_branch
    %30 = sbr.rel (0) target = $region21
  $region20: #{gru_crf_forward.1} parent=0 // pred_region
    _
  $region21: #{gru_crf_forward.1} parent=0 // pred_fallthru
    _
  // Predicated region
  $region22: #{gru_crf_forward.1} parent=0 // pred_check
    _
  $region23: #{gru_crf_forward.1} parent=0 // pred_check_branch
    %32 = sbr.rel (0) target = $region25
  $region24: #{gru_crf_forward.1} parent=0 // pred_region
    _
  $region25: #{gru_crf_forward.1} parent=0 // pred_fallthru
    _
  // Predicated region
  $region26: #{gru_crf_forward.1} parent=0 // pred_check
    _
  $region27: #{gru_crf_forward.1} parent=0 // pred_check_branch
    %34 = sbr.rel (0) target = $region29
  $region28: #{gru_crf_forward.1} parent=0 // pred_region
    _
  $region29: #{gru_crf_forward.1} parent=0 // pred_fallthru
    _
  // Predicated region
  $region30: #{gru_crf_forward.1} parent=0 // pred_check
    _
  $region31: #{gru_crf_forward.1} parent=0 // pred_check_branch
    %36 = sbr.rel (0) target = $region33
  $region32: #{gru_crf_forward.1} parent=0 // pred_region
    _
  $region33: #{gru_crf_forward.1} parent=0 // pred_fallthru
    _
  // Predicated region
  $region34: #{gru_crf_forward.1} parent=0 // pred_check
    _
  $region35: #{gru_crf_forward.1} parent=0 // pred_check_branch
    %38 = sbr.rel (0) target = $region37
  $region36: #{gru_crf_forward.1} parent=0 // pred_region
    _
  $region37: #{gru_crf_forward.1} parent=0 // pred_fallthru
    _
  // Predicated region
  $region38: #{gru_crf_forward.1} parent=0 // pred_check
    _
  $region39: #{gru_crf_forward.1} parent=0 // pred_check_branch
    %40 = sbr.rel (0) target = $region41
  $region40: #{gru_crf_forward.1} parent=0 // pred_region
    _
  $region41: #{gru_crf_forward.1} parent=0 // pred_fallthru
    _
  // Predicated region
  $region42: #{gru_crf_forward.1} parent=0 // pred_check
    _
  $region43: #{gru_crf_forward.1} parent=0 // pred_check_branch
    %42 = sbr.rel (0) target = $region45
  $region44: #{gru_crf_forward.1} parent=0 // pred_region
    _
  $region45: #{gru_crf_forward.1} parent=0 // pred_fallthru
    _
  // Predicated region
  $region46: #{gru_crf_forward.1} parent=0 // pred_check
    _
  $region47: #{gru_crf_forward.1} parent=0 // pred_check_branch
    %44 = sbr.rel (0) target = $region49
  $region48: #{gru_crf_forward.1} parent=0 // pred_region
    _
  $region49: #{gru_crf_forward.1} parent=0 // pred_fallthru
    _
  %v46 = vld [vmem:[%s0] sm:$0xf]
  %v47 = vld [vmem:[%s0 + $0x4] sm:$0xf]
  %v48 = vld [vmem:[%s3] sm:$0xf]
  %v49 = vld [vmem:[%s3 + $0x4] sm:$0xf]
  %v50 = vld [vmem:[%s3 + $0x8] sm:$0xf]
  %v51 = vld [vmem:[%s3 + $0xc] sm:$0xf]
  %v52 = vld [vmem:[%s3 + $0x10] sm:$0xf]
  %v53 = vld [vmem:[%s3 + $0x14] sm:$0xf]
  %v54 = vld [vmem:[%s3 + $0x18] sm:$0xf]
  %v55 = vld [vmem:[%s3 + $0x1c] sm:$0xf]
  %v56 = vld [vmem:[%s4] sm:$0x1]
  %v58 = vlaneseq
  %v59 = vshrl.u32 %v58, 7
  %v60 = vsub.s32 0, %v59
  %v61 = vrot.slane %v56, %v60
  %v65 = vunpack.c.l.b16 %v46
  %v66 = vunpack.c.l.b16 %v47
  %v67 = vpack.c.b16 %v66, %v65
  %v76 = vunpack.c.l.b16 %v48
  %v77 = vunpack.c.l.b16 %v49
  %v78 = vunpack.c.l.b16 %v50
  %v79 = vunpack.c.l.b16 %v51
  %v80 = vunpack.c.l.b16 %v52
  %v81 = vunpack.c.l.b16 %v53
  %v82 = vunpack.c.l.b16 %v54
  %v83 = vunpack.c.l.b16 %v55
  %v84 = vpack.c.b16 %v77, %v76
  %v85 = vpack.c.b16 %v79, %v78
  %v86 = vpack.c.b16 %v81, %v80
  %v87 = vpack.c.b16 %v83, %v82
  %vm92 = vcmask 523264
  %v94 = vsel %vm92, %v67, 0
  %96 = vmatprep.subr.bf16.mxu0 0
  %97 = vmatpush1.bf16.msra.mxu0 0
  %98 = vmatprep.subr.bf16.mxu0 0
  %99 = vmatpush1.bf16.msra.mxu0 0
  %100 = vmatprep.subr.bf16.mxu0 0
  %101 = vmatpush1.bf16.msra.mxu0 0
  %102 = vmatprep.subr.bf16.mxu0 0
  %103 = vmatpush1.bf16.msra.mxu0 0
  %104 = vmatprep.subr.bf16.mxu0 0
  %105 = vmatpush1.bf16.msra.mxu0 %v87
  %106 = vmatprep.subr.bf16.mxu0 0
  %107 = vmatpush1.bf16.msra.mxu0 %v86
  %108 = vmatprep.subr.bf16.mxu0 0
  %109 = vmatpush1.bf16.msra.mxu0 %v85
  %110 = vmatprep.subr.bf16.mxu0 0
  %111 = vmatpush1.bf16.msra.mxu0 %v84
  %112 = vmatprep.subr.bf16.mxu0 0
  %113 = vmatpush2.bf16.msra.mxu0 0
  %114 = vmatprep.subr.bf16.mxu0 0
  %115 = vmatpush2.bf16.msra.mxu0 0
  %116 = vmatprep.subr.bf16.mxu0 0
  %117 = vmatpush2.bf16.msra.mxu0 0
  %118 = vmatprep.subr.bf16.mxu0 0
  %119 = vmatpush2.bf16.msra.mxu0 0
  %120 = vmatprep.subr.bf16.mxu0 0
  %121 = vmatpush2.bf16.msra.mxu0 0
  %122 = vmatprep.subr.bf16.mxu0 0
  %123 = vmatpush2.bf16.msra.mxu0 0
  %124 = vmatprep.subr.bf16.mxu0 0
  %125 = vmatpush2.bf16.msra.mxu0 0
  %126 = vmatprep.subr.bf16.mxu0 0
  %127 = vmatpush2.bf16.msra.mxu0 0
  %128 = vmatprep.mubr.bf16.mxu0 0
  %129 = vmatmul.mubr.bf16.gmra.mxu0 %v94
  %v130 = vpop.f32.mrf.mxu0
  %v131 = vadd.f32 %v61, %v130
  %v132 = vpop.f32.mrf.mxu0
  %v133 = vpop.f32.mrf.mxu0
  %v134 = vadd.f32 %v61, %v133
  %v135 = vpop.f32.mrf.mxu0
  %136 = vdwg.mxu0
  %v137 = vld [vmem:[%s5] sm:$0xf]
  %v138 = vld [vmem:[%s5 + $0x4] sm:$0xf]
  %v139 = vld [vmem:[%s5 + $0x8] sm:$0xf]
  %v140 = vld [vmem:[%s5 + $0xc] sm:$0xf]
  %v141 = vld [vmem:[%s6] sm:$0x1]
  %v143 = vlaneseq
  %v144 = vshrl.u32 %v143, 7
  %v145 = vsub.s32 0, %v144
  %v146 = vrot.slane %v141, %v145
  %v152 = vunpack.c.l.b16 %v137
  %v153 = vunpack.c.l.b16 %v138
  %v154 = vunpack.c.l.b16 %v139
  %v155 = vunpack.c.l.b16 %v140
  %v156 = vpack.c.b16 %v153, %v152
  %v157 = vpack.c.b16 %v155, %v154
  %vm160 = vcmask 261120
  %v162 = vsel %vm160, 0, 0
  %164 = vmatprep.subr.bf16.mxu0 0
  %165 = vmatpush1.bf16.msra.mxu0 0
  %166 = vmatprep.subr.bf16.mxu0 0
  %167 = vmatpush1.bf16.msra.mxu0 0
  %168 = vmatprep.subr.bf16.mxu0 0
  %169 = vmatpush1.bf16.msra.mxu0 0
  %170 = vmatprep.subr.bf16.mxu0 0
  %171 = vmatpush1.bf16.msra.mxu0 0
  %172 = vmatprep.subr.bf16.mxu0 0
  %173 = vmatpush1.bf16.msra.mxu0 0
  %174 = vmatprep.subr.bf16.mxu0 0
  %175 = vmatpush1.bf16.msra.mxu0 0
  %176 = vmatprep.subr.bf16.mxu0 0
  %177 = vmatpush1.bf16.msra.mxu0 %v157
  %178 = vmatprep.subr.bf16.mxu0 0
  %179 = vmatpush1.bf16.msra.mxu0 %v156
  %180 = vmatprep.subr.bf16.mxu0 0
  %181 = vmatpush2.bf16.msra.mxu0 0
  %182 = vmatprep.subr.bf16.mxu0 0
  %183 = vmatpush2.bf16.msra.mxu0 0
  %184 = vmatprep.subr.bf16.mxu0 0
  %185 = vmatpush2.bf16.msra.mxu0 0
  %186 = vmatprep.subr.bf16.mxu0 0
  %187 = vmatpush2.bf16.msra.mxu0 0
  %188 = vmatprep.subr.bf16.mxu0 0
  %189 = vmatpush2.bf16.msra.mxu0 0
  %190 = vmatprep.subr.bf16.mxu0 0
  %191 = vmatpush2.bf16.msra.mxu0 0
  %192 = vmatprep.subr.bf16.mxu0 0
  %193 = vmatpush2.bf16.msra.mxu0 0
  %194 = vmatprep.subr.bf16.mxu0 0
  %195 = vmatpush2.bf16.msra.mxu0 0
  %196 = vmatprep.mubr.bf16.mxu0 0
  %197 = vmatmul.mubr.bf16.gmra.mxu0 %v162
  %v198 = vpop.f32.mrf.mxu0
  %v199 = vadd.f32 %v146, %v198
  %v200 = vpop.f32.mrf.mxu0
  %v201 = vpop.f32.mrf.mxu0
  %v202 = vpop.f32.mrf.mxu0
  %203 = vdwg.mxu0
  %v204 = vadd.f32 %v131, %v199
  %v205 = vxor.u32 %v204, 2147483648
  %v206 = vmul.f32 %v205, 1.442695
  %v207 = vpow.pop %v206
  %v208 = vadd.f32 %v207, 1.0
  %v209 = vrcp.pop %v208
  %v210 = vmul.f32 1.0, %v209
  %212 = vrot.lane.b32.xlu0 %v199, 64
  %v213 = vpop.permute.xlu0 %212
  %v215 = vmul.f32 %v210, %v213
  %217 = vrot.lane.b32.xlu0 %v215, 64
  %v218 = vpop.permute.xlu0 %217
  %v220 = vadd.f32 %v131, %v218
  %v221 = vtanh.pop %v220
  %v222 = vsub.f32 1.0, %v210
  %224 = vrot.lane.b32.xlu0 %v221, 96
  %v225 = vpop.permute.xlu0 %224
  %v227 = vmul.f32 %v222, %v225
  %v228 = vmul.f32 %v210, 0.0
  %v229 = vadd.f32 %v227, %v228
  %v230 = vld [vmem:[%s1] sm:$0x3]
  %232 = vrot.lane.b32.xlu0 %v229, 96
  %v233 = vpop.permute.xlu0 %232
  %v235 = vmul.f32 %v230, %v233
  %v236 = vsub.f32 1.0, %v230
  %v237 = vmul.f32 %v236, 0.0
  %v238 = vadd.f32 %v235, %v237
  %v239 = vmul.f32 %v230, %v238
  %v240 = vpack.c.bf16 %v238, %v238
  %v242 = vsel %vm160, %v240, 0
  %244 = vmatprep.subr.bf16.mxu0 0
  %245 = vmatpush1.bf16.msra.mxu0 0
  %246 = vmatprep.subr.bf16.mxu0 0
  %247 = vmatpush1.bf16.msra.mxu0 0
  %248 = vmatprep.subr.bf16.mxu0 0
  %249 = vmatpush1.bf16.msra.mxu0 0
  %250 = vmatprep.subr.bf16.mxu0 0
  %251 = vmatpush1.bf16.msra.mxu0 0
  %252 = vmatprep.subr.bf16.mxu0 0
  %253 = vmatpush1.bf16.msra.mxu0 0
  %254 = vmatprep.subr.bf16.mxu0 0
  %255 = vmatpush1.bf16.msra.mxu0 0
  %256 = vmatprep.subr.bf16.mxu0 0
  %257 = vmatpush1.bf16.msra.mxu0 %v157
  %258 = vmatprep.subr.bf16.mxu0 0
  %259 = vmatpush1.bf16.msra.mxu0 %v156
  %260 = vmatprep.subr.bf16.mxu0 0
  %261 = vmatpush2.bf16.msra.mxu0 0
  %262 = vmatprep.subr.bf16.mxu0 0
  %263 = vmatpush2.bf16.msra.mxu0 0
  %264 = vmatprep.subr.bf16.mxu0 0
  %265 = vmatpush2.bf16.msra.mxu0 0
  %266 = vmatprep.subr.bf16.mxu0 0
  %267 = vmatpush2.bf16.msra.mxu0 0
  %268 = vmatprep.subr.bf16.mxu0 0
  %269 = vmatpush2.bf16.msra.mxu0 0
  %270 = vmatprep.subr.bf16.mxu0 0
  %271 = vmatpush2.bf16.msra.mxu0 0
  %272 = vmatprep.subr.bf16.mxu0 0
  %273 = vmatpush2.bf16.msra.mxu0 0
  %274 = vmatprep.subr.bf16.mxu0 0
  %275 = vmatpush2.bf16.msra.mxu0 0
  %276 = vmatprep.mubr.bf16.mxu0 0
  %277 = vmatmul.mubr.bf16.gmra.mxu0 %v242
  %v278 = vpop.f32.mrf.mxu0
  %v279 = vadd.f32 %v146, %v278
  %v280 = vpop.f32.mrf.mxu0
  %v281 = vpop.f32.mrf.mxu0
  %v282 = vpop.f32.mrf.mxu0
  %283 = vdwg.mxu0
  %v285 = vrot.slane %v279, 6
  %v287 = vadd.f32 %v131, %v285
  %v288 = vxor.u32 %v287, 2147483648
  %v289 = vmul.f32 %v288, 1.442695
  %v290 = vpow.pop %v289
  %v291 = vadd.f32 %v290, 1.0
  %v292 = vrcp.pop %v291
  %v293 = vmul.f32 1.0, %v292
  %294 = vrot.lane.b32.xlu0 %v285, 64
  %v295 = vpop.permute.xlu0 %294
  %v297 = vmul.f32 %v293, %v295
  %299 = vrot.lane.b32.xlu0 %v297, 64
  %v300 = vpop.permute.xlu0 %299
  %v302 = vadd.f32 %v131, %v300
  %v303 = vtanh.pop %v302
  %v304 = vsub.f32 1.0, %v293
  %306 = vrot.lane.b32.xlu0 %v303, 96
  %v307 = vpop.permute.xlu0 %306
  %v309 = vmul.f32 %v304, %v307
  %v311 = vrot.slane %v238, 6
  %312 = vrot.lane.b32.xlu0 %v311, 32
  %v313 = vpop.permute.xlu0 %312
  %v315 = vmul.f32 %v293, %v313
  %v316 = vadd.f32 %v309, %v315
  %s317 = scalar_lea.vmem %s1, 2
  %v318 = vld [vmem:[%s317] sm:$0x3]
  %v320 = vrot.slane %v316, 2
  %321 = vrot.lane.b32.xlu0 %v320, 96
  %v322 = vpop.permute.xlu0 %321
  %v324 = vmul.f32 %v318, %v322
  %v325 = vsub.f32 1.0, %v318
  %v326 = vmul.f32 %v325, %v238
  %v327 = vadd.f32 %v324, %v326
  %v328 = vmul.f32 %v318, %v327
  %v329 = vpack.c.bf16 %v327, %v327
  %v331 = vsel %vm160, %v329, 0
  %333 = vmatprep.subr.bf16.mxu0 0
  %334 = vmatpush1.bf16.msra.mxu0 0
  %335 = vmatprep.subr.bf16.mxu0 0
  %336 = vmatpush1.bf16.msra.mxu0 0
  %337 = vmatprep.subr.bf16.mxu0 0
  %338 = vmatpush1.bf16.msra.mxu0 0
  %339 = vmatprep.subr.bf16.mxu0 0
  %340 = vmatpush1.bf16.msra.mxu0 0
  %341 = vmatprep.subr.bf16.mxu0 0
  %342 = vmatpush1.bf16.msra.mxu0 0
  %343 = vmatprep.subr.bf16.mxu0 0
  %344 = vmatpush1.bf16.msra.mxu0 0
  %345 = vmatprep.subr.bf16.mxu0 0
  %346 = vmatpush1.bf16.msra.mxu0 %v157
  %347 = vmatprep.subr.bf16.mxu0 0
  %348 = vmatpush1.bf16.msra.mxu0 %v156
  %349 = vmatprep.subr.bf16.mxu0 0
  %350 = vmatpush2.bf16.msra.mxu0 0
  %351 = vmatprep.subr.bf16.mxu0 0
  %352 = vmatpush2.bf16.msra.mxu0 0
  %353 = vmatprep.subr.bf16.mxu0 0
  %354 = vmatpush2.bf16.msra.mxu0 0
  %355 = vmatprep.subr.bf16.mxu0 0
  %356 = vmatpush2.bf16.msra.mxu0 0
  %357 = vmatprep.subr.bf16.mxu0 0
  %358 = vmatpush2.bf16.msra.mxu0 0
  %359 = vmatprep.subr.bf16.mxu0 0
  %360 = vmatpush2.bf16.msra.mxu0 0
  %361 = vmatprep.subr.bf16.mxu0 0
  %362 = vmatpush2.bf16.msra.mxu0 0
  %363 = vmatprep.subr.bf16.mxu0 0
  %364 = vmatpush2.bf16.msra.mxu0 0
  %365 = vmatprep.mubr.bf16.mxu0 0
  %366 = vmatmul.mubr.bf16.gmra.mxu0 %v331
  %v367 = vpop.f32.mrf.mxu0
  %v368 = vadd.f32 %v146, %v367
  %v369 = vpop.f32.mrf.mxu0
  %v370 = vpop.f32.mrf.mxu0
  %v371 = vpop.f32.mrf.mxu0
  %372 = vdwg.mxu0
  %v374 = vrot.slane %v368, 4
  %v376 = vadd.f32 %v131, %v374
  %v377 = vxor.u32 %v376, 2147483648
  %v378 = vmul.f32 %v377, 1.442695
  %v379 = vpow.pop %v378
  %v380 = vadd.f32 %v379, 1.0
  %v381 = vrcp.pop %v380
  %v382 = vmul.f32 1.0, %v381
  %383 = vrot.lane.b32.xlu0 %v374, 64
  %v384 = vpop.permute.xlu0 %383
  %v386 = vmul.f32 %v382, %v384
  %388 = vrot.lane.b32.xlu0 %v386, 64
  %v389 = vpop.permute.xlu0 %388
  %v391 = vadd.f32 %v131, %v389
  %v392 = vtanh.pop %v391
  %v393 = vsub.f32 1.0, %v382
  %395 = vrot.lane.b32.xlu0 %v392, 96
  %v396 = vpop.permute.xlu0 %395
  %v398 = vmul.f32 %v393, %v396
  %v400 = vrot.slane %v327, 4
  %401 = vrot.lane.b32.xlu0 %v400, 32
  %v402 = vpop.permute.xlu0 %401
  %v404 = vmul.f32 %v382, %v402
  %v405 = vadd.f32 %v398, %v404
  %s406 = scalar_lea.vmem %s1, 4
  %v407 = vld [vmem:[%s406] sm:$0x3]
  %v409 = vrot.slane %v405, 4
  %410 = vrot.lane.b32.xlu0 %v409, 96
  %v411 = vpop.permute.xlu0 %410
  %v413 = vmul.f32 %v407, %v411
  %v414 = vsub.f32 1.0, %v407
  %v415 = vmul.f32 %v414, %v327
  %v416 = vadd.f32 %v413, %v415
  %v417 = vmul.f32 %v407, %v416
  %v418 = vpack.c.bf16 %v416, %v416
  %v420 = vsel %vm160, %v418, 0
  %422 = vmatprep.subr.bf16.mxu0 0
  %423 = vmatpush1.bf16.msra.mxu0 0
  %424 = vmatprep.subr.bf16.mxu0 0
  %425 = vmatpush1.bf16.msra.mxu0 0
  %426 = vmatprep.subr.bf16.mxu0 0
  %427 = vmatpush1.bf16.msra.mxu0 0
  %428 = vmatprep.subr.bf16.mxu0 0
  %429 = vmatpush1.bf16.msra.mxu0 0
  %430 = vmatprep.subr.bf16.mxu0 0
  %431 = vmatpush1.bf16.msra.mxu0 0
  %432 = vmatprep.subr.bf16.mxu0 0
  %433 = vmatpush1.bf16.msra.mxu0 0
  %434 = vmatprep.subr.bf16.mxu0 0
  %435 = vmatpush1.bf16.msra.mxu0 %v157
  %436 = vmatprep.subr.bf16.mxu0 0
  %437 = vmatpush1.bf16.msra.mxu0 %v156
  %438 = vmatprep.subr.bf16.mxu0 0
  %439 = vmatpush2.bf16.msra.mxu0 0
  %440 = vmatprep.subr.bf16.mxu0 0
  %441 = vmatpush2.bf16.msra.mxu0 0
  %442 = vmatprep.subr.bf16.mxu0 0
  %443 = vmatpush2.bf16.msra.mxu0 0
  %444 = vmatprep.subr.bf16.mxu0 0
  %445 = vmatpush2.bf16.msra.mxu0 0
  %446 = vmatprep.subr.bf16.mxu0 0
  %447 = vmatpush2.bf16.msra.mxu0 0
  %448 = vmatprep.subr.bf16.mxu0 0
  %449 = vmatpush2.bf16.msra.mxu0 0
  %450 = vmatprep.subr.bf16.mxu0 0
  %451 = vmatpush2.bf16.msra.mxu0 0
  %452 = vmatprep.subr.bf16.mxu0 0
  %453 = vmatpush2.bf16.msra.mxu0 0
  %454 = vmatprep.mubr.bf16.mxu0 0
  %455 = vmatmul.mubr.bf16.gmra.mxu0 %v420
  %v456 = vpop.f32.mrf.mxu0
  %v457 = vadd.f32 %v146, %v456
  %v458 = vpop.f32.mrf.mxu0
  %v459 = vpop.f32.mrf.mxu0
  %v460 = vpop.f32.mrf.mxu0
  %461 = vdwg.mxu0
  %v463 = vrot.slane %v457, 2
  %v465 = vadd.f32 %v131, %v463
  %v466 = vxor.u32 %v465, 2147483648
  %v467 = vmul.f32 %v466, 1.442695
  %v468 = vpow.pop %v467
  %v469 = vadd.f32 %v468, 1.0
  %v470 = vrcp.pop %v469
  %v471 = vmul.f32 1.0, %v470
  %472 = vrot.lane.b32.xlu0 %v463, 64
  %v473 = vpop.permute.xlu0 %472
  %v475 = vmul.f32 %v471, %v473
  %477 = vrot.lane.b32.xlu0 %v475, 64
  %v478 = vpop.permute.xlu0 %477
  %v480 = vadd.f32 %v131, %v478
  %v481 = vtanh.pop %v480
  %v482 = vsub.f32 1.0, %v471
  %484 = vrot.lane.b32.xlu0 %v481, 96
  %v485 = vpop.permute.xlu0 %484
  %v487 = vmul.f32 %v482, %v485
  %v489 = vrot.slane %v416, 2
  %490 = vrot.lane.b32.xlu0 %v489, 32
  %v491 = vpop.permute.xlu0 %490
  %v493 = vmul.f32 %v471, %v491
  %v494 = vadd.f32 %v487, %v493
  %s495 = scalar_lea.vmem %s1, 6
  %v496 = vld [vmem:[%s495] sm:$0x3]
  %v498 = vrot.slane %v494, 6
  %499 = vrot.lane.b32.xlu0 %v498, 96
  %v500 = vpop.permute.xlu0 %499
  %v502 = vmul.f32 %v496, %v500
  %v503 = vsub.f32 1.0, %v496
  %v504 = vmul.f32 %v503, %v416
  %v505 = vadd.f32 %v502, %v504
  %v506 = vmul.f32 %v496, %v505
  %v507 = vpack.c.bf16 %v505, %v505
  %v509 = vsel %vm160, %v507, 0
  %511 = vmatprep.subr.bf16.mxu0 0
  %512 = vmatpush1.bf16.msra.mxu0 0
  %513 = vmatprep.subr.bf16.mxu0 0
  %514 = vmatpush1.bf16.msra.mxu0 0
  %515 = vmatprep.subr.bf16.mxu0 0
  %516 = vmatpush1.bf16.msra.mxu0 0
  %517 = vmatprep.subr.bf16.mxu0 0
  %518 = vmatpush1.bf16.msra.mxu0 0
  %519 = vmatprep.subr.bf16.mxu0 0
  %520 = vmatpush1.bf16.msra.mxu0 0
  %521 = vmatprep.subr.bf16.mxu0 0
  %522 = vmatpush1.bf16.msra.mxu0 0
  %523 = vmatprep.subr.bf16.mxu0 0
  %524 = vmatpush1.bf16.msra.mxu0 %v157
  %525 = vmatprep.subr.bf16.mxu0 0
  %526 = vmatpush1.bf16.msra.mxu0 %v156
  %527 = vmatprep.subr.bf16.mxu0 0
  %528 = vmatpush2.bf16.msra.mxu0 0
  %529 = vmatprep.subr.bf16.mxu0 0
  %530 = vmatpush2.bf16.msra.mxu0 0
  %531 = vmatprep.subr.bf16.mxu0 0
  %532 = vmatpush2.bf16.msra.mxu0 0
  %533 = vmatprep.subr.bf16.mxu0 0
  %534 = vmatpush2.bf16.msra.mxu0 0
  %535 = vmatprep.subr.bf16.mxu0 0
  %536 = vmatpush2.bf16.msra.mxu0 0
  %537 = vmatprep.subr.bf16.mxu0 0
  %538 = vmatpush2.bf16.msra.mxu0 0
  %539 = vmatprep.subr.bf16.mxu0 0
  %540 = vmatpush2.bf16.msra.mxu0 0
  %541 = vmatprep.subr.bf16.mxu0 0
  %542 = vmatpush2.bf16.msra.mxu0 0
  %543 = vmatprep.mubr.bf16.mxu0 0
  %544 = vmatmul.mubr.bf16.gmra.mxu0 %v509
  %v545 = vpop.f32.mrf.mxu0
  %v546 = vadd.f32 %v146, %v545
  %v547 = vpop.f32.mrf.mxu0
  %v548 = vpop.f32.mrf.mxu0
  %v549 = vpop.f32.mrf.mxu0
  %550 = vdwg.mxu0
  %v551 = vadd.f32 %v134, %v546
  %v552 = vxor.u32 %v551, 2147483648
  %v553 = vmul.f32 %v552, 1.442695
  %v554 = vpow.pop %v553
  %v555 = vadd.f32 %v554, 1.0
  %v556 = vrcp.pop %v555
  %v557 = vmul.f32 1.0, %v556
  %559 = vrot.lane.b32.xlu0 %v546, 64
  %v560 = vpop.permute.xlu0 %559
  %v562 = vmul.f32 %v557, %v560
  %564 = vrot.lane.b32.xlu0 %v562, 64
  %v565 = vpop.permute.xlu0 %564
  %v567 = vadd.f32 %v134, %v565
  %v568 = vtanh.pop %v567
  %v569 = vsub.f32 1.0, %v557
  %571 = vrot.lane.b32.xlu0 %v568, 96
  %v572 = vpop.permute.xlu0 %571
  %v574 = vmul.f32 %v569, %v572
  %576 = vrot.lane.b32.xlu0 %v505, 32
  %v577 = vpop.permute.xlu0 %576
  %v579 = vmul.f32 %v557, %v577
  %v580 = vadd.f32 %v574, %v579
  %s581 = scalar_lea.vmem %s1, 8
  %v582 = vld [vmem:[%s581] sm:$0x3]
  %584 = vrot.lane.b32.xlu0 %v580, 96
  %v585 = vpop.permute.xlu0 %584
  %v587 = vmul.f32 %v582, %v585
  %v588 = vsub.f32 1.0, %v582
  %v589 = vmul.f32 %v588, %v505
  %v590 = vadd.f32 %v587, %v589
  %v591 = vmul.f32 %v582, %v590
  %v592 = vpack.c.bf16 %v590, %v590
  %v594 = vsel %vm160, %v592, 0
  %596 = vmatprep.subr.bf16.mxu0 0
  %597 = vmatpush1.bf16.msra.mxu0 0
  %598 = vmatprep.subr.bf16.mxu0 0
  %599 = vmatpush1.bf16.msra.mxu0 0
  %600 = vmatprep.subr.bf16.mxu0 0
  %601 = vmatpush1.bf16.msra.mxu0 0
  %602 = vmatprep.subr.bf16.mxu0 0
  %603 = vmatpush1.bf16.msra.mxu0 0
  %604 = vmatprep.subr.bf16.mxu0 0
  %605 = vmatpush1.bf16.msra.mxu0 0
  %606 = vmatprep.subr.bf16.mxu0 0
  %607 = vmatpush1.bf16.msra.mxu0 0
  %608 = vmatprep.subr.bf16.mxu0 0
  %609 = vmatpush1.bf16.msra.mxu0 %v157
  %610 = vmatprep.subr.bf16.mxu0 0
  %611 = vmatpush1.bf16.msra.mxu0 %v156
  %612 = vmatprep.subr.bf16.mxu0 0
  %613 = vmatpush2.bf16.msra.mxu0 0
  %614 = vmatprep.subr.bf16.mxu0 0
  %615 = vmatpush2.bf16.msra.mxu0 0
  %616 = vmatprep.subr.bf16.mxu0 0
  %617 = vmatpush2.bf16.msra.mxu0 0
  %618 = vmatprep.subr.bf16.mxu0 0
  %619 = vmatpush2.bf16.msra.mxu0 0
  %620 = vmatprep.subr.bf16.mxu0 0
  %621 = vmatpush2.bf16.msra.mxu0 0
  %622 = vmatprep.subr.bf16.mxu0 0
  %623 = vmatpush2.bf16.msra.mxu0 0
  %624 = vmatprep.subr.bf16.mxu0 0
  %625 = vmatpush2.bf16.msra.mxu0 0
  %626 = vmatprep.subr.bf16.mxu0 0
  %627 = vmatpush2.bf16.msra.mxu0 0
  %628 = vmatprep.mubr.bf16.mxu0 0
  %629 = vmatmul.mubr.bf16.gmra.mxu0 %v594
  %v630 = vpop.f32.mrf.mxu0
  %v631 = vadd.f32 %v146, %v630
  %v632 = vpop.f32.mrf.mxu0
  %v633 = vpop.f32.mrf.mxu0
  %v634 = vpop.f32.mrf.mxu0
  %635 = vdwg.mxu0
  %v637 = vrot.slane %v631, 6
  %v639 = vadd.f32 %v134, %v637
  %v640 = vxor.u32 %v639, 2147483648
  %v641 = vmul.f32 %v640, 1.442695
  %v642 = vpow.pop %v641
  %v643 = vadd.f32 %v642, 1.0
  %v644 = vrcp.pop %v643
  %v645 = vmul.f32 1.0, %v644
  %646 = vrot.lane.b32.xlu0 %v637, 64
  %v647 = vpop.permute.xlu0 %646
  %v649 = vmul.f32 %v645, %v647
  %651 = vrot.lane.b32.xlu0 %v649, 64
  %v652 = vpop.permute.xlu0 %651
  %v654 = vadd.f32 %v134, %v652
  %v655 = vtanh.pop %v654
  %v656 = vsub.f32 1.0, %v645
  %658 = vrot.lane.b32.xlu0 %v655, 96
  %v659 = vpop.permute.xlu0 %658
  %v661 = vmul.f32 %v656, %v659
  %v663 = vrot.slane %v590, 6
  %664 = vrot.lane.b32.xlu0 %v663, 32
  %v665 = vpop.permute.xlu0 %664
  %v667 = vmul.f32 %v645, %v665
  %v668 = vadd.f32 %v661, %v667
  %s669 = scalar_lea.vmem %s1, 10
  %v670 = vld [vmem:[%s669] sm:$0x3]
  %v672 = vrot.slane %v668, 2
  %673 = vrot.lane.b32.xlu0 %v672, 96
  %v674 = vpop.permute.xlu0 %673
  %v676 = vmul.f32 %v670, %v674
  %v677 = vsub.f32 1.0, %v670
  %v678 = vmul.f32 %v677, %v590
  %v679 = vadd.f32 %v676, %v678
  %v680 = vmul.f32 %v670, %v679
  %v681 = vpack.c.bf16 %v679, %v679
  %v683 = vsel %vm160, %v681, 0
  %685 = vmatprep.subr.bf16.mxu0 0
  %686 = vmatpush1.bf16.msra.mxu0 0
  %687 = vmatprep.subr.bf16.mxu0 0
  %688 = vmatpush1.bf16.msra.mxu0 0
  %689 = vmatprep.subr.bf16.mxu0 0
  %690 = vmatpush1.bf16.msra.mxu0 0
  %691 = vmatprep.subr.bf16.mxu0 0
  %692 = vmatpush1.bf16.msra.mxu0 0
  %693 = vmatprep.subr.bf16.mxu0 0
  %694 = vmatpush1.bf16.msra.mxu0 0
  %695 = vmatprep.subr.bf16.mxu0 0
  %696 = vmatpush1.bf16.msra.mxu0 0
  %697 = vmatprep.subr.bf16.mxu0 0
  %698 = vmatpush1.bf16.msra.mxu0 %v157
  %699 = vmatprep.subr.bf16.mxu0 0
  %700 = vmatpush1.bf16.msra.mxu0 %v156
  %701 = vmatprep.subr.bf16.mxu0 0
  %702 = vmatpush2.bf16.msra.mxu0 0
  %703 = vmatprep.subr.bf16.mxu0 0
  %704 = vmatpush2.bf16.msra.mxu0 0
  %705 = vmatprep.subr.bf16.mxu0 0
  %706 = vmatpush2.bf16.msra.mxu0 0
  %707 = vmatprep.subr.bf16.mxu0 0
  %708 = vmatpush2.bf16.msra.mxu0 0
  %709 = vmatprep.subr.bf16.mxu0 0
  %710 = vmatpush2.bf16.msra.mxu0 0
  %711 = vmatprep.subr.bf16.mxu0 0
  %712 = vmatpush2.bf16.msra.mxu0 0
  %713 = vmatprep.subr.bf16.mxu0 0
  %714 = vmatpush2.bf16.msra.mxu0 0
  %715 = vmatprep.subr.bf16.mxu0 0
  %716 = vmatpush2.bf16.msra.mxu0 0
  %717 = vmatprep.mubr.bf16.mxu0 0
  %718 = vmatmul.mubr.bf16.gmra.mxu0 %v683
  %v719 = vpop.f32.mrf.mxu0
  %v720 = vadd.f32 %v146, %v719
  %v721 = vpop.f32.mrf.mxu0
  %v722 = vpop.f32.mrf.mxu0
  %v723 = vpop.f32.mrf.mxu0
  %724 = vdwg.mxu0
  %v726 = vrot.slane %v720, 4
  %v728 = vadd.f32 %v134, %v726
  %v729 = vxor.u32 %v728, 2147483648
  %v730 = vmul.f32 %v729, 1.442695
  %v731 = vpow.pop %v730
  %v732 = vadd.f32 %v731, 1.0
  %v733 = vrcp.pop %v732
  %v734 = vmul.f32 1.0, %v733
  %735 = vrot.lane.b32.xlu0 %v726, 64
  %v736 = vpop.permute.xlu0 %735
  %v738 = vmul.f32 %v734, %v736
  %740 = vrot.lane.b32.xlu0 %v738, 64
  %v741 = vpop.permute.xlu0 %740
  %v743 = vadd.f32 %v134, %v741
  %v744 = vtanh.pop %v743
  %v745 = vsub.f32 1.0, %v734
  %747 = vrot.lane.b32.xlu0 %v744, 96
  %v748 = vpop.permute.xlu0 %747
  %v750 = vmul.f32 %v745, %v748
  %v752 = vrot.slane %v679, 4
  %753 = vrot.lane.b32.xlu0 %v752, 32
  %v754 = vpop.permute.xlu0 %753
  %v756 = vmul.f32 %v734, %v754
  %v757 = vadd.f32 %v750, %v756
  %s758 = scalar_lea.vmem %s1, 12
  %v759 = vld [vmem:[%s758] sm:$0x3]
  %v761 = vrot.slane %v757, 4
  %762 = vrot.lane.b32.xlu0 %v761, 96
  %v763 = vpop.permute.xlu0 %762
  %v765 = vmul.f32 %v759, %v763
  %v766 = vsub.f32 1.0, %v759
  %v767 = vmul.f32 %v766, %v679
  %v768 = vadd.f32 %v765, %v767
  %v769 = vmul.f32 %v759, %v768
  %v770 = vpack.c.bf16 %v768, %v768
  %v772 = vsel %vm160, %v770, 0
  %774 = vmatprep.subr.bf16.mxu0 0
  %775 = vmatpush1.bf16.msra.mxu0 0
  %776 = vmatprep.subr.bf16.mxu0 0
  %777 = vmatpush1.bf16.msra.mxu0 0
  %778 = vmatprep.subr.bf16.mxu0 0
  %779 = vmatpush1.bf16.msra.mxu0 0
  %780 = vmatprep.subr.bf16.mxu0 0
  %781 = vmatpush1.bf16.msra.mxu0 0
  %782 = vmatprep.subr.bf16.mxu0 0
  %783 = vmatpush1.bf16.msra.mxu0 0
  %784 = vmatprep.subr.bf16.mxu0 0
  %785 = vmatpush1.bf16.msra.mxu0 0
  %786 = vmatprep.subr.bf16.mxu0 0
  %787 = vmatpush1.bf16.msra.mxu0 %v157
  %788 = vmatprep.subr.bf16.mxu0 0
  %789 = vmatpush1.bf16.msra.mxu0 %v156
  %790 = vmatprep.subr.bf16.mxu0 0
  %791 = vmatpush2.bf16.msra.mxu0 0
  %792 = vmatprep.subr.bf16.mxu0 0
  %793 = vmatpush2.bf16.msra.mxu0 0
  %794 = vmatprep.subr.bf16.mxu0 0
  %795 = vmatpush2.bf16.msra.mxu0 0
  %796 = vmatprep.subr.bf16.mxu0 0
  %797 = vmatpush2.bf16.msra.mxu0 0
  %798 = vmatprep.subr.bf16.mxu0 0
  %799 = vmatpush2.bf16.msra.mxu0 0
  %800 = vmatprep.subr.bf16.mxu0 0
  %801 = vmatpush2.bf16.msra.mxu0 0
  %802 = vmatprep.subr.bf16.mxu0 0
  %803 = vmatpush2.bf16.msra.mxu0 0
  %804 = vmatprep.subr.bf16.mxu0 0
  %805 = vmatpush2.bf16.msra.mxu0 0
  %806 = vmatprep.mubr.bf16.mxu0 0
  %807 = vmatmul.mubr.bf16.gmra.mxu0 %v772
  %v808 = vpop.f32.mrf.mxu0
  %v809 = vadd.f32 %v146, %v808
  %v810 = vpop.f32.mrf.mxu0
  %v811 = vpop.f32.mrf.mxu0
  %v812 = vpop.f32.mrf.mxu0
  %813 = vdwg.mxu0
  %v815 = vrot.slane %v809, 2
  %v817 = vadd.f32 %v134, %v815
  %v818 = vxor.u32 %v817, 2147483648
  %v819 = vmul.f32 %v818, 1.442695
  %v820 = vpow.pop %v819
  %v821 = vadd.f32 %v820, 1.0
  %v822 = vrcp.pop %v821
  %v823 = vmul.f32 1.0, %v822
  %824 = vrot.lane.b32.xlu0 %v815, 64
  %v825 = vpop.permute.xlu0 %824
  %v827 = vmul.f32 %v823, %v825
  %829 = vrot.lane.b32.xlu0 %v827, 64
  %v830 = vpop.permute.xlu0 %829
  %v832 = vadd.f32 %v134, %v830
  %v833 = vtanh.pop %v832
  %v834 = vsub.f32 1.0, %v823
  %836 = vrot.lane.b32.xlu0 %v833, 96
  %v837 = vpop.permute.xlu0 %836
  %v839 = vmul.f32 %v834, %v837
  %v841 = vrot.slane %v768, 2
  %842 = vrot.lane.b32.xlu0 %v841, 32
  %v843 = vpop.permute.xlu0 %842
  %v845 = vmul.f32 %v823, %v843
  %v846 = vadd.f32 %v839, %v845
  %s847 = scalar_lea.vmem %s1, 14
  %v848 = vld [vmem:[%s847] sm:$0x3]
  %v850 = vrot.slane %v846, 6
  %851 = vrot.lane.b32.xlu0 %v850, 96
  %v852 = vpop.permute.xlu0 %851
  %v854 = vmul.f32 %v848, %v852
  %v855 = vsub.f32 1.0, %v848
  %v856 = vmul.f32 %v855, %v768
  %v857 = vadd.f32 %v854, %v856
  %v858 = vmul.f32 %v848, %v857
  %vm859 = vcmask 130048
  %v860 = vsel %vm859, %v239, %v858
  %v861 = vsel %vm859, %v328, %v769
  %v862 = vsel %vm859, %v417, %v680
  %v863 = vsel %vm859, %v506, %v591
  %v864 = vsel %vm859, %v591, %v506
  %v865 = vsel %vm859, %v680, %v417
  %v866 = vsel %vm859, %v769, %v328
  %v867 = vsel %vm859, %v858, %v239
  %v869 = vrot.slane %v861, 6
  %v872 = vrot.slane %v862, 4
  %v875 = vrot.slane %v863, 2
  %v878 = vrot.slane %v865, 6
  %v881 = vrot.slane %v866, 4
  %v884 = vrot.slane %v867, 2
  %vm886 = vcmask 1041408
  %v887 = vsel %vm886, %v860, %v869
  %vm888 = vcmask 1043456
  %v889 = vsel %vm888, %v887, %v872
  %vm890 = vcmask 1045504
  %v891 = vsel %vm890, %v889, %v875
  %v892 = vsel %vm886, %v864, %v878
  %v893 = vsel %vm888, %v892, %v881
  %v894 = vsel %vm890, %v893, %v884
  %v895 = vpack.c.bf16 %v894, %v891
  %v896 = vld [vmem:[%s7] sm:$0xf]
  %v897 = vld [vmem:[%s7 + $0x4] sm:$0xf]
  %v898 = vld [vmem:[%s7 + $0x8] sm:$0xf]
  %v899 = vld [vmem:[%s7 + $0xc] sm:$0xf]
  %v900 = vld [vmem:[%s8] sm:$0x1]
  %v902 = vlaneseq
  %v903 = vshrl.u32 %v902, 7
  %v904 = vsub.s32 0, %v903
  %v905 = vrot.slane %v900, %v904
  %v911 = vunpack.c.l.b16 %v896
  %v912 = vunpack.c.l.b16 %v897
  %v913 = vunpack.c.l.b16 %v898
  %v914 = vunpack.c.l.b16 %v899
  %v915 = vpack.c.b16 %v912, %v911
  %v916 = vpack.c.b16 %v914, %v913
  %v920 = vsel %vm160, %v895, 0
  %922 = vmatprep.subr.bf16.mxu0 0
  %923 = vmatpush1.bf16.msra.mxu0 0
  %924 = vmatprep.subr.bf16.mxu0 0
  %925 = vmatpush1.bf16.msra.mxu0 0
  %926 = vmatprep.subr.bf16.mxu0 0
  %927 = vmatpush1.bf16.msra.mxu0 0
  %928 = vmatprep.subr.bf16.mxu0 0
  %929 = vmatpush1.bf16.msra.mxu0 0
  %930 = vmatprep.subr.bf16.mxu0 0
  %931 = vmatpush1.bf16.msra.mxu0 0
  %932 = vmatprep.subr.bf16.mxu0 0
  %933 = vmatpush1.bf16.msra.mxu0 0
  %934 = vmatprep.subr.bf16.mxu0 0
  %935 = vmatpush1.bf16.msra.mxu0 %v916
  %936 = vmatprep.subr.bf16.mxu0 0
  %937 = vmatpush1.bf16.msra.mxu0 %v915
  %938 = vmatprep.subr.bf16.mxu0 0
  %939 = vmatpush2.bf16.msra.mxu0 0
  %940 = vmatprep.subr.bf16.mxu0 0
  %941 = vmatpush2.bf16.msra.mxu0 0
  %942 = vmatprep.subr.bf16.mxu0 0
  %943 = vmatpush2.bf16.msra.mxu0 0
  %944 = vmatprep.subr.bf16.mxu0 0
  %945 = vmatpush2.bf16.msra.mxu0 0
  %946 = vmatprep.subr.bf16.mxu0 0
  %947 = vmatpush2.bf16.msra.mxu0 0
  %948 = vmatprep.subr.bf16.mxu0 0
  %949 = vmatpush2.bf16.msra.mxu0 0
  %950 = vmatprep.subr.bf16.mxu0 0
  %951 = vmatpush2.bf16.msra.mxu0 0
  %952 = vmatprep.subr.bf16.mxu0 0
  %953 = vmatpush2.bf16.msra.mxu0 0
  %954 = vmatprep.mubr.bf16.mxu0 0
  %955 = vmatmul.mubr.bf16.gmra.mxu0 %v920
  %v956 = vpop.f32.mrf.mxu0
  %v957 = vadd.f32 %v905, %v956
  %v958 = vpop.f32.mrf.mxu0
  %v959 = vpop.f32.mrf.mxu0
  %v960 = vadd.f32 %v905, %v959
  %v961 = vpop.f32.mrf.mxu0
  %962 = vdwg.mxu0
  %vm963 = vcmask 64512
  %964 = vst.msk [vmem:[%s12] sm:$0xff] %vm963, %v957
  %965 = vst.msk [vmem:[%s12 + $0x8] sm:$0xff] %vm963, %v960
  %v966 = vld [vmem:[%s11] sm:$0xff]
  %v967 = vlaneseq
  %v968 = vand.u32 %v967, 127
  %v969 = vld [vmem:[%s9] sm:$0x1]
  %v970 = vld [vmem:[%s10] sm:$0x1]
  %v972 = vlaneseq
  %v973 = vshrl.u32 %v972, 7
  %v974 = vsub.s32 0, %v973
  %v975 = vrot.slane %v969, %v974
  %v977 = vadd.f32 %v975, %v957
  %s978 = scalar_lea.vmem %s2, 2
  %v979 = vld [vmem:[%s978] sm:$0x3]
  %v982 = vunpack.c.l.s4 1966171168
  %v983 = vunpack.c.0.s8 %v982
  %v984 = vlaneseq
  %v985 = vshrl.u32 %v984, 7
  %v986 = vsub.s32 %v983, %v985
  %v987 = vrot.slane %v977, %v986
  %v988 = vcombine.high %v987, %v987
  %v990 = vunpack.c.l.s4 1966171168
  %v991 = vunpack.c.0.s8 %v990
  %v992 = vlaneseq
  %v993 = vshrl.u32 %v992, 7
  %v994 = vsub.s32 %v991, %v993
  %v995 = vrot.slane %v987, %v994
  %v997 = vunpack.c.l.s4 1966171168
  %v998 = vunpack.c.0.s8 %v997
  %v999 = vlaneseq
  %v1000 = vshrl.u32 %v999, 7
  %v1001 = vsub.s32 %v998, %v1000
  %v1002 = vrot.slane %v988, %v1001
  %v1003 = vlaneseq
  %v1004 = vshrl.u32 %v1003, 7
  %v1005 = vsub.s32 0, %v1004
  %v1006 = vrot.slane %v995, %v1005
  %v1007 = vlaneseq
  %v1008 = vshrl.u32 %v1007, 7
  %v1009 = vsub.s32 0, %v1008
  %v1010 = vrot.slane %v1002, %v1009
  %v1013 = vadd.f32 %v1006, %v966
  %v1014 = vadd.f32 %v1010, %v966
  %v1015 = vsel %vm963, %v1013, -inf
  %1016 = vmax.xlane.f32.xlu0 %v1015
  %v1017 = vpop.xlane.xlu0 %1016
  %v1018 = vsel %vm963, %v1014, -inf
  %1019 = vmax.xlane.f32.xlu0 %v1018
  %v1020 = vpop.xlane.xlu0 %1019
  %v1021 = vsub.f32 %v1013, %v1017
  %v1022 = vsub.f32 %v1014, %v1020
  %v1023 = vmul.f32 %v1021, 1.442695
  %v1024 = vpow.pop %v1023
  %v1025 = vmul.f32 %v1022, 1.442695
  %v1026 = vpow.pop %v1025
  %v1027 = vsel %vm963, %v1024, 0.0
  %1028 = vadd.xlane.f32.xlu0 %v1027
  %v1029 = vpop.xlane.xlu0 %1028
  %v1030 = vsel %vm963, %v1026, 0.0
  %1031 = vadd.xlane.f32.xlu0 %v1030
  %v1032 = vpop.xlane.xlu0 %1031
  %v1033 = vlog2.pop %v1029
  %v1034 = vmul.f32 %v1033, 0.6931472
  %v1035 = vlog2.pop %v1032
  %v1036 = vmul.f32 %v1035, 0.6931472
  %v1037 = vadd.f32 %v1017, %v1034
  %v1038 = vadd.f32 %v1020, %v1036
  %vm1039 = vcmp.gt.f32.partialorder %v979, 0.5
  %v1041 = vlaneseq
  %v1042 = vshrl.u32 %v1041, 7
  %v1043 = vsub.s32 2, %v1042
  %v1044 = vrot.slane %v957, %v1043
  %1046 = vbcast.lane.b32.xlu0 %v1044, 256
  %v1047 = vpop.permute.xlu0 %1046
  %v1048 = vlaneseq
  %v1049 = vshrl.u32 %v1048, 7
  %v1050 = vsub.s32 3, %v1049
  %v1051 = vrot.slane %v957, %v1050
  %1053 = vbcast.lane.b32.xlu0 %v1051, 256
  %v1054 = vpop.permute.xlu0 %1053
  %v1057 = vadd.f32 %v1037, %v1047
  %v1058 = vadd.f32 %v1038, %v1054
  %1061 = vset.pattern.permute.xlu0 0
  %1062 = vperm.xlu0 %1061, %v1057
  %v1063 = vpop.permute.xlu0 %1062
  %1064 = vset.pattern.permute.xlu0 0
  %1065 = vperm.xlu0 %1064, %v1058
  %v1066 = vpop.permute.xlu0 %1065
  %v1067 = vlaneseq
  %v1068 = vshrl.u32 %v1067, 7
  %v1069 = vsub.s32 %v968, %v1068
  %v1070 = vrot.slane %v1063, %v1069
  %v1071 = vlaneseq
  %v1072 = vshrl.u32 %v1071, 7
  %v1073 = vsub.s32 %v968, %v1072
  %v1074 = vrot.slane %v1066, %v1073
  %vm1075 = vcmask 1041409
  %v1076 = vsel %vm1075, %v1074, %v1070
  %v1078 = vsel %vm1039, %v1076, %v977
  %vm1079 = vcmp.ge.f32.partialorder %v1013, %v1017
  %vm1080 = vcmp.ge.f32.partialorder %v1014, %v1020
  %v1081 = vsel %vm1079, %v968, 1073741824
  %v1082 = vsel %vm1080, %v968, 1073741824
  %v1083 = vsel %vm963, %v1081, 2147483647
  %v1084 = vand.u32 %v1083, 65535
  %v1085 = vshra.s32 %v1083, 16
  %v1086 = vcvt.s32.f32 %v1084
  %v1087 = vcvt.s32.f32 %v1085
  %1088 = vmin.xlane.f32.xlu0 %v1087
  %v1089 = vpop.xlane.xlu0 %1088
  %vm1090 = vcmp.eq.f32.partialorder %v1087, %v1089
  %v1091 = vsel %vm1090, %v1086, inf
  %1092 = vmin.xlane.f32.xlu0 %v1091
  %v1093 = vpop.xlane.xlu0 %1092
  %v1094 = vcvt.f32.s32 %v1093
  %v1095 = vcvt.f32.s32 %v1089
  %v1096 = vshll.u32 %v1095, 16
  %v1097 = vadd.s32 %v1096, %v1094
  %v1098 = vsel %vm963, %v1082, 2147483647
  %v1099 = vand.u32 %v1098, 65535
  %v1100 = vshra.s32 %v1098, 16
  %v1101 = vcvt.s32.f32 %v1099
  %v1102 = vcvt.s32.f32 %v1100
  %1103 = vmin.xlane.f32.xlu0 %v1102
  %v1104 = vpop.xlane.xlu0 %1103
  %vm1105 = vcmp.eq.f32.partialorder %v1102, %v1104
  %v1106 = vsel %vm1105, %v1101, inf
  %1107 = vmin.xlane.f32.xlu0 %v1106
  %v1108 = vpop.xlane.xlu0 %1107
  %v1109 = vcvt.f32.s32 %v1108
  %v1110 = vcvt.f32.s32 %v1104
  %v1111 = vshll.u32 %v1110, 16
  %v1112 = vadd.s32 %v1111, %v1109
  %v1113 = vadd.f32 %v1017, %v1047
  %v1114 = vadd.f32 %v1020, %v1054
  %s1115 = scalar_lea.vmem %s2, 4
  %v1116 = vld [vmem:[%s1115] sm:$0x3]
  %v1119 = vunpack.c.l.s4 1966171168
  %v1120 = vunpack.c.0.s8 %v1119
  %v1121 = vlaneseq
  %v1122 = vshrl.u32 %v1121, 7
  %v1123 = vsub.s32 %v1120, %v1122
  %v1124 = vrot.slane %v1078, %v1123
  %v1125 = vcombine.high %v1124, %v1124
  %v1127 = vunpack.c.l.s4 1966171168
  %v1128 = vunpack.c.0.s8 %v1127
  %v1129 = vlaneseq
  %v1130 = vshrl.u32 %v1129, 7
  %v1131 = vsub.s32 %v1128, %v1130
  %v1132 = vrot.slane %v1124, %v1131
  %v1134 = vunpack.c.l.s4 1966171168
  %v1135 = vunpack.c.0.s8 %v1134
  %v1136 = vlaneseq
  %v1137 = vshrl.u32 %v1136, 7
  %v1138 = vsub.s32 %v1135, %v1137
  %v1139 = vrot.slane %v1125, %v1138
  %v1140 = vlaneseq
  %v1141 = vshrl.u32 %v1140, 7
  %v1142 = vsub.s32 0, %v1141
  %v1143 = vrot.slane %v1132, %v1142
  %v1144 = vlaneseq
  %v1145 = vshrl.u32 %v1144, 7
  %v1146 = vsub.s32 0, %v1145
  %v1147 = vrot.slane %v1139, %v1146
  %v1150 = vadd.f32 %v1143, %v966
  %v1151 = vadd.f32 %v1147, %v966
  %v1152 = vsel %vm963, %v1150, -inf
  %1153 = vmax.xlane.f32.xlu0 %v1152
  %v1154 = vpop.xlane.xlu0 %1153
  %v1155 = vsel %vm963, %v1151, -inf
  %1156 = vmax.xlane.f32.xlu0 %v1155
  %v1157 = vpop.xlane.xlu0 %1156
  %v1158 = vsub.f32 %v1150, %v1154
  %v1159 = vsub.f32 %v1151, %v1157
  %v1160 = vmul.f32 %v1158, 1.442695
  %v1161 = vpow.pop %v1160
  %v1162 = vmul.f32 %v1159, 1.442695
  %v1163 = vpow.pop %v1162
  %v1164 = vsel %vm963, %v1161, 0.0
  %1165 = vadd.xlane.f32.xlu0 %v1164
  %v1166 = vpop.xlane.xlu0 %1165
  %v1167 = vsel %vm963, %v1163, 0.0
  %1168 = vadd.xlane.f32.xlu0 %v1167
  %v1169 = vpop.xlane.xlu0 %1168
  %v1170 = vlog2.pop %v1166
  %v1171 = vmul.f32 %v1170, 0.6931472
  %v1172 = vlog2.pop %v1169
  %v1173 = vmul.f32 %v1172, 0.6931472
  %v1174 = vadd.f32 %v1154, %v1171
  %v1175 = vadd.f32 %v1157, %v1173
  %vm1176 = vcmp.gt.f32.partialorder %v1116, 0.5
  %v1177 = vlaneseq
  %v1178 = vshrl.u32 %v1177, 7
  %v1179 = vsub.s32 4, %v1178
  %v1180 = vrot.slane %v957, %v1179
  %1182 = vbcast.lane.b32.xlu0 %v1180, 256
  %v1183 = vpop.permute.xlu0 %1182
  %v1184 = vlaneseq
  %v1185 = vshrl.u32 %v1184, 7
  %v1186 = vsub.s32 5, %v1185
  %v1187 = vrot.slane %v957, %v1186
  %1189 = vbcast.lane.b32.xlu0 %v1187, 256
  %v1190 = vpop.permute.xlu0 %1189
  %v1193 = vadd.f32 %v1174, %v1183
  %v1194 = vadd.f32 %v1175, %v1190
  %1197 = vset.pattern.permute.xlu0 0
  %1198 = vperm.xlu0 %1197, %v1193
  %v1199 = vpop.permute.xlu0 %1198
  %1200 = vset.pattern.permute.xlu0 0
  %1201 = vperm.xlu0 %1200, %v1194
  %v1202 = vpop.permute.xlu0 %1201
  %v1203 = vlaneseq
  %v1204 = vshrl.u32 %v1203, 7
  %v1205 = vsub.s32 %v968, %v1204
  %v1206 = vrot.slane %v1199, %v1205
  %v1207 = vlaneseq
  %v1208 = vshrl.u32 %v1207, 7
  %v1209 = vsub.s32 %v968, %v1208
  %v1210 = vrot.slane %v1202, %v1209
  %v1211 = vsel %vm1075, %v1210, %v1206
  %v1213 = vsel %vm1176, %v1211, %v1078
  %v1215 = vlaneseq
  %v1216 = vshrl.u32 %v1215, 7
  %v1217 = vsub.s32 0, %v1216
  %v1218 = vrot.slane %v966, %v1217
  %1220 = vbcast.lane.b32.xlu0 %v1218, 256
  %v1221 = vpop.permute.xlu0 %1220
  %v1222 = vlaneseq
  %v1223 = vshrl.u32 %v1222, 7
  %v1224 = vsub.s32 1, %v1223
  %v1225 = vrot.slane %v966, %v1224
  %1227 = vbcast.lane.b32.xlu0 %v1225, 256
  %v1228 = vpop.permute.xlu0 %1227
  %v1229 = vlaneseq
  %v1230 = vshrl.u32 %v1229, 7
  %v1231 = vsub.s32 2, %v1230
  %v1232 = vrot.slane %v966, %v1231
  %1234 = vbcast.lane.b32.xlu0 %v1232, 256
  %v1235 = vpop.permute.xlu0 %1234
  %v1236 = vlaneseq
  %v1237 = vshrl.u32 %v1236, 7
  %v1238 = vsub.s32 3, %v1237
  %v1239 = vrot.slane %v966, %v1238
  %1241 = vbcast.lane.b32.xlu0 %v1239, 256
  %v1242 = vpop.permute.xlu0 %1241
  %v1243 = vlaneseq
  %v1244 = vshrl.u32 %v1243, 7
  %v1245 = vsub.s32 4, %v1244
  %v1246 = vrot.slane %v966, %v1245
  %1248 = vbcast.lane.b32.xlu0 %v1246, 256
  %v1249 = vpop.permute.xlu0 %1248
  %v1250 = vlaneseq
  %v1251 = vshrl.u32 %v1250, 7
  %v1252 = vsub.s32 5, %v1251
  %v1253 = vrot.slane %v966, %v1252
  %1255 = vbcast.lane.b32.xlu0 %v1253, 256
  %v1256 = vpop.permute.xlu0 %1255
  %v1257 = vlaneseq
  %v1258 = vshrl.u32 %v1257, 7
  %v1259 = vsub.s32 6, %v1258
  %v1260 = vrot.slane %v966, %v1259
  %1262 = vbcast.lane.b32.xlu0 %v1260, 256
  %v1263 = vpop.permute.xlu0 %1262
  %v1264 = vlaneseq
  %v1265 = vshrl.u32 %v1264, 7
  %v1266 = vsub.s32 7, %v1265
  %v1267 = vrot.slane %v966, %v1266
  %1269 = vbcast.lane.b32.xlu0 %v1267, 256
  %v1270 = vpop.permute.xlu0 %1269
  %v1279 = vadd.f32 %v1113, %v1221
  %v1280 = vadd.f32 %v1113, %v1228
  %v1281 = vadd.f32 %v1113, %v1235
  %v1282 = vadd.f32 %v1113, %v1242
  %v1283 = vadd.f32 %v1113, %v1249
  %v1284 = vadd.f32 %v1113, %v1256
  %v1285 = vadd.f32 %v1113, %v1263
  %v1286 = vadd.f32 %v1113, %v1270
  %v1287 = vadd.f32 %v1114, %v1221
  %v1288 = vadd.f32 %v1114, %v1228
  %v1289 = vadd.f32 %v1114, %v1235
  %v1290 = vadd.f32 %v1114, %v1242
  %v1291 = vadd.f32 %v1114, %v1249
  %v1292 = vadd.f32 %v1114, %v1256
  %v1293 = vadd.f32 %v1114, %v1263
  %v1294 = vadd.f32 %v1114, %v1270
  %1311 = vset.pattern.permute.xlu0 0
  %1312 = vperm.xlu0 %1311, %v1279
  %v1313 = vpop.permute.xlu0 %1312
  %1314 = vset.pattern.permute.xlu0 0
  %1315 = vperm.xlu0 %1314, %v1280
  %v1316 = vpop.permute.xlu0 %1315
  %1317 = vset.pattern.permute.xlu0 0
  %1318 = vperm.xlu0 %1317, %v1281
  %v1319 = vpop.permute.xlu0 %1318
  %1320 = vset.pattern.permute.xlu0 0
  %1321 = vperm.xlu0 %1320, %v1282
  %v1322 = vpop.permute.xlu0 %1321
  %1323 = vset.pattern.permute.xlu0 0
  %1324 = vperm.xlu0 %1323, %v1283
  %v1325 = vpop.permute.xlu0 %1324
  %1326 = vset.pattern.permute.xlu0 0
  %1327 = vperm.xlu0 %1326, %v1284
  %v1328 = vpop.permute.xlu0 %1327
  %1329 = vset.pattern.permute.xlu0 0
  %1330 = vperm.xlu0 %1329, %v1285
  %v1331 = vpop.permute.xlu0 %1330
  %1332 = vset.pattern.permute.xlu0 0
  %1333 = vperm.xlu0 %1332, %v1286
  %v1334 = vpop.permute.xlu0 %1333
  %1335 = vset.pattern.permute.xlu0 0
  %1336 = vperm.xlu0 %1335, %v1287
  %v1337 = vpop.permute.xlu0 %1336
  %1338 = vset.pattern.permute.xlu0 0
  %1339 = vperm.xlu0 %1338, %v1288
  %v1340 = vpop.permute.xlu0 %1339
  %1341 = vset.pattern.permute.xlu0 0
  %1342 = vperm.xlu0 %1341, %v1289
  %v1343 = vpop.permute.xlu0 %1342
  %1344 = vset.pattern.permute.xlu0 0
  %1345 = vperm.xlu0 %1344, %v1290
  %v1346 = vpop.permute.xlu0 %1345
  %1347 = vset.pattern.permute.xlu0 0
  %1348 = vperm.xlu0 %1347, %v1291
  %v1349 = vpop.permute.xlu0 %1348
  %1350 = vset.pattern.permute.xlu0 0
  %1351 = vperm.xlu0 %1350, %v1292
  %v1352 = vpop.permute.xlu0 %1351
  %1353 = vset.pattern.permute.xlu0 0
  %1354 = vperm.xlu0 %1353, %v1293
  %v1355 = vpop.permute.xlu0 %1354
  %1356 = vset.pattern.permute.xlu0 0
  %1357 = vperm.xlu0 %1356, %v1294
  %v1358 = vpop.permute.xlu0 %1357
  %v1359 = vlaneseq
  %v1360 = vshrl.u32 %v1359, 7
  %v1361 = vsub.s32 %v968, %v1360
  %v1362 = vrot.slane %v1313, %v1361
  %v1363 = vlaneseq
  %v1364 = vshrl.u32 %v1363, 7
  %v1365 = vsub.s32 %v968, %v1364
  %v1366 = vrot.slane %v1316, %v1365
  %v1367 = vlaneseq
  %v1368 = vshrl.u32 %v1367, 7
  %v1369 = vsub.s32 %v968, %v1368
  %v1370 = vrot.slane %v1319, %v1369
  %v1371 = vlaneseq
  %v1372 = vshrl.u32 %v1371, 7
  %v1373 = vsub.s32 %v968, %v1372
  %v1374 = vrot.slane %v1322, %v1373
  %v1375 = vlaneseq
  %v1376 = vshrl.u32 %v1375, 7
  %v1377 = vsub.s32 %v968, %v1376
  %v1378 = vrot.slane %v1325, %v1377
  %v1379 = vlaneseq
  %v1380 = vshrl.u32 %v1379, 7
  %v1381 = vsub.s32 %v968, %v1380
  %v1382 = vrot.slane %v1328, %v1381
  %v1383 = vlaneseq
  %v1384 = vshrl.u32 %v1383, 7
  %v1385 = vsub.s32 %v968, %v1384
  %v1386 = vrot.slane %v1331, %v1385
  %v1387 = vlaneseq
  %v1388 = vshrl.u32 %v1387, 7
  %v1389 = vsub.s32 %v968, %v1388
  %v1390 = vrot.slane %v1334, %v1389
  %v1391 = vlaneseq
  %v1392 = vshrl.u32 %v1391, 7
  %v1393 = vsub.s32 %v968, %v1392
  %v1394 = vrot.slane %v1337, %v1393
  %v1395 = vlaneseq
  %v1396 = vshrl.u32 %v1395, 7
  %v1397 = vsub.s32 %v968, %v1396
  %v1398 = vrot.slane %v1340, %v1397
  %v1399 = vlaneseq
  %v1400 = vshrl.u32 %v1399, 7
  %v1401 = vsub.s32 %v968, %v1400
  %v1402 = vrot.slane %v1343, %v1401
  %v1403 = vlaneseq
  %v1404 = vshrl.u32 %v1403, 7
  %v1405 = vsub.s32 %v968, %v1404
  %v1406 = vrot.slane %v1346, %v1405
  %v1407 = vlaneseq
  %v1408 = vshrl.u32 %v1407, 7
  %v1409 = vsub.s32 %v968, %v1408
  %v1410 = vrot.slane %v1349, %v1409
  %v1411 = vlaneseq
  %v1412 = vshrl.u32 %v1411, 7
  %v1413 = vsub.s32 %v968, %v1412
  %v1414 = vrot.slane %v1352, %v1413
  %v1415 = vlaneseq
  %v1416 = vshrl.u32 %v1415, 7
  %v1417 = vsub.s32 %v968, %v1416
  %v1418 = vrot.slane %v1355, %v1417
  %v1419 = vlaneseq
  %v1420 = vshrl.u32 %v1419, 7
  %v1421 = vsub.s32 %v968, %v1420
  %v1422 = vrot.slane %v1358, %v1421
  %v1423 = vsel %vm1075, %v1366, %v1362
  %vm1424 = vcmask 1042434
  %v1425 = vsel %vm1424, %v1370, %v1423
  %vm1426 = vcmask 1043459
  %v1427 = vsel %vm1426, %v1374, %v1425
  %vm1428 = vcmask 1044484
  %v1429 = vsel %vm1428, %v1378, %v1427
  %vm1430 = vcmask 1045509
  %v1431 = vsel %vm1430, %v1382, %v1429
  %vm1432 = vcmask 1046534
  %v1433 = vsel %vm1432, %v1386, %v1431
  %vm1434 = vcmask 1047559
  %v1435 = vsel %vm1434, %v1390, %v1433
  %v1436 = vsel %vm1075, %v1398, %v1394
  %v1437 = vsel %vm1424, %v1402, %v1436
  %v1438 = vsel %vm1426, %v1406, %v1437
  %v1439 = vsel %vm1428, %v1410, %v1438
  %v1440 = vsel %vm1430, %v1414, %v1439
  %v1441 = vsel %vm1432, %v1418, %v1440
  %v1442 = vsel %vm1434, %v1422, %v1441
  %v1445 = vsel %vm963, %v1435, -inf
  %1446 = vmax.xlane.f32.xlu0 %v1445
  %v1447 = vpop.xlane.xlu0 %1446
  %v1448 = vsel %vm963, %v1442, -inf
  %1449 = vmax.xlane.f32.xlu0 %v1448
  %v1450 = vpop.xlane.xlu0 %1449
  %v1453 = vlaneseq
  %v1454 = vshrl.u32 %v1453, 7
  %v1455 = vsub.s32 0, %v1454
  %v1456 = vrot.slane %v1447, %v1455
  %v1457 = vlaneseq
  %v1458 = vshrl.u32 %v1457, 7
  %v1459 = vsub.s32 1, %v1458
  %v1460 = vrot.slane %v1447, %v1459
  %v1461 = vlaneseq
  %v1462 = vshrl.u32 %v1461, 7
  %v1463 = vsub.s32 2, %v1462
  %v1464 = vrot.slane %v1447, %v1463
  %v1465 = vlaneseq
  %v1466 = vshrl.u32 %v1465, 7
  %v1467 = vsub.s32 3, %v1466
  %v1468 = vrot.slane %v1447, %v1467
  %v1469 = vlaneseq
  %v1470 = vshrl.u32 %v1469, 7
  %v1471 = vsub.s32 4, %v1470
  %v1472 = vrot.slane %v1447, %v1471
  %v1473 = vlaneseq
  %v1474 = vshrl.u32 %v1473, 7
  %v1475 = vsub.s32 5, %v1474
  %v1476 = vrot.slane %v1447, %v1475
  %v1477 = vlaneseq
  %v1478 = vshrl.u32 %v1477, 7
  %v1479 = vsub.s32 6, %v1478
  %v1480 = vrot.slane %v1447, %v1479
  %v1481 = vlaneseq
  %v1482 = vshrl.u32 %v1481, 7
  %v1483 = vsub.s32 7, %v1482
  %v1484 = vrot.slane %v1447, %v1483
  %v1485 = vlaneseq
  %v1486 = vshrl.u32 %v1485, 7
  %v1487 = vsub.s32 0, %v1486
  %v1488 = vrot.slane %v1450, %v1487
  %v1489 = vlaneseq
  %v1490 = vshrl.u32 %v1489, 7
  %v1491 = vsub.s32 1, %v1490
  %v1492 = vrot.slane %v1450, %v1491
  %v1493 = vlaneseq
  %v1494 = vshrl.u32 %v1493, 7
  %v1495 = vsub.s32 2, %v1494
  %v1496 = vrot.slane %v1450, %v1495
  %v1497 = vlaneseq
  %v1498 = vshrl.u32 %v1497, 7
  %v1499 = vsub.s32 3, %v1498
  %v1500 = vrot.slane %v1450, %v1499
  %v1501 = vlaneseq
  %v1502 = vshrl.u32 %v1501, 7
  %v1503 = vsub.s32 4, %v1502
  %v1504 = vrot.slane %v1450, %v1503
  %v1505 = vlaneseq
  %v1506 = vshrl.u32 %v1505, 7
  %v1507 = vsub.s32 5, %v1506
  %v1508 = vrot.slane %v1450, %v1507
  %v1509 = vlaneseq
  %v1510 = vshrl.u32 %v1509, 7
  %v1511 = vsub.s32 6, %v1510
  %v1512 = vrot.slane %v1450, %v1511
  %v1513 = vlaneseq
  %v1514 = vshrl.u32 %v1513, 7
  %v1515 = vsub.s32 7, %v1514
  %v1516 = vrot.slane %v1450, %v1515
  %vm1533 = vcmp.ge.f32.partialorder %v1279, %v1456
  %vm1534 = vcmp.ge.f32.partialorder %v1280, %v1460
  %vm1535 = vcmp.ge.f32.partialorder %v1281, %v1464
  %vm1536 = vcmp.ge.f32.partialorder %v1282, %v1468
  %vm1537 = vcmp.ge.f32.partialorder %v1283, %v1472
  %vm1538 = vcmp.ge.f32.partialorder %v1284, %v1476
  %vm1539 = vcmp.ge.f32.partialorder %v1285, %v1480
  %vm1540 = vcmp.ge.f32.partialorder %v1286, %v1484
  %vm1541 = vcmp.ge.f32.partialorder %v1287, %v1488
  %vm1542 = vcmp.ge.f32.partialorder %v1288, %v1492
  %vm1543 = vcmp.ge.f32.partialorder %v1289, %v1496
  %vm1544 = vcmp.ge.f32.partialorder %v1290, %v1500
  %vm1545 = vcmp.ge.f32.partialorder %v1291, %v1504
  %vm1546 = vcmp.ge.f32.partialorder %v1292, %v1508
  %vm1547 = vcmp.ge.f32.partialorder %v1293, %v1512
  %vm1548 = vcmp.ge.f32.partialorder %v1294, %v1516
  %1550 = vbcast.lane.b32.xlu0 %v968, 256
  %v1551 = vpop.permute.xlu0 %1550
  %v1552 = vsel %vm1533, %v1551, 1073741824
  %v1553 = vsel %vm1534, %v1551, 1073741824
  %v1554 = vsel %vm1535, %v1551, 1073741824
  %v1555 = vsel %vm1536, %v1551, 1073741824
  %v1556 = vsel %vm1537, %v1551, 1073741824
  %v1557 = vsel %vm1538, %v1551, 1073741824
  %v1558 = vsel %vm1539, %v1551, 1073741824
  %v1559 = vsel %vm1540, %v1551, 1073741824
  %v1560 = vsel %vm1541, %v1551, 1073741824
  %v1561 = vsel %vm1542, %v1551, 1073741824
  %v1562 = vsel %vm1543, %v1551, 1073741824
  %v1563 = vsel %vm1544, %v1551, 1073741824
  %v1564 = vsel %vm1545, %v1551, 1073741824
  %v1565 = vsel %vm1546, %v1551, 1073741824
  %v1566 = vsel %vm1547, %v1551, 1073741824
  %v1567 = vsel %vm1548, %v1551, 1073741824
  %1568 = vset.pattern.permute.xlu0 0
  %1569 = vperm.xlu0 %1568, %v1552
  %v1570 = vpop.permute.xlu0 %1569
  %1571 = vset.pattern.permute.xlu0 0
  %1572 = vperm.xlu0 %1571, %v1553
  %v1573 = vpop.permute.xlu0 %1572
  %1574 = vset.pattern.permute.xlu0 0
  %1575 = vperm.xlu0 %1574, %v1554
  %v1576 = vpop.permute.xlu0 %1575
  %1577 = vset.pattern.permute.xlu0 0
  %1578 = vperm.xlu0 %1577, %v1555
  %v1579 = vpop.permute.xlu0 %1578
  %1580 = vset.pattern.permute.xlu0 0
  %1581 = vperm.xlu0 %1580, %v1556
  %v1582 = vpop.permute.xlu0 %1581
  %1583 = vset.pattern.permute.xlu0 0
  %1584 = vperm.xlu0 %1583, %v1557
  %v1585 = vpop.permute.xlu0 %1584
  %1586 = vset.pattern.permute.xlu0 0
  %1587 = vperm.xlu0 %1586, %v1558
  %v1588 = vpop.permute.xlu0 %1587
  %1589 = vset.pattern.permute.xlu0 0
  %1590 = vperm.xlu0 %1589, %v1559
  %v1591 = vpop.permute.xlu0 %1590
  %1592 = vset.pattern.permute.xlu0 0
  %1593 = vperm.xlu0 %1592, %v1560
  %v1594 = vpop.permute.xlu0 %1593
  %1595 = vset.pattern.permute.xlu0 0
  %1596 = vperm.xlu0 %1595, %v1561
  %v1597 = vpop.permute.xlu0 %1596
  %1598 = vset.pattern.permute.xlu0 0
  %1599 = vperm.xlu0 %1598, %v1562
  %v1600 = vpop.permute.xlu0 %1599
  %1601 = vset.pattern.permute.xlu0 0
  %1602 = vperm.xlu0 %1601, %v1563
  %v1603 = vpop.permute.xlu0 %1602
  %1604 = vset.pattern.permute.xlu0 0
  %1605 = vperm.xlu0 %1604, %v1564
  %v1606 = vpop.permute.xlu0 %1605
  %1607 = vset.pattern.permute.xlu0 0
  %1608 = vperm.xlu0 %1607, %v1565
  %v1609 = vpop.permute.xlu0 %1608
  %1610 = vset.pattern.permute.xlu0 0
  %1611 = vperm.xlu0 %1610, %v1566
  %v1612 = vpop.permute.xlu0 %1611
  %1613 = vset.pattern.permute.xlu0 0
  %1614 = vperm.xlu0 %1613, %v1567
  %v1615 = vpop.permute.xlu0 %1614
  %v1616 = vlaneseq
  %v1617 = vshrl.u32 %v1616, 7
  %v1618 = vsub.s32 %v968, %v1617
  %v1619 = vrot.slane %v1570, %v1618
  %v1620 = vlaneseq
  %v1621 = vshrl.u32 %v1620, 7
  %v1622 = vsub.s32 %v968, %v1621
  %v1623 = vrot.slane %v1573, %v1622
  %v1624 = vlaneseq
  %v1625 = vshrl.u32 %v1624, 7
  %v1626 = vsub.s32 %v968, %v1625
  %v1627 = vrot.slane %v1576, %v1626
  %v1628 = vlaneseq
  %v1629 = vshrl.u32 %v1628, 7
  %v1630 = vsub.s32 %v968, %v1629
  %v1631 = vrot.slane %v1579, %v1630
  %v1632 = vlaneseq
  %v1633 = vshrl.u32 %v1632, 7
  %v1634 = vsub.s32 %v968, %v1633
  %v1635 = vrot.slane %v1582, %v1634
  %v1636 = vlaneseq
  %v1637 = vshrl.u32 %v1636, 7
  %v1638 = vsub.s32 %v968, %v1637
  %v1639 = vrot.slane %v1585, %v1638
  %v1640 = vlaneseq
  %v1641 = vshrl.u32 %v1640, 7
  %v1642 = vsub.s32 %v968, %v1641
  %v1643 = vrot.slane %v1588, %v1642
  %v1644 = vlaneseq
  %v1645 = vshrl.u32 %v1644, 7
  %v1646 = vsub.s32 %v968, %v1645
  %v1647 = vrot.slane %v1591, %v1646
  %v1648 = vlaneseq
  %v1649 = vshrl.u32 %v1648, 7
  %v1650 = vsub.s32 %v968, %v1649
  %v1651 = vrot.slane %v1594, %v1650
  %v1652 = vlaneseq
  %v1653 = vshrl.u32 %v1652, 7
  %v1654 = vsub.s32 %v968, %v1653
  %v1655 = vrot.slane %v1597, %v1654
  %v1656 = vlaneseq
  %v1657 = vshrl.u32 %v1656, 7
  %v1658 = vsub.s32 %v968, %v1657
  %v1659 = vrot.slane %v1600, %v1658
  %v1660 = vlaneseq
  %v1661 = vshrl.u32 %v1660, 7
  %v1662 = vsub.s32 %v968, %v1661
  %v1663 = vrot.slane %v1603, %v1662
  %v1664 = vlaneseq
  %v1665 = vshrl.u32 %v1664, 7
  %v1666 = vsub.s32 %v968, %v1665
  %v1667 = vrot.slane %v1606, %v1666
  %v1668 = vlaneseq
  %v1669 = vshrl.u32 %v1668, 7
  %v1670 = vsub.s32 %v968, %v1669
  %v1671 = vrot.slane %v1609, %v1670
  %v1672 = vlaneseq
  %v1673 = vshrl.u32 %v1672, 7
  %v1674 = vsub.s32 %v968, %v1673
  %v1675 = vrot.slane %v1612, %v1674
  %v1676 = vlaneseq
  %v1677 = vshrl.u32 %v1676, 7
  %v1678 = vsub.s32 %v968, %v1677
  %v1679 = vrot.slane %v1615, %v1678
  %v1680 = vsel %vm1075, %v1623, %v1619
  %v1681 = vsel %vm1424, %v1627, %v1680
  %v1682 = vsel %vm1426, %v1631, %v1681
  %v1683 = vsel %vm1428, %v1635, %v1682
  %v1684 = vsel %vm1430, %v1639, %v1683
  %v1685 = vsel %vm1432, %v1643, %v1684
  %v1686 = vsel %vm1434, %v1647, %v1685
  %v1687 = vsel %vm1075, %v1655, %v1651
  %v1688 = vsel %vm1424, %v1659, %v1687
  %v1689 = vsel %vm1426, %v1663, %v1688
  %v1690 = vsel %vm1428, %v1667, %v1689
  %v1691 = vsel %vm1430, %v1671, %v1690
  %v1692 = vsel %vm1432, %v1675, %v1691
  %v1693 = vsel %vm1434, %v1679, %v1692
  %v1694 = vsel %vm963, %v1686, 2147483647
  %v1695 = vand.u32 %v1694, 65535
  %v1696 = vshra.s32 %v1694, 16
  %v1697 = vcvt.s32.f32 %v1695
  %v1698 = vcvt.s32.f32 %v1696
  %1699 = vmin.xlane.f32.xlu0 %v1698
  %v1700 = vpop.xlane.xlu0 %1699
  %vm1701 = vcmp.eq.f32.partialorder %v1698, %v1700
  %v1702 = vsel %vm1701, %v1697, inf
  %1703 = vmin.xlane.f32.xlu0 %v1702
  %v1704 = vpop.xlane.xlu0 %1703
  %v1705 = vcvt.f32.s32 %v1704
  %v1706 = vcvt.f32.s32 %v1700
  %v1707 = vshll.u32 %v1706, 16
  %v1708 = vadd.s32 %v1707, %v1705
  %v1709 = vsel %vm963, %v1693, 2147483647
  %v1710 = vand.u32 %v1709, 65535
  %v1711 = vshra.s32 %v1709, 16
  %v1712 = vcvt.s32.f32 %v1710
  %v1713 = vcvt.s32.f32 %v1711
  %1714 = vmin.xlane.f32.xlu0 %v1713
  %v1715 = vpop.xlane.xlu0 %1714
  %vm1716 = vcmp.eq.f32.partialorder %v1713, %v1715
  %v1717 = vsel %vm1716, %v1712, inf
  %1718 = vmin.xlane.f32.xlu0 %v1717
  %v1719 = vpop.xlane.xlu0 %1718
  %v1720 = vcvt.f32.s32 %v1719
  %v1721 = vcvt.f32.s32 %v1715
  %v1722 = vshll.u32 %v1721, 16
  %v1723 = vadd.s32 %v1722, %v1720
  %v1724 = vadd.f32 %v1447, %v1183
  %v1725 = vadd.f32 %v1450, %v1190
  %s1726 = scalar_lea.vmem %s2, 6
  %v1727 = vld [vmem:[%s1726] sm:$0x3]
  %v1730 = vunpack.c.l.s4 1966171168
  %v1731 = vunpack.c.0.s8 %v1730
  %v1732 = vlaneseq
  %v1733 = vshrl.u32 %v1732, 7
  %v1734 = vsub.s32 %v1731, %v1733
  %v1735 = vrot.slane %v1213, %v1734
  %v1736 = vcombine.high %v1735, %v1735
  %v1738 = vunpack.c.l.s4 1966171168
  %v1739 = vunpack.c.0.s8 %v1738
  %v1740 = vlaneseq
  %v1741 = vshrl.u32 %v1740, 7
  %v1742 = vsub.s32 %v1739, %v1741
  %v1743 = vrot.slane %v1735, %v1742
  %v1745 = vunpack.c.l.s4 1966171168
  %v1746 = vunpack.c.0.s8 %v1745
  %v1747 = vlaneseq
  %v1748 = vshrl.u32 %v1747, 7
  %v1749 = vsub.s32 %v1746, %v1748
  %v1750 = vrot.slane %v1736, %v1749
  %v1751 = vlaneseq
  %v1752 = vshrl.u32 %v1751, 7
  %v1753 = vsub.s32 0, %v1752
  %v1754 = vrot.slane %v1743, %v1753
  %v1755 = vlaneseq
  %v1756 = vshrl.u32 %v1755, 7
  %v1757 = vsub.s32 0, %v1756
  %v1758 = vrot.slane %v1750, %v1757
  %v1761 = vadd.f32 %v1754, %v966
  %v1762 = vadd.f32 %v1758, %v966
  %v1763 = vsel %vm963, %v1761, -inf
  %1764 = vmax.xlane.f32.xlu0 %v1763
  %v1765 = vpop.xlane.xlu0 %1764
  %v1766 = vsel %vm963, %v1762, -inf
  %1767 = vmax.xlane.f32.xlu0 %v1766
  %v1768 = vpop.xlane.xlu0 %1767
  %v1769 = vsub.f32 %v1761, %v1765
  %v1770 = vsub.f32 %v1762, %v1768
  %v1771 = vmul.f32 %v1769, 1.442695
  %v1772 = vpow.pop %v1771
  %v1773 = vmul.f32 %v1770, 1.442695
  %v1774 = vpow.pop %v1773
  %v1775 = vsel %vm963, %v1772, 0.0
  %1776 = vadd.xlane.f32.xlu0 %v1775
  %v1777 = vpop.xlane.xlu0 %1776
  %v1778 = vsel %vm963, %v1774, 0.0
  %1779 = vadd.xlane.f32.xlu0 %v1778
  %v1780 = vpop.xlane.xlu0 %1779
  %v1781 = vlog2.pop %v1777
  %v1782 = vmul.f32 %v1781, 0.6931472
  %v1783 = vlog2.pop %v1780
  %v1784 = vmul.f32 %v1783, 0.6931472
  %v1785 = vadd.f32 %v1765, %v1782
  %v1786 = vadd.f32 %v1768, %v1784
  %vm1787 = vcmp.gt.f32.partialorder %v1727, 0.5
  %v1788 = vlaneseq
  %v1789 = vshrl.u32 %v1788, 7
  %v1790 = vsub.s32 6, %v1789
  %v1791 = vrot.slane %v957, %v1790
  %1793 = vbcast.lane.b32.xlu0 %v1791, 256
  %v1794 = vpop.permute.xlu0 %1793
  %v1795 = vlaneseq
  %v1796 = vshrl.u32 %v1795, 7
  %v1797 = vsub.s32 7, %v1796
  %v1798 = vrot.slane %v957, %v1797
  %1800 = vbcast.lane.b32.xlu0 %v1798, 256
  %v1801 = vpop.permute.xlu0 %1800
  %v1804 = vadd.f32 %v1785, %v1794
  %v1805 = vadd.f32 %v1786, %v1801
  %1808 = vset.pattern.permute.xlu0 0
  %1809 = vperm.xlu0 %1808, %v1804
  %v1810 = vpop.permute.xlu0 %1809
  %1811 = vset.pattern.permute.xlu0 0
  %1812 = vperm.xlu0 %1811, %v1805
  %v1813 = vpop.permute.xlu0 %1812
  %v1814 = vlaneseq
  %v1815 = vshrl.u32 %v1814, 7
  %v1816 = vsub.s32 %v968, %v1815
  %v1817 = vrot.slane %v1810, %v1816
  %v1818 = vlaneseq
  %v1819 = vshrl.u32 %v1818, 7
  %v1820 = vsub.s32 %v968, %v1819
  %v1821 = vrot.slane %v1813, %v1820
  %v1822 = vsel %vm1075, %v1821, %v1817
  %v1824 = vsel %vm1787, %v1822, %v1213
  %v1825 = vadd.f32 %v1724, %v1221
  %v1826 = vadd.f32 %v1724, %v1228
  %v1827 = vadd.f32 %v1724, %v1235
  %v1828 = vadd.f32 %v1724, %v1242
  %v1829 = vadd.f32 %v1724, %v1249
  %v1830 = vadd.f32 %v1724, %v1256
  %v1831 = vadd.f32 %v1724, %v1263
  %v1832 = vadd.f32 %v1724, %v1270
  %v1833 = vadd.f32 %v1725, %v1221
  %v1834 = vadd.f32 %v1725, %v1228
  %v1835 = vadd.f32 %v1725, %v1235
  %v1836 = vadd.f32 %v1725, %v1242
  %v1837 = vadd.f32 %v1725, %v1249
  %v1838 = vadd.f32 %v1725, %v1256
  %v1839 = vadd.f32 %v1725, %v1263
  %v1840 = vadd.f32 %v1725, %v1270
  %1857 = vset.pattern.permute.xlu0 0
  %1858 = vperm.xlu0 %1857, %v1825
  %v1859 = vpop.permute.xlu0 %1858
  %1860 = vset.pattern.permute.xlu0 0
  %1861 = vperm.xlu0 %1860, %v1826
  %v1862 = vpop.permute.xlu0 %1861
  %1863 = vset.pattern.permute.xlu0 0
  %1864 = vperm.xlu0 %1863, %v1827
  %v1865 = vpop.permute.xlu0 %1864
  %1866 = vset.pattern.permute.xlu0 0
  %1867 = vperm.xlu0 %1866, %v1828
  %v1868 = vpop.permute.xlu0 %1867
  %1869 = vset.pattern.permute.xlu0 0
  %1870 = vperm.xlu0 %1869, %v1829
  %v1871 = vpop.permute.xlu0 %1870
  %1872 = vset.pattern.permute.xlu0 0
  %1873 = vperm.xlu0 %1872, %v1830
  %v1874 = vpop.permute.xlu0 %1873
  %1875 = vset.pattern.permute.xlu0 0
  %1876 = vperm.xlu0 %1875, %v1831
  %v1877 = vpop.permute.xlu0 %1876
  %1878 = vset.pattern.permute.xlu0 0
  %1879 = vperm.xlu0 %1878, %v1832
  %v1880 = vpop.permute.xlu0 %1879
  %1881 = vset.pattern.permute.xlu0 0
  %1882 = vperm.xlu0 %1881, %v1833
  %v1883 = vpop.permute.xlu0 %1882
  %1884 = vset.pattern.permute.xlu0 0
  %1885 = vperm.xlu0 %1884, %v1834
  %v1886 = vpop.permute.xlu0 %1885
  %1887 = vset.pattern.permute.xlu0 0
  %1888 = vperm.xlu0 %1887, %v1835
  %v1889 = vpop.permute.xlu0 %1888
  %1890 = vset.pattern.permute.xlu0 0
  %1891 = vperm.xlu0 %1890, %v1836
  %v1892 = vpop.permute.xlu0 %1891
  %1893 = vset.pattern.permute.xlu0 0
  %1894 = vperm.xlu0 %1893, %v1837
  %v1895 = vpop.permute.xlu0 %1894
  %1896 = vset.pattern.permute.xlu0 0
  %1897 = vperm.xlu0 %1896, %v1838
  %v1898 = vpop.permute.xlu0 %1897
  %1899 = vset.pattern.permute.xlu0 0
  %1900 = vperm.xlu0 %1899, %v1839
  %v1901 = vpop.permute.xlu0 %1900
  %1902 = vset.pattern.permute.xlu0 0
  %1903 = vperm.xlu0 %1902, %v1840
  %v1904 = vpop.permute.xlu0 %1903
  %v1905 = vlaneseq
  %v1906 = vshrl.u32 %v1905, 7
  %v1907 = vsub.s32 %v968, %v1906
  %v1908 = vrot.slane %v1859, %v1907
  %v1909 = vlaneseq
  %v1910 = vshrl.u32 %v1909, 7
  %v1911 = vsub.s32 %v968, %v1910
  %v1912 = vrot.slane %v1862, %v1911
  %v1913 = vlaneseq
  %v1914 = vshrl.u32 %v1913, 7
  %v1915 = vsub.s32 %v968, %v1914
  %v1916 = vrot.slane %v1865, %v1915
  %v1917 = vlaneseq
  %v1918 = vshrl.u32 %v1917, 7
  %v1919 = vsub.s32 %v968, %v1918
  %v1920 = vrot.slane %v1868, %v1919
  %v1921 = vlaneseq
  %v1922 = vshrl.u32 %v1921, 7
  %v1923 = vsub.s32 %v968, %v1922
  %v1924 = vrot.slane %v1871, %v1923
  %v1925 = vlaneseq
  %v1926 = vshrl.u32 %v1925, 7
  %v1927 = vsub.s32 %v968, %v1926
  %v1928 = vrot.slane %v1874, %v1927
  %v1929 = vlaneseq
  %v1930 = vshrl.u32 %v1929, 7
  %v1931 = vsub.s32 %v968, %v1930
  %v1932 = vrot.slane %v1877, %v1931
  %v1933 = vlaneseq
  %v1934 = vshrl.u32 %v1933, 7
  %v1935 = vsub.s32 %v968, %v1934
  %v1936 = vrot.slane %v1880, %v1935
  %v1937 = vlaneseq
  %v1938 = vshrl.u32 %v1937, 7
  %v1939 = vsub.s32 %v968, %v1938
  %v1940 = vrot.slane %v1883, %v1939
  %v1941 = vlaneseq
  %v1942 = vshrl.u32 %v1941, 7
  %v1943 = vsub.s32 %v968, %v1942
  %v1944 = vrot.slane %v1886, %v1943
  %v1945 = vlaneseq
  %v1946 = vshrl.u32 %v1945, 7
  %v1947 = vsub.s32 %v968, %v1946
  %v1948 = vrot.slane %v1889, %v1947
  %v1949 = vlaneseq
  %v1950 = vshrl.u32 %v1949, 7
  %v1951 = vsub.s32 %v968, %v1950
  %v1952 = vrot.slane %v1892, %v1951
  %v1953 = vlaneseq
  %v1954 = vshrl.u32 %v1953, 7
  %v1955 = vsub.s32 %v968, %v1954
  %v1956 = vrot.slane %v1895, %v1955
  %v1957 = vlaneseq
  %v1958 = vshrl.u32 %v1957, 7
  %v1959 = vsub.s32 %v968, %v1958
  %v1960 = vrot.slane %v1898, %v1959
  %v1961 = vlaneseq
  %v1962 = vshrl.u32 %v1961, 7
  %v1963 = vsub.s32 %v968, %v1962
  %v1964 = vrot.slane %v1901, %v1963
  %v1965 = vlaneseq
  %v1966 = vshrl.u32 %v1965, 7
  %v1967 = vsub.s32 %v968, %v1966
  %v1968 = vrot.slane %v1904, %v1967
  %v1969 = vsel %vm1075, %v1912, %v1908
  %v1970 = vsel %vm1424, %v1916, %v1969
  %v1971 = vsel %vm1426, %v1920, %v1970
  %v1972 = vsel %vm1428, %v1924, %v1971
  %v1973 = vsel %vm1430, %v1928, %v1972
  %v1974 = vsel %vm1432, %v1932, %v1973
  %v1975 = vsel %vm1434, %v1936, %v1974
  %v1976 = vsel %vm1075, %v1944, %v1940
  %v1977 = vsel %vm1424, %v1948, %v1976
  %v1978 = vsel %vm1426, %v1952, %v1977
  %v1979 = vsel %vm1428, %v1956, %v1978
  %v1980 = vsel %vm1430, %v1960, %v1979
  %v1981 = vsel %vm1432, %v1964, %v1980
  %v1982 = vsel %vm1434, %v1968, %v1981
  %v1985 = vsel %vm963, %v1975, -inf
  %1986 = vmax.xlane.f32.xlu0 %v1985
  %v1987 = vpop.xlane.xlu0 %1986
  %v1988 = vsel %vm963, %v1982, -inf
  %1989 = vmax.xlane.f32.xlu0 %v1988
  %v1990 = vpop.xlane.xlu0 %1989
  %v1993 = vlaneseq
  %v1994 = vshrl.u32 %v1993, 7
  %v1995 = vsub.s32 0, %v1994
  %v1996 = vrot.slane %v1987, %v1995
  %v1997 = vlaneseq
  %v1998 = vshrl.u32 %v1997, 7
  %v1999 = vsub.s32 1, %v1998
  %v2000 = vrot.slane %v1987, %v1999
  %v2001 = vlaneseq
  %v2002 = vshrl.u32 %v2001, 7
  %v2003 = vsub.s32 2, %v2002
  %v2004 = vrot.slane %v1987, %v2003
  %v2005 = vlaneseq
  %v2006 = vshrl.u32 %v2005, 7
  %v2007 = vsub.s32 3, %v2006
  %v2008 = vrot.slane %v1987, %v2007
  %v2009 = vlaneseq
  %v2010 = vshrl.u32 %v2009, 7
  %v2011 = vsub.s32 4, %v2010
  %v2012 = vrot.slane %v1987, %v2011
  %v2013 = vlaneseq
  %v2014 = vshrl.u32 %v2013, 7
  %v2015 = vsub.s32 5, %v2014
  %v2016 = vrot.slane %v1987, %v2015
  %v2017 = vlaneseq
  %v2018 = vshrl.u32 %v2017, 7
  %v2019 = vsub.s32 6, %v2018
  %v2020 = vrot.slane %v1987, %v2019
  %v2021 = vlaneseq
  %v2022 = vshrl.u32 %v2021, 7
  %v2023 = vsub.s32 7, %v2022
  %v2024 = vrot.slane %v1987, %v2023
  %v2025 = vlaneseq
  %v2026 = vshrl.u32 %v2025, 7
  %v2027 = vsub.s32 0, %v2026
  %v2028 = vrot.slane %v1990, %v2027
  %v2029 = vlaneseq
  %v2030 = vshrl.u32 %v2029, 7
  %v2031 = vsub.s32 1, %v2030
  %v2032 = vrot.slane %v1990, %v2031
  %v2033 = vlaneseq
  %v2034 = vshrl.u32 %v2033, 7
  %v2035 = vsub.s32 2, %v2034
  %v2036 = vrot.slane %v1990, %v2035
  %v2037 = vlaneseq
  %v2038 = vshrl.u32 %v2037, 7
  %v2039 = vsub.s32 3, %v2038
  %v2040 = vrot.slane %v1990, %v2039
  %v2041 = vlaneseq
  %v2042 = vshrl.u32 %v2041, 7
  %v2043 = vsub.s32 4, %v2042
  %v2044 = vrot.slane %v1990, %v2043
  %v2045 = vlaneseq
  %v2046 = vshrl.u32 %v2045, 7
  %v2047 = vsub.s32 5, %v2046
  %v2048 = vrot.slane %v1990, %v2047
  %v2049 = vlaneseq
  %v2050 = vshrl.u32 %v2049, 7
  %v2051 = vsub.s32 6, %v2050
  %v2052 = vrot.slane %v1990, %v2051
  %v2053 = vlaneseq
  %v2054 = vshrl.u32 %v2053, 7
  %v2055 = vsub.s32 7, %v2054
  %v2056 = vrot.slane %v1990, %v2055
  %vm2073 = vcmp.ge.f32.partialorder %v1825, %v1996
  %vm2074 = vcmp.ge.f32.partialorder %v1826, %v2000
  %vm2075 = vcmp.ge.f32.partialorder %v1827, %v2004
  %vm2076 = vcmp.ge.f32.partialorder %v1828, %v2008
  %vm2077 = vcmp.ge.f32.partialorder %v1829, %v2012
  %vm2078 = vcmp.ge.f32.partialorder %v1830, %v2016
  %vm2079 = vcmp.ge.f32.partialorder %v1831, %v2020
  %vm2080 = vcmp.ge.f32.partialorder %v1832, %v2024
  %vm2081 = vcmp.ge.f32.partialorder %v1833, %v2028
  %vm2082 = vcmp.ge.f32.partialorder %v1834, %v2032
  %vm2083 = vcmp.ge.f32.partialorder %v1835, %v2036
  %vm2084 = vcmp.ge.f32.partialorder %v1836, %v2040
  %vm2085 = vcmp.ge.f32.partialorder %v1837, %v2044
  %vm2086 = vcmp.ge.f32.partialorder %v1838, %v2048
  %vm2087 = vcmp.ge.f32.partialorder %v1839, %v2052
  %vm2088 = vcmp.ge.f32.partialorder %v1840, %v2056
  %v2089 = vsel %vm2073, %v1551, 1073741824
  %v2090 = vsel %vm2074, %v1551, 1073741824
  %v2091 = vsel %vm2075, %v1551, 1073741824
  %v2092 = vsel %vm2076, %v1551, 1073741824
  %v2093 = vsel %vm2077, %v1551, 1073741824
  %v2094 = vsel %vm2078, %v1551, 1073741824
  %v2095 = vsel %vm2079, %v1551, 1073741824
  %v2096 = vsel %vm2080, %v1551, 1073741824
  %v2097 = vsel %vm2081, %v1551, 1073741824
  %v2098 = vsel %vm2082, %v1551, 1073741824
  %v2099 = vsel %vm2083, %v1551, 1073741824
  %v2100 = vsel %vm2084, %v1551, 1073741824
  %v2101 = vsel %vm2085, %v1551, 1073741824
  %v2102 = vsel %vm2086, %v1551, 1073741824
  %v2103 = vsel %vm2087, %v1551, 1073741824
  %v2104 = vsel %vm2088, %v1551, 1073741824
  %2105 = vset.pattern.permute.xlu0 0
  %2106 = vperm.xlu0 %2105, %v2089
  %v2107 = vpop.permute.xlu0 %2106
  %2108 = vset.pattern.permute.xlu0 0
  %2109 = vperm.xlu0 %2108, %v2090
  %v2110 = vpop.permute.xlu0 %2109
  %2111 = vset.pattern.permute.xlu0 0
  %2112 = vperm.xlu0 %2111, %v2091
  %v2113 = vpop.permute.xlu0 %2112
  %2114 = vset.pattern.permute.xlu0 0
  %2115 = vperm.xlu0 %2114, %v2092
  %v2116 = vpop.permute.xlu0 %2115
  %2117 = vset.pattern.permute.xlu0 0
  %2118 = vperm.xlu0 %2117, %v2093
  %v2119 = vpop.permute.xlu0 %2118
  %2120 = vset.pattern.permute.xlu0 0
  %2121 = vperm.xlu0 %2120, %v2094
  %v2122 = vpop.permute.xlu0 %2121
  %2123 = vset.pattern.permute.xlu0 0
  %2124 = vperm.xlu0 %2123, %v2095
  %v2125 = vpop.permute.xlu0 %2124
  %2126 = vset.pattern.permute.xlu0 0
  %2127 = vperm.xlu0 %2126, %v2096
  %v2128 = vpop.permute.xlu0 %2127
  %2129 = vset.pattern.permute.xlu0 0
  %2130 = vperm.xlu0 %2129, %v2097
  %v2131 = vpop.permute.xlu0 %2130
  %2132 = vset.pattern.permute.xlu0 0
  %2133 = vperm.xlu0 %2132, %v2098
  %v2134 = vpop.permute.xlu0 %2133
  %2135 = vset.pattern.permute.xlu0 0
  %2136 = vperm.xlu0 %2135, %v2099
  %v2137 = vpop.permute.xlu0 %2136
  %2138 = vset.pattern.permute.xlu0 0
  %2139 = vperm.xlu0 %2138, %v2100
  %v2140 = vpop.permute.xlu0 %2139
  %2141 = vset.pattern.permute.xlu0 0
  %2142 = vperm.xlu0 %2141, %v2101
  %v2143 = vpop.permute.xlu0 %2142
  %2144 = vset.pattern.permute.xlu0 0
  %2145 = vperm.xlu0 %2144, %v2102
  %v2146 = vpop.permute.xlu0 %2145
  %2147 = vset.pattern.permute.xlu0 0
  %2148 = vperm.xlu0 %2147, %v2103
  %v2149 = vpop.permute.xlu0 %2148
  %2150 = vset.pattern.permute.xlu0 0
  %2151 = vperm.xlu0 %2150, %v2104
  %v2152 = vpop.permute.xlu0 %2151
  %v2153 = vlaneseq
  %v2154 = vshrl.u32 %v2153, 7
  %v2155 = vsub.s32 %v968, %v2154
  %v2156 = vrot.slane %v2107, %v2155
  %v2157 = vlaneseq
  %v2158 = vshrl.u32 %v2157, 7
  %v2159 = vsub.s32 %v968, %v2158
  %v2160 = vrot.slane %v2110, %v2159
  %v2161 = vlaneseq
  %v2162 = vshrl.u32 %v2161, 7
  %v2163 = vsub.s32 %v968, %v2162
  %v2164 = vrot.slane %v2113, %v2163
  %v2165 = vlaneseq
  %v2166 = vshrl.u32 %v2165, 7
  %v2167 = vsub.s32 %v968, %v2166
  %v2168 = vrot.slane %v2116, %v2167
  %v2169 = vlaneseq
  %v2170 = vshrl.u32 %v2169, 7
  %v2171 = vsub.s32 %v968, %v2170
  %v2172 = vrot.slane %v2119, %v2171
  %v2173 = vlaneseq
  %v2174 = vshrl.u32 %v2173, 7
  %v2175 = vsub.s32 %v968, %v2174
  %v2176 = vrot.slane %v2122, %v2175
  %v2177 = vlaneseq
  %v2178 = vshrl.u32 %v2177, 7
  %v2179 = vsub.s32 %v968, %v2178
  %v2180 = vrot.slane %v2125, %v2179
  %v2181 = vlaneseq
  %v2182 = vshrl.u32 %v2181, 7
  %v2183 = vsub.s32 %v968, %v2182
  %v2184 = vrot.slane %v2128, %v2183
  %v2185 = vlaneseq
  %v2186 = vshrl.u32 %v2185, 7
  %v2187 = vsub.s32 %v968, %v2186
  %v2188 = vrot.slane %v2131, %v2187
  %v2189 = vlaneseq
  %v2190 = vshrl.u32 %v2189, 7
  %v2191 = vsub.s32 %v968, %v2190
  %v2192 = vrot.slane %v2134, %v2191
  %v2193 = vlaneseq
  %v2194 = vshrl.u32 %v2193, 7
  %v2195 = vsub.s32 %v968, %v2194
  %v2196 = vrot.slane %v2137, %v2195
  %v2197 = vlaneseq
  %v2198 = vshrl.u32 %v2197, 7
  %v2199 = vsub.s32 %v968, %v2198
  %v2200 = vrot.slane %v2140, %v2199
  %v2201 = vlaneseq
  %v2202 = vshrl.u32 %v2201, 7
  %v2203 = vsub.s32 %v968, %v2202
  %v2204 = vrot.slane %v2143, %v2203
  %v2205 = vlaneseq
  %v2206 = vshrl.u32 %v2205, 7
  %v2207 = vsub.s32 %v968, %v2206
  %v2208 = vrot.slane %v2146, %v2207
  %v2209 = vlaneseq
  %v2210 = vshrl.u32 %v2209, 7
  %v2211 = vsub.s32 %v968, %v2210
  %v2212 = vrot.slane %v2149, %v2211
  %v2213 = vlaneseq
  %v2214 = vshrl.u32 %v2213, 7
  %v2215 = vsub.s32 %v968, %v2214
  %v2216 = vrot.slane %v2152, %v2215
  %v2217 = vsel %vm1075, %v2160, %v2156
  %v2218 = vsel %vm1424, %v2164, %v2217
  %v2219 = vsel %vm1426, %v2168, %v2218
  %v2220 = vsel %vm1428, %v2172, %v2219
  %v2221 = vsel %vm1430, %v2176, %v2220
  %v2222 = vsel %vm1432, %v2180, %v2221
  %v2223 = vsel %vm1434, %v2184, %v2222
  %v2224 = vsel %vm1075, %v2192, %v2188
  %v2225 = vsel %vm1424, %v2196, %v2224
  %v2226 = vsel %vm1426, %v2200, %v2225
  %v2227 = vsel %vm1428, %v2204, %v2226
  %v2228 = vsel %vm1430, %v2208, %v2227
  %v2229 = vsel %vm1432, %v2212, %v2228
  %v2230 = vsel %vm1434, %v2216, %v2229
  %v2231 = vsel %vm963, %v2223, 2147483647
  %v2232 = vand.u32 %v2231, 65535
  %v2233 = vshra.s32 %v2231, 16
  %v2234 = vcvt.s32.f32 %v2232
  %v2235 = vcvt.s32.f32 %v2233
  %2236 = vmin.xlane.f32.xlu0 %v2235
  %v2237 = vpop.xlane.xlu0 %2236
  %vm2238 = vcmp.eq.f32.partialorder %v2235, %v2237
  %v2239 = vsel %vm2238, %v2234, inf
  %2240 = vmin.xlane.f32.xlu0 %v2239
  %v2241 = vpop.xlane.xlu0 %2240
  %v2242 = vcvt.f32.s32 %v2241
  %v2243 = vcvt.f32.s32 %v2237
  %v2244 = vshll.u32 %v2243, 16
  %v2245 = vadd.s32 %v2244, %v2242
  %v2246 = vsel %vm963, %v2230, 2147483647
  %v2247 = vand.u32 %v2246, 65535
  %v2248 = vshra.s32 %v2246, 16
  %v2249 = vcvt.s32.f32 %v2247
  %v2250 = vcvt.s32.f32 %v2248
  %2251 = vmin.xlane.f32.xlu0 %v2250
  %v2252 = vpop.xlane.xlu0 %2251
  %vm2253 = vcmp.eq.f32.partialorder %v2250, %v2252
  %v2254 = vsel %vm2253, %v2249, inf
  %2255 = vmin.xlane.f32.xlu0 %v2254
  %v2256 = vpop.xlane.xlu0 %2255
  %v2257 = vcvt.f32.s32 %v2256
  %v2258 = vcvt.f32.s32 %v2252
  %v2259 = vshll.u32 %v2258, 16
  %v2260 = vadd.s32 %v2259, %v2257
  %v2261 = vadd.f32 %v1987, %v1794
  %v2262 = vadd.f32 %v1990, %v1801
  %s2263 = scalar_lea.vmem %s2, 8
  %v2264 = vld [vmem:[%s2263] sm:$0x3]
  %v2267 = vunpack.c.l.s4 1966171168
  %v2268 = vunpack.c.0.s8 %v2267
  %v2269 = vlaneseq
  %v2270 = vshrl.u32 %v2269, 7
  %v2271 = vsub.s32 %v2268, %v2270
  %v2272 = vrot.slane %v1824, %v2271
  %v2273 = vcombine.high %v2272, %v2272
  %v2275 = vunpack.c.l.s4 1966171168
  %v2276 = vunpack.c.0.s8 %v2275
  %v2277 = vlaneseq
  %v2278 = vshrl.u32 %v2277, 7
  %v2279 = vsub.s32 %v2276, %v2278
  %v2280 = vrot.slane %v2272, %v2279
  %v2282 = vunpack.c.l.s4 1966171168
  %v2283 = vunpack.c.0.s8 %v2282
  %v2284 = vlaneseq
  %v2285 = vshrl.u32 %v2284, 7
  %v2286 = vsub.s32 %v2283, %v2285
  %v2287 = vrot.slane %v2273, %v2286
  %v2288 = vlaneseq
  %v2289 = vshrl.u32 %v2288, 7
  %v2290 = vsub.s32 0, %v2289
  %v2291 = vrot.slane %v2280, %v2290
  %v2292 = vlaneseq
  %v2293 = vshrl.u32 %v2292, 7
  %v2294 = vsub.s32 0, %v2293
  %v2295 = vrot.slane %v2287, %v2294
  %v2298 = vadd.f32 %v2291, %v966
  %v2299 = vadd.f32 %v2295, %v966
  %v2300 = vsel %vm963, %v2298, -inf
  %2301 = vmax.xlane.f32.xlu0 %v2300
  %v2302 = vpop.xlane.xlu0 %2301
  %v2303 = vsel %vm963, %v2299, -inf
  %2304 = vmax.xlane.f32.xlu0 %v2303
  %v2305 = vpop.xlane.xlu0 %2304
  %v2306 = vsub.f32 %v2298, %v2302
  %v2307 = vsub.f32 %v2299, %v2305
  %v2308 = vmul.f32 %v2306, 1.442695
  %v2309 = vpow.pop %v2308
  %v2310 = vmul.f32 %v2307, 1.442695
  %v2311 = vpow.pop %v2310
  %v2312 = vsel %vm963, %v2309, 0.0
  %2313 = vadd.xlane.f32.xlu0 %v2312
  %v2314 = vpop.xlane.xlu0 %2313
  %v2315 = vsel %vm963, %v2311, 0.0
  %2316 = vadd.xlane.f32.xlu0 %v2315
  %v2317 = vpop.xlane.xlu0 %2316
  %v2318 = vlog2.pop %v2314
  %v2319 = vmul.f32 %v2318, 0.6931472
  %v2320 = vlog2.pop %v2317
  %v2321 = vmul.f32 %v2320, 0.6931472
  %v2322 = vadd.f32 %v2302, %v2319
  %v2323 = vadd.f32 %v2305, %v2321
  %vm2324 = vcmp.gt.f32.partialorder %v2264, 0.5
  %v2326 = vlaneseq
  %v2327 = vshrl.u32 %v2326, 7
  %v2328 = vsub.s32 0, %v2327
  %v2329 = vrot.slane %v960, %v2328
  %2331 = vbcast.lane.b32.xlu0 %v2329, 256
  %v2332 = vpop.permute.xlu0 %2331
  %v2333 = vlaneseq
  %v2334 = vshrl.u32 %v2333, 7
  %v2335 = vsub.s32 1, %v2334
  %v2336 = vrot.slane %v960, %v2335
  %2338 = vbcast.lane.b32.xlu0 %v2336, 256
  %v2339 = vpop.permute.xlu0 %2338
  %v2342 = vadd.f32 %v2322, %v2332
  %v2343 = vadd.f32 %v2323, %v2339
  %2346 = vset.pattern.permute.xlu0 0
  %2347 = vperm.xlu0 %2346, %v2342
  %v2348 = vpop.permute.xlu0 %2347
  %2349 = vset.pattern.permute.xlu0 0
  %2350 = vperm.xlu0 %2349, %v2343
  %v2351 = vpop.permute.xlu0 %2350
  %v2352 = vlaneseq
  %v2353 = vshrl.u32 %v2352, 7
  %v2354 = vsub.s32 %v968, %v2353
  %v2355 = vrot.slane %v2348, %v2354
  %v2356 = vlaneseq
  %v2357 = vshrl.u32 %v2356, 7
  %v2358 = vsub.s32 %v968, %v2357
  %v2359 = vrot.slane %v2351, %v2358
  %v2360 = vsel %vm1075, %v2359, %v2355
  %v2362 = vsel %vm2324, %v2360, %v1824
  %v2363 = vadd.f32 %v2261, %v1221
  %v2364 = vadd.f32 %v2261, %v1228
  %v2365 = vadd.f32 %v2261, %v1235
  %v2366 = vadd.f32 %v2261, %v1242
  %v2367 = vadd.f32 %v2261, %v1249
  %v2368 = vadd.f32 %v2261, %v1256
  %v2369 = vadd.f32 %v2261, %v1263
  %v2370 = vadd.f32 %v2261, %v1270
  %v2371 = vadd.f32 %v2262, %v1221
  %v2372 = vadd.f32 %v2262, %v1228
  %v2373 = vadd.f32 %v2262, %v1235
  %v2374 = vadd.f32 %v2262, %v1242
  %v2375 = vadd.f32 %v2262, %v1249
  %v2376 = vadd.f32 %v2262, %v1256
  %v2377 = vadd.f32 %v2262, %v1263
  %v2378 = vadd.f32 %v2262, %v1270
  %2395 = vset.pattern.permute.xlu0 0
  %2396 = vperm.xlu0 %2395, %v2363
  %v2397 = vpop.permute.xlu0 %2396
  %2398 = vset.pattern.permute.xlu0 0
  %2399 = vperm.xlu0 %2398, %v2364
  %v2400 = vpop.permute.xlu0 %2399
  %2401 = vset.pattern.permute.xlu0 0
  %2402 = vperm.xlu0 %2401, %v2365
  %v2403 = vpop.permute.xlu0 %2402
  %2404 = vset.pattern.permute.xlu0 0
  %2405 = vperm.xlu0 %2404, %v2366
  %v2406 = vpop.permute.xlu0 %2405
  %2407 = vset.pattern.permute.xlu0 0
  %2408 = vperm.xlu0 %2407, %v2367
  %v2409 = vpop.permute.xlu0 %2408
  %2410 = vset.pattern.permute.xlu0 0
  %2411 = vperm.xlu0 %2410, %v2368
  %v2412 = vpop.permute.xlu0 %2411
  %2413 = vset.pattern.permute.xlu0 0
  %2414 = vperm.xlu0 %2413, %v2369
  %v2415 = vpop.permute.xlu0 %2414
  %2416 = vset.pattern.permute.xlu0 0
  %2417 = vperm.xlu0 %2416, %v2370
  %v2418 = vpop.permute.xlu0 %2417
  %2419 = vset.pattern.permute.xlu0 0
  %2420 = vperm.xlu0 %2419, %v2371
  %v2421 = vpop.permute.xlu0 %2420
  %2422 = vset.pattern.permute.xlu0 0
  %2423 = vperm.xlu0 %2422, %v2372
  %v2424 = vpop.permute.xlu0 %2423
  %2425 = vset.pattern.permute.xlu0 0
  %2426 = vperm.xlu0 %2425, %v2373
  %v2427 = vpop.permute.xlu0 %2426
  %2428 = vset.pattern.permute.xlu0 0
  %2429 = vperm.xlu0 %2428, %v2374
  %v2430 = vpop.permute.xlu0 %2429
  %2431 = vset.pattern.permute.xlu0 0
  %2432 = vperm.xlu0 %2431, %v2375
  %v2433 = vpop.permute.xlu0 %2432
  %2434 = vset.pattern.permute.xlu0 0
  %2435 = vperm.xlu0 %2434, %v2376
  %v2436 = vpop.permute.xlu0 %2435
  %2437 = vset.pattern.permute.xlu0 0
  %2438 = vperm.xlu0 %2437, %v2377
  %v2439 = vpop.permute.xlu0 %2438
  %2440 = vset.pattern.permute.xlu0 0
  %2441 = vperm.xlu0 %2440, %v2378
  %v2442 = vpop.permute.xlu0 %2441
  %v2443 = vlaneseq
  %v2444 = vshrl.u32 %v2443, 7
  %v2445 = vsub.s32 %v968, %v2444
  %v2446 = vrot.slane %v2397, %v2445
  %v2447 = vlaneseq
  %v2448 = vshrl.u32 %v2447, 7
  %v2449 = vsub.s32 %v968, %v2448
  %v2450 = vrot.slane %v2400, %v2449
  %v2451 = vlaneseq
  %v2452 = vshrl.u32 %v2451, 7
  %v2453 = vsub.s32 %v968, %v2452
  %v2454 = vrot.slane %v2403, %v2453
  %v2455 = vlaneseq
  %v2456 = vshrl.u32 %v2455, 7
  %v2457 = vsub.s32 %v968, %v2456
  %v2458 = vrot.slane %v2406, %v2457
  %v2459 = vlaneseq
  %v2460 = vshrl.u32 %v2459, 7
  %v2461 = vsub.s32 %v968, %v2460
  %v2462 = vrot.slane %v2409, %v2461
  %v2463 = vlaneseq
  %v2464 = vshrl.u32 %v2463, 7
  %v2465 = vsub.s32 %v968, %v2464
  %v2466 = vrot.slane %v2412, %v2465
  %v2467 = vlaneseq
  %v2468 = vshrl.u32 %v2467, 7
  %v2469 = vsub.s32 %v968, %v2468
  %v2470 = vrot.slane %v2415, %v2469
  %v2471 = vlaneseq
  %v2472 = vshrl.u32 %v2471, 7
  %v2473 = vsub.s32 %v968, %v2472
  %v2474 = vrot.slane %v2418, %v2473
  %v2475 = vlaneseq
  %v2476 = vshrl.u32 %v2475, 7
  %v2477 = vsub.s32 %v968, %v2476
  %v2478 = vrot.slane %v2421, %v2477
  %v2479 = vlaneseq
  %v2480 = vshrl.u32 %v2479, 7
  %v2481 = vsub.s32 %v968, %v2480
  %v2482 = vrot.slane %v2424, %v2481
  %v2483 = vlaneseq
  %v2484 = vshrl.u32 %v2483, 7
  %v2485 = vsub.s32 %v968, %v2484
  %v2486 = vrot.slane %v2427, %v2485
  %v2487 = vlaneseq
  %v2488 = vshrl.u32 %v2487, 7
  %v2489 = vsub.s32 %v968, %v2488
  %v2490 = vrot.slane %v2430, %v2489
  %v2491 = vlaneseq
  %v2492 = vshrl.u32 %v2491, 7
  %v2493 = vsub.s32 %v968, %v2492
  %v2494 = vrot.slane %v2433, %v2493
  %v2495 = vlaneseq
  %v2496 = vshrl.u32 %v2495, 7
  %v2497 = vsub.s32 %v968, %v2496
  %v2498 = vrot.slane %v2436, %v2497
  %v2499 = vlaneseq
  %v2500 = vshrl.u32 %v2499, 7
  %v2501 = vsub.s32 %v968, %v2500
  %v2502 = vrot.slane %v2439, %v2501
  %v2503 = vlaneseq
  %v2504 = vshrl.u32 %v2503, 7
  %v2505 = vsub.s32 %v968, %v2504
  %v2506 = vrot.slane %v2442, %v2505
  %v2507 = vsel %vm1075, %v2450, %v2446
  %v2508 = vsel %vm1424, %v2454, %v2507
  %v2509 = vsel %vm1426, %v2458, %v2508
  %v2510 = vsel %vm1428, %v2462, %v2509
  %v2511 = vsel %vm1430, %v2466, %v2510
  %v2512 = vsel %vm1432, %v2470, %v2511
  %v2513 = vsel %vm1434, %v2474, %v2512
  %v2514 = vsel %vm1075, %v2482, %v2478
  %v2515 = vsel %vm1424, %v2486, %v2514
  %v2516 = vsel %vm1426, %v2490, %v2515
  %v2517 = vsel %vm1428, %v2494, %v2516
  %v2518 = vsel %vm1430, %v2498, %v2517
  %v2519 = vsel %vm1432, %v2502, %v2518
  %v2520 = vsel %vm1434, %v2506, %v2519
  %v2523 = vsel %vm963, %v2513, -inf
  %2524 = vmax.xlane.f32.xlu0 %v2523
  %v2525 = vpop.xlane.xlu0 %2524
  %v2526 = vsel %vm963, %v2520, -inf
  %2527 = vmax.xlane.f32.xlu0 %v2526
  %v2528 = vpop.xlane.xlu0 %2527
  %v2531 = vlaneseq
  %v2532 = vshrl.u32 %v2531, 7
  %v2533 = vsub.s32 0, %v2532
  %v2534 = vrot.slane %v2525, %v2533
  %v2535 = vlaneseq
  %v2536 = vshrl.u32 %v2535, 7
  %v2537 = vsub.s32 1, %v2536
  %v2538 = vrot.slane %v2525, %v2537
  %v2539 = vlaneseq
  %v2540 = vshrl.u32 %v2539, 7
  %v2541 = vsub.s32 2, %v2540
  %v2542 = vrot.slane %v2525, %v2541
  %v2543 = vlaneseq
  %v2544 = vshrl.u32 %v2543, 7
  %v2545 = vsub.s32 3, %v2544
  %v2546 = vrot.slane %v2525, %v2545
  %v2547 = vlaneseq
  %v2548 = vshrl.u32 %v2547, 7
  %v2549 = vsub.s32 4, %v2548
  %v2550 = vrot.slane %v2525, %v2549
  %v2551 = vlaneseq
  %v2552 = vshrl.u32 %v2551, 7
  %v2553 = vsub.s32 5, %v2552
  %v2554 = vrot.slane %v2525, %v2553
  %v2555 = vlaneseq
  %v2556 = vshrl.u32 %v2555, 7
  %v2557 = vsub.s32 6, %v2556
  %v2558 = vrot.slane %v2525, %v2557
  %v2559 = vlaneseq
  %v2560 = vshrl.u32 %v2559, 7
  %v2561 = vsub.s32 7, %v2560
  %v2562 = vrot.slane %v2525, %v2561
  %v2563 = vlaneseq
  %v2564 = vshrl.u32 %v2563, 7
  %v2565 = vsub.s32 0, %v2564
  %v2566 = vrot.slane %v2528, %v2565
  %v2567 = vlaneseq
  %v2568 = vshrl.u32 %v2567, 7
  %v2569 = vsub.s32 1, %v2568
  %v2570 = vrot.slane %v2528, %v2569
  %v2571 = vlaneseq
  %v2572 = vshrl.u32 %v2571, 7
  %v2573 = vsub.s32 2, %v2572
  %v2574 = vrot.slane %v2528, %v2573
  %v2575 = vlaneseq
  %v2576 = vshrl.u32 %v2575, 7
  %v2577 = vsub.s32 3, %v2576
  %v2578 = vrot.slane %v2528, %v2577
  %v2579 = vlaneseq
  %v2580 = vshrl.u32 %v2579, 7
  %v2581 = vsub.s32 4, %v2580
  %v2582 = vrot.slane %v2528, %v2581
  %v2583 = vlaneseq
  %v2584 = vshrl.u32 %v2583, 7
  %v2585 = vsub.s32 5, %v2584
  %v2586 = vrot.slane %v2528, %v2585
  %v2587 = vlaneseq
  %v2588 = vshrl.u32 %v2587, 7
  %v2589 = vsub.s32 6, %v2588
  %v2590 = vrot.slane %v2528, %v2589
  %v2591 = vlaneseq
  %v2592 = vshrl.u32 %v2591, 7
  %v2593 = vsub.s32 7, %v2592
  %v2594 = vrot.slane %v2528, %v2593
  %vm2611 = vcmp.ge.f32.partialorder %v2363, %v2534
  %vm2612 = vcmp.ge.f32.partialorder %v2364, %v2538
  %vm2613 = vcmp.ge.f32.partialorder %v2365, %v2542
  %vm2614 = vcmp.ge.f32.partialorder %v2366, %v2546
  %vm2615 = vcmp.ge.f32.partialorder %v2367, %v2550
  %vm2616 = vcmp.ge.f32.partialorder %v2368, %v2554
  %vm2617 = vcmp.ge.f32.partialorder %v2369, %v2558
  %vm2618 = vcmp.ge.f32.partialorder %v2370, %v2562
  %vm2619 = vcmp.ge.f32.partialorder %v2371, %v2566
  %vm2620 = vcmp.ge.f32.partialorder %v2372, %v2570
  %vm2621 = vcmp.ge.f32.partialorder %v2373, %v2574
  %vm2622 = vcmp.ge.f32.partialorder %v2374, %v2578
  %vm2623 = vcmp.ge.f32.partialorder %v2375, %v2582
  %vm2624 = vcmp.ge.f32.partialorder %v2376, %v2586
  %vm2625 = vcmp.ge.f32.partialorder %v2377, %v2590
  %vm2626 = vcmp.ge.f32.partialorder %v2378, %v2594
  %v2627 = vsel %vm2611, %v1551, 1073741824
  %v2628 = vsel %vm2612, %v1551, 1073741824
  %v2629 = vsel %vm2613, %v1551, 1073741824
  %v2630 = vsel %vm2614, %v1551, 1073741824
  %v2631 = vsel %vm2615, %v1551, 1073741824
  %v2632 = vsel %vm2616, %v1551, 1073741824
  %v2633 = vsel %vm2617, %v1551, 1073741824
  %v2634 = vsel %vm2618, %v1551, 1073741824
  %v2635 = vsel %vm2619, %v1551, 1073741824
  %v2636 = vsel %vm2620, %v1551, 1073741824
  %v2637 = vsel %vm2621, %v1551, 1073741824
  %v2638 = vsel %vm2622, %v1551, 1073741824
  %v2639 = vsel %vm2623, %v1551, 1073741824
  %v2640 = vsel %vm2624, %v1551, 1073741824
  %v2641 = vsel %vm2625, %v1551, 1073741824
  %v2642 = vsel %vm2626, %v1551, 1073741824
  %2643 = vset.pattern.permute.xlu0 0
  %2644 = vperm.xlu0 %2643, %v2627
  %v2645 = vpop.permute.xlu0 %2644
  %2646 = vset.pattern.permute.xlu0 0
  %2647 = vperm.xlu0 %2646, %v2628
  %v2648 = vpop.permute.xlu0 %2647
  %2649 = vset.pattern.permute.xlu0 0
  %2650 = vperm.xlu0 %2649, %v2629
  %v2651 = vpop.permute.xlu0 %2650
  %2652 = vset.pattern.permute.xlu0 0
  %2653 = vperm.xlu0 %2652, %v2630
  %v2654 = vpop.permute.xlu0 %2653
  %2655 = vset.pattern.permute.xlu0 0
  %2656 = vperm.xlu0 %2655, %v2631
  %v2657 = vpop.permute.xlu0 %2656
  %2658 = vset.pattern.permute.xlu0 0
  %2659 = vperm.xlu0 %2658, %v2632
  %v2660 = vpop.permute.xlu0 %2659
  %2661 = vset.pattern.permute.xlu0 0
  %2662 = vperm.xlu0 %2661, %v2633
  %v2663 = vpop.permute.xlu0 %2662
  %2664 = vset.pattern.permute.xlu0 0
  %2665 = vperm.xlu0 %2664, %v2634
  %v2666 = vpop.permute.xlu0 %2665
  %2667 = vset.pattern.permute.xlu0 0
  %2668 = vperm.xlu0 %2667, %v2635
  %v2669 = vpop.permute.xlu0 %2668
  %2670 = vset.pattern.permute.xlu0 0
  %2671 = vperm.xlu0 %2670, %v2636
  %v2672 = vpop.permute.xlu0 %2671
  %2673 = vset.pattern.permute.xlu0 0
  %2674 = vperm.xlu0 %2673, %v2637
  %v2675 = vpop.permute.xlu0 %2674
  %2676 = vset.pattern.permute.xlu0 0
  %2677 = vperm.xlu0 %2676, %v2638
  %v2678 = vpop.permute.xlu0 %2677
  %2679 = vset.pattern.permute.xlu0 0
  %2680 = vperm.xlu0 %2679, %v2639
  %v2681 = vpop.permute.xlu0 %2680
  %2682 = vset.pattern.permute.xlu0 0
  %2683 = vperm.xlu0 %2682, %v2640
  %v2684 = vpop.permute.xlu0 %2683
  %2685 = vset.pattern.permute.xlu0 0
  %2686 = vperm.xlu0 %2685, %v2641
  %v2687 = vpop.permute.xlu0 %2686
  %2688 = vset.pattern.permute.xlu0 0
  %2689 = vperm.xlu0 %2688, %v2642
  %v2690 = vpop.permute.xlu0 %2689
  %v2691 = vlaneseq
  %v2692 = vshrl.u32 %v2691, 7
  %v2693 = vsub.s32 %v968, %v2692
  %v2694 = vrot.slane %v2645, %v2693
  %v2695 = vlaneseq
  %v2696 = vshrl.u32 %v2695, 7
  %v2697 = vsub.s32 %v968, %v2696
  %v2698 = vrot.slane %v2648, %v2697
  %v2699 = vlaneseq
  %v2700 = vshrl.u32 %v2699, 7
  %v2701 = vsub.s32 %v968, %v2700
  %v2702 = vrot.slane %v2651, %v2701
  %v2703 = vlaneseq
  %v2704 = vshrl.u32 %v2703, 7
  %v2705 = vsub.s32 %v968, %v2704
  %v2706 = vrot.slane %v2654, %v2705
  %v2707 = vlaneseq
  %v2708 = vshrl.u32 %v2707, 7
  %v2709 = vsub.s32 %v968, %v2708
  %v2710 = vrot.slane %v2657, %v2709
  %v2711 = vlaneseq
  %v2712 = vshrl.u32 %v2711, 7
  %v2713 = vsub.s32 %v968, %v2712
  %v2714 = vrot.slane %v2660, %v2713
  %v2715 = vlaneseq
  %v2716 = vshrl.u32 %v2715, 7
  %v2717 = vsub.s32 %v968, %v2716
  %v2718 = vrot.slane %v2663, %v2717
  %v2719 = vlaneseq
  %v2720 = vshrl.u32 %v2719, 7
  %v2721 = vsub.s32 %v968, %v2720
  %v2722 = vrot.slane %v2666, %v2721
  %v2723 = vlaneseq
  %v2724 = vshrl.u32 %v2723, 7
  %v2725 = vsub.s32 %v968, %v2724
  %v2726 = vrot.slane %v2669, %v2725
  %v2727 = vlaneseq
  %v2728 = vshrl.u32 %v2727, 7
  %v2729 = vsub.s32 %v968, %v2728
  %v2730 = vrot.slane %v2672, %v2729
  %v2731 = vlaneseq
  %v2732 = vshrl.u32 %v2731, 7
  %v2733 = vsub.s32 %v968, %v2732
  %v2734 = vrot.slane %v2675, %v2733
  %v2735 = vlaneseq
  %v2736 = vshrl.u32 %v2735, 7
  %v2737 = vsub.s32 %v968, %v2736
  %v2738 = vrot.slane %v2678, %v2737
  %v2739 = vlaneseq
  %v2740 = vshrl.u32 %v2739, 7
  %v2741 = vsub.s32 %v968, %v2740
  %v2742 = vrot.slane %v2681, %v2741
  %v2743 = vlaneseq
  %v2744 = vshrl.u32 %v2743, 7
  %v2745 = vsub.s32 %v968, %v2744
  %v2746 = vrot.slane %v2684, %v2745
  %v2747 = vlaneseq
  %v2748 = vshrl.u32 %v2747, 7
  %v2749 = vsub.s32 %v968, %v2748
  %v2750 = vrot.slane %v2687, %v2749
  %v2751 = vlaneseq
  %v2752 = vshrl.u32 %v2751, 7
  %v2753 = vsub.s32 %v968, %v2752
  %v2754 = vrot.slane %v2690, %v2753
  %v2755 = vsel %vm1075, %v2698, %v2694
  %v2756 = vsel %vm1424, %v2702, %v2755
  %v2757 = vsel %vm1426, %v2706, %v2756
  %v2758 = vsel %vm1428, %v2710, %v2757
  %v2759 = vsel %vm1430, %v2714, %v2758
  %v2760 = vsel %vm1432, %v2718, %v2759
  %v2761 = vsel %vm1434, %v2722, %v2760
  %v2762 = vsel %vm1075, %v2730, %v2726
  %v2763 = vsel %vm1424, %v2734, %v2762
  %v2764 = vsel %vm1426, %v2738, %v2763
  %v2765 = vsel %vm1428, %v2742, %v2764
  %v2766 = vsel %vm1430, %v2746, %v2765
  %v2767 = vsel %vm1432, %v2750, %v2766
  %v2768 = vsel %vm1434, %v2754, %v2767
  %v2769 = vsel %vm963, %v2761, 2147483647
  %v2770 = vand.u32 %v2769, 65535
  %v2771 = vshra.s32 %v2769, 16
  %v2772 = vcvt.s32.f32 %v2770
  %v2773 = vcvt.s32.f32 %v2771
  %2774 = vmin.xlane.f32.xlu0 %v2773
  %v2775 = vpop.xlane.xlu0 %2774
  %vm2776 = vcmp.eq.f32.partialorder %v2773, %v2775
  %v2777 = vsel %vm2776, %v2772, inf
  %2778 = vmin.xlane.f32.xlu0 %v2777
  %v2779 = vpop.xlane.xlu0 %2778
  %v2780 = vcvt.f32.s32 %v2779
  %v2781 = vcvt.f32.s32 %v2775
  %v2782 = vshll.u32 %v2781, 16
  %v2783 = vadd.s32 %v2782, %v2780
  %v2784 = vsel %vm963, %v2768, 2147483647
  %v2785 = vand.u32 %v2784, 65535
  %v2786 = vshra.s32 %v2784, 16
  %v2787 = vcvt.s32.f32 %v2785
  %v2788 = vcvt.s32.f32 %v2786
  %2789 = vmin.xlane.f32.xlu0 %v2788
  %v2790 = vpop.xlane.xlu0 %2789
  %vm2791 = vcmp.eq.f32.partialorder %v2788, %v2790
  %v2792 = vsel %vm2791, %v2787, inf
  %2793 = vmin.xlane.f32.xlu0 %v2792
  %v2794 = vpop.xlane.xlu0 %2793
  %v2795 = vcvt.f32.s32 %v2794
  %v2796 = vcvt.f32.s32 %v2790
  %v2797 = vshll.u32 %v2796, 16
  %v2798 = vadd.s32 %v2797, %v2795
  %v2799 = vadd.f32 %v2525, %v2332
  %v2800 = vadd.f32 %v2528, %v2339
  %s2801 = scalar_lea.vmem %s2, 10
  %v2802 = vld [vmem:[%s2801] sm:$0x3]
  %v2805 = vunpack.c.l.s4 1966171168
  %v2806 = vunpack.c.0.s8 %v2805
  %v2807 = vlaneseq
  %v2808 = vshrl.u32 %v2807, 7
  %v2809 = vsub.s32 %v2806, %v2808
  %v2810 = vrot.slane %v2362, %v2809
  %v2811 = vcombine.high %v2810, %v2810
  %v2813 = vunpack.c.l.s4 1966171168
  %v2814 = vunpack.c.0.s8 %v2813
  %v2815 = vlaneseq
  %v2816 = vshrl.u32 %v2815, 7
  %v2817 = vsub.s32 %v2814, %v2816
  %v2818 = vrot.slane %v2810, %v2817
  %v2820 = vunpack.c.l.s4 1966171168
  %v2821 = vunpack.c.0.s8 %v2820
  %v2822 = vlaneseq
  %v2823 = vshrl.u32 %v2822, 7
  %v2824 = vsub.s32 %v2821, %v2823
  %v2825 = vrot.slane %v2811, %v2824
  %v2826 = vlaneseq
  %v2827 = vshrl.u32 %v2826, 7
  %v2828 = vsub.s32 0, %v2827
  %v2829 = vrot.slane %v2818, %v2828
  %v2830 = vlaneseq
  %v2831 = vshrl.u32 %v2830, 7
  %v2832 = vsub.s32 0, %v2831
  %v2833 = vrot.slane %v2825, %v2832
  %v2836 = vadd.f32 %v2829, %v966
  %v2837 = vadd.f32 %v2833, %v966
  %v2838 = vsel %vm963, %v2836, -inf
  %2839 = vmax.xlane.f32.xlu0 %v2838
  %v2840 = vpop.xlane.xlu0 %2839
  %v2841 = vsel %vm963, %v2837, -inf
  %2842 = vmax.xlane.f32.xlu0 %v2841
  %v2843 = vpop.xlane.xlu0 %2842
  %v2844 = vsub.f32 %v2836, %v2840
  %v2845 = vsub.f32 %v2837, %v2843
  %v2846 = vmul.f32 %v2844, 1.442695
  %v2847 = vpow.pop %v2846
  %v2848 = vmul.f32 %v2845, 1.442695
  %v2849 = vpow.pop %v2848
  %v2850 = vsel %vm963, %v2847, 0.0
  %2851 = vadd.xlane.f32.xlu0 %v2850
  %v2852 = vpop.xlane.xlu0 %2851
  %v2853 = vsel %vm963, %v2849, 0.0
  %2854 = vadd.xlane.f32.xlu0 %v2853
  %v2855 = vpop.xlane.xlu0 %2854
  %v2856 = vlog2.pop %v2852
  %v2857 = vmul.f32 %v2856, 0.6931472
  %v2858 = vlog2.pop %v2855
  %v2859 = vmul.f32 %v2858, 0.6931472
  %v2860 = vadd.f32 %v2840, %v2857
  %v2861 = vadd.f32 %v2843, %v2859
  %vm2862 = vcmp.gt.f32.partialorder %v2802, 0.5
  %v2863 = vlaneseq
  %v2864 = vshrl.u32 %v2863, 7
  %v2865 = vsub.s32 2, %v2864
  %v2866 = vrot.slane %v960, %v2865
  %2868 = vbcast.lane.b32.xlu0 %v2866, 256
  %v2869 = vpop.permute.xlu0 %2868
  %v2870 = vlaneseq
  %v2871 = vshrl.u32 %v2870, 7
  %v2872 = vsub.s32 3, %v2871
  %v2873 = vrot.slane %v960, %v2872
  %2875 = vbcast.lane.b32.xlu0 %v2873, 256
  %v2876 = vpop.permute.xlu0 %2875
  %v2879 = vadd.f32 %v2860, %v2869
  %v2880 = vadd.f32 %v2861, %v2876
  %2883 = vset.pattern.permute.xlu0 0
  %2884 = vperm.xlu0 %2883, %v2879
  %v2885 = vpop.permute.xlu0 %2884
  %2886 = vset.pattern.permute.xlu0 0
  %2887 = vperm.xlu0 %2886, %v2880
  %v2888 = vpop.permute.xlu0 %2887
  %v2889 = vlaneseq
  %v2890 = vshrl.u32 %v2889, 7
  %v2891 = vsub.s32 %v968, %v2890
  %v2892 = vrot.slane %v2885, %v2891
  %v2893 = vlaneseq
  %v2894 = vshrl.u32 %v2893, 7
  %v2895 = vsub.s32 %v968, %v2894
  %v2896 = vrot.slane %v2888, %v2895
  %v2897 = vsel %vm1075, %v2896, %v2892
  %v2899 = vsel %vm2862, %v2897, %v2362
  %v2900 = vadd.f32 %v2799, %v1221
  %v2901 = vadd.f32 %v2799, %v1228
  %v2902 = vadd.f32 %v2799, %v1235
  %v2903 = vadd.f32 %v2799, %v1242
  %v2904 = vadd.f32 %v2799, %v1249
  %v2905 = vadd.f32 %v2799, %v1256
  %v2906 = vadd.f32 %v2799, %v1263
  %v2907 = vadd.f32 %v2799, %v1270
  %v2908 = vadd.f32 %v2800, %v1221
  %v2909 = vadd.f32 %v2800, %v1228
  %v2910 = vadd.f32 %v2800, %v1235
  %v2911 = vadd.f32 %v2800, %v1242
  %v2912 = vadd.f32 %v2800, %v1249
  %v2913 = vadd.f32 %v2800, %v1256
  %v2914 = vadd.f32 %v2800, %v1263
  %v2915 = vadd.f32 %v2800, %v1270
  %2932 = vset.pattern.permute.xlu0 0
  %2933 = vperm.xlu0 %2932, %v2900
  %v2934 = vpop.permute.xlu0 %2933
  %2935 = vset.pattern.permute.xlu0 0
  %2936 = vperm.xlu0 %2935, %v2901
  %v2937 = vpop.permute.xlu0 %2936
  %2938 = vset.pattern.permute.xlu0 0
  %2939 = vperm.xlu0 %2938, %v2902
  %v2940 = vpop.permute.xlu0 %2939
  %2941 = vset.pattern.permute.xlu0 0
  %2942 = vperm.xlu0 %2941, %v2903
  %v2943 = vpop.permute.xlu0 %2942
  %2944 = vset.pattern.permute.xlu0 0
  %2945 = vperm.xlu0 %2944, %v2904
  %v2946 = vpop.permute.xlu0 %2945
  %2947 = vset.pattern.permute.xlu0 0
  %2948 = vperm.xlu0 %2947, %v2905
  %v2949 = vpop.permute.xlu0 %2948
  %2950 = vset.pattern.permute.xlu0 0
  %2951 = vperm.xlu0 %2950, %v2906
  %v2952 = vpop.permute.xlu0 %2951
  %2953 = vset.pattern.permute.xlu0 0
  %2954 = vperm.xlu0 %2953, %v2907
  %v2955 = vpop.permute.xlu0 %2954
  %2956 = vset.pattern.permute.xlu0 0
  %2957 = vperm.xlu0 %2956, %v2908
  %v2958 = vpop.permute.xlu0 %2957
  %2959 = vset.pattern.permute.xlu0 0
  %2960 = vperm.xlu0 %2959, %v2909
  %v2961 = vpop.permute.xlu0 %2960
  %2962 = vset.pattern.permute.xlu0 0
  %2963 = vperm.xlu0 %2962, %v2910
  %v2964 = vpop.permute.xlu0 %2963
  %2965 = vset.pattern.permute.xlu0 0
  %2966 = vperm.xlu0 %2965, %v2911
  %v2967 = vpop.permute.xlu0 %2966
  %2968 = vset.pattern.permute.xlu0 0
  %2969 = vperm.xlu0 %2968, %v2912
  %v2970 = vpop.permute.xlu0 %2969
  %2971 = vset.pattern.permute.xlu0 0
  %2972 = vperm.xlu0 %2971, %v2913
  %v2973 = vpop.permute.xlu0 %2972
  %2974 = vset.pattern.permute.xlu0 0
  %2975 = vperm.xlu0 %2974, %v2914
  %v2976 = vpop.permute.xlu0 %2975
  %2977 = vset.pattern.permute.xlu0 0
  %2978 = vperm.xlu0 %2977, %v2915
  %v2979 = vpop.permute.xlu0 %2978
  %v2980 = vlaneseq
  %v2981 = vshrl.u32 %v2980, 7
  %v2982 = vsub.s32 %v968, %v2981
  %v2983 = vrot.slane %v2934, %v2982
  %v2984 = vlaneseq
  %v2985 = vshrl.u32 %v2984, 7
  %v2986 = vsub.s32 %v968, %v2985
  %v2987 = vrot.slane %v2937, %v2986
  %v2988 = vlaneseq
  %v2989 = vshrl.u32 %v2988, 7
  %v2990 = vsub.s32 %v968, %v2989
  %v2991 = vrot.slane %v2940, %v2990
  %v2992 = vlaneseq
  %v2993 = vshrl.u32 %v2992, 7
  %v2994 = vsub.s32 %v968, %v2993
  %v2995 = vrot.slane %v2943, %v2994
  %v2996 = vlaneseq
  %v2997 = vshrl.u32 %v2996, 7
  %v2998 = vsub.s32 %v968, %v2997
  %v2999 = vrot.slane %v2946, %v2998
  %v3000 = vlaneseq
  %v3001 = vshrl.u32 %v3000, 7
  %v3002 = vsub.s32 %v968, %v3001
  %v3003 = vrot.slane %v2949, %v3002
  %v3004 = vlaneseq
  %v3005 = vshrl.u32 %v3004, 7
  %v3006 = vsub.s32 %v968, %v3005
  %v3007 = vrot.slane %v2952, %v3006
  %v3008 = vlaneseq
  %v3009 = vshrl.u32 %v3008, 7
  %v3010 = vsub.s32 %v968, %v3009
  %v3011 = vrot.slane %v2955, %v3010
  %v3012 = vlaneseq
  %v3013 = vshrl.u32 %v3012, 7
  %v3014 = vsub.s32 %v968, %v3013
  %v3015 = vrot.slane %v2958, %v3014
  %v3016 = vlaneseq
  %v3017 = vshrl.u32 %v3016, 7
  %v3018 = vsub.s32 %v968, %v3017
  %v3019 = vrot.slane %v2961, %v3018
  %v3020 = vlaneseq
  %v3021 = vshrl.u32 %v3020, 7
  %v3022 = vsub.s32 %v968, %v3021
  %v3023 = vrot.slane %v2964, %v3022
  %v3024 = vlaneseq
  %v3025 = vshrl.u32 %v3024, 7
  %v3026 = vsub.s32 %v968, %v3025
  %v3027 = vrot.slane %v2967, %v3026
  %v3028 = vlaneseq
  %v3029 = vshrl.u32 %v3028, 7
  %v3030 = vsub.s32 %v968, %v3029
  %v3031 = vrot.slane %v2970, %v3030
  %v3032 = vlaneseq
  %v3033 = vshrl.u32 %v3032, 7
  %v3034 = vsub.s32 %v968, %v3033
  %v3035 = vrot.slane %v2973, %v3034
  %v3036 = vlaneseq
  %v3037 = vshrl.u32 %v3036, 7
  %v3038 = vsub.s32 %v968, %v3037
  %v3039 = vrot.slane %v2976, %v3038
  %v3040 = vlaneseq
  %v3041 = vshrl.u32 %v3040, 7
  %v3042 = vsub.s32 %v968, %v3041
  %v3043 = vrot.slane %v2979, %v3042
  %v3044 = vsel %vm1075, %v2987, %v2983
  %v3045 = vsel %vm1424, %v2991, %v3044
  %v3046 = vsel %vm1426, %v2995, %v3045
  %v3047 = vsel %vm1428, %v2999, %v3046
  %v3048 = vsel %vm1430, %v3003, %v3047
  %v3049 = vsel %vm1432, %v3007, %v3048
  %v3050 = vsel %vm1434, %v3011, %v3049
  %v3051 = vsel %vm1075, %v3019, %v3015
  %v3052 = vsel %vm1424, %v3023, %v3051
  %v3053 = vsel %vm1426, %v3027, %v3052
  %v3054 = vsel %vm1428, %v3031, %v3053
  %v3055 = vsel %vm1430, %v3035, %v3054
  %v3056 = vsel %vm1432, %v3039, %v3055
  %v3057 = vsel %vm1434, %v3043, %v3056
  %v3060 = vsel %vm963, %v3050, -inf
  %3061 = vmax.xlane.f32.xlu0 %v3060
  %v3062 = vpop.xlane.xlu0 %3061
  %v3063 = vsel %vm963, %v3057, -inf
  %3064 = vmax.xlane.f32.xlu0 %v3063
  %v3065 = vpop.xlane.xlu0 %3064
  %v3068 = vlaneseq
  %v3069 = vshrl.u32 %v3068, 7
  %v3070 = vsub.s32 0, %v3069
  %v3071 = vrot.slane %v3062, %v3070
  %v3072 = vlaneseq
  %v3073 = vshrl.u32 %v3072, 7
  %v3074 = vsub.s32 1, %v3073
  %v3075 = vrot.slane %v3062, %v3074
  %v3076 = vlaneseq
  %v3077 = vshrl.u32 %v3076, 7
  %v3078 = vsub.s32 2, %v3077
  %v3079 = vrot.slane %v3062, %v3078
  %v3080 = vlaneseq
  %v3081 = vshrl.u32 %v3080, 7
  %v3082 = vsub.s32 3, %v3081
  %v3083 = vrot.slane %v3062, %v3082
  %v3084 = vlaneseq
  %v3085 = vshrl.u32 %v3084, 7
  %v3086 = vsub.s32 4, %v3085
  %v3087 = vrot.slane %v3062, %v3086
  %v3088 = vlaneseq
  %v3089 = vshrl.u32 %v3088, 7
  %v3090 = vsub.s32 5, %v3089
  %v3091 = vrot.slane %v3062, %v3090
  %v3092 = vlaneseq
  %v3093 = vshrl.u32 %v3092, 7
  %v3094 = vsub.s32 6, %v3093
  %v3095 = vrot.slane %v3062, %v3094
  %v3096 = vlaneseq
  %v3097 = vshrl.u32 %v3096, 7
  %v3098 = vsub.s32 7, %v3097
  %v3099 = vrot.slane %v3062, %v3098
  %v3100 = vlaneseq
  %v3101 = vshrl.u32 %v3100, 7
  %v3102 = vsub.s32 0, %v3101
  %v3103 = vrot.slane %v3065, %v3102
  %v3104 = vlaneseq
  %v3105 = vshrl.u32 %v3104, 7
  %v3106 = vsub.s32 1, %v3105
  %v3107 = vrot.slane %v3065, %v3106
  %v3108 = vlaneseq
  %v3109 = vshrl.u32 %v3108, 7
  %v3110 = vsub.s32 2, %v3109
  %v3111 = vrot.slane %v3065, %v3110
  %v3112 = vlaneseq
  %v3113 = vshrl.u32 %v3112, 7
  %v3114 = vsub.s32 3, %v3113
  %v3115 = vrot.slane %v3065, %v3114
  %v3116 = vlaneseq
  %v3117 = vshrl.u32 %v3116, 7
  %v3118 = vsub.s32 4, %v3117
  %v3119 = vrot.slane %v3065, %v3118
  %v3120 = vlaneseq
  %v3121 = vshrl.u32 %v3120, 7
  %v3122 = vsub.s32 5, %v3121
  %v3123 = vrot.slane %v3065, %v3122
  %v3124 = vlaneseq
  %v3125 = vshrl.u32 %v3124, 7
  %v3126 = vsub.s32 6, %v3125
  %v3127 = vrot.slane %v3065, %v3126
  %v3128 = vlaneseq
  %v3129 = vshrl.u32 %v3128, 7
  %v3130 = vsub.s32 7, %v3129
  %v3131 = vrot.slane %v3065, %v3130
  %vm3148 = vcmp.ge.f32.partialorder %v2900, %v3071
  %vm3149 = vcmp.ge.f32.partialorder %v2901, %v3075
  %vm3150 = vcmp.ge.f32.partialorder %v2902, %v3079
  %vm3151 = vcmp.ge.f32.partialorder %v2903, %v3083
  %vm3152 = vcmp.ge.f32.partialorder %v2904, %v3087
  %vm3153 = vcmp.ge.f32.partialorder %v2905, %v3091
  %vm3154 = vcmp.ge.f32.partialorder %v2906, %v3095
  %vm3155 = vcmp.ge.f32.partialorder %v2907, %v3099
  %vm3156 = vcmp.ge.f32.partialorder %v2908, %v3103
  %vm3157 = vcmp.ge.f32.partialorder %v2909, %v3107
  %vm3158 = vcmp.ge.f32.partialorder %v2910, %v3111
  %vm3159 = vcmp.ge.f32.partialorder %v2911, %v3115
  %vm3160 = vcmp.ge.f32.partialorder %v2912, %v3119
  %vm3161 = vcmp.ge.f32.partialorder %v2913, %v3123
  %vm3162 = vcmp.ge.f32.partialorder %v2914, %v3127
  %vm3163 = vcmp.ge.f32.partialorder %v2915, %v3131
  %v3164 = vsel %vm3148, %v1551, 1073741824
  %v3165 = vsel %vm3149, %v1551, 1073741824
  %v3166 = vsel %vm3150, %v1551, 1073741824
  %v3167 = vsel %vm3151, %v1551, 1073741824
  %v3168 = vsel %vm3152, %v1551, 1073741824
  %v3169 = vsel %vm3153, %v1551, 1073741824
  %v3170 = vsel %vm3154, %v1551, 1073741824
  %v3171 = vsel %vm3155, %v1551, 1073741824
  %v3172 = vsel %vm3156, %v1551, 1073741824
  %v3173 = vsel %vm3157, %v1551, 1073741824
  %v3174 = vsel %vm3158, %v1551, 1073741824
  %v3175 = vsel %vm3159, %v1551, 1073741824
  %v3176 = vsel %vm3160, %v1551, 1073741824
  %v3177 = vsel %vm3161, %v1551, 1073741824
  %v3178 = vsel %vm3162, %v1551, 1073741824
  %v3179 = vsel %vm3163, %v1551, 1073741824
  %3180 = vset.pattern.permute.xlu0 0
  %3181 = vperm.xlu0 %3180, %v3164
  %v3182 = vpop.permute.xlu0 %3181
  %3183 = vset.pattern.permute.xlu0 0
  %3184 = vperm.xlu0 %3183, %v3165
  %v3185 = vpop.permute.xlu0 %3184
  %3186 = vset.pattern.permute.xlu0 0
  %3187 = vperm.xlu0 %3186, %v3166
  %v3188 = vpop.permute.xlu0 %3187
  %3189 = vset.pattern.permute.xlu0 0
  %3190 = vperm.xlu0 %3189, %v3167
  %v3191 = vpop.permute.xlu0 %3190
  %3192 = vset.pattern.permute.xlu0 0
  %3193 = vperm.xlu0 %3192, %v3168
  %v3194 = vpop.permute.xlu0 %3193
  %3195 = vset.pattern.permute.xlu0 0
  %3196 = vperm.xlu0 %3195, %v3169
  %v3197 = vpop.permute.xlu0 %3196
  %3198 = vset.pattern.permute.xlu0 0
  %3199 = vperm.xlu0 %3198, %v3170
  %v3200 = vpop.permute.xlu0 %3199
  %3201 = vset.pattern.permute.xlu0 0
  %3202 = vperm.xlu0 %3201, %v3171
  %v3203 = vpop.permute.xlu0 %3202
  %3204 = vset.pattern.permute.xlu0 0
  %3205 = vperm.xlu0 %3204, %v3172
  %v3206 = vpop.permute.xlu0 %3205
  %3207 = vset.pattern.permute.xlu0 0
  %3208 = vperm.xlu0 %3207, %v3173
  %v3209 = vpop.permute.xlu0 %3208
  %3210 = vset.pattern.permute.xlu0 0
  %3211 = vperm.xlu0 %3210, %v3174
  %v3212 = vpop.permute.xlu0 %3211
  %3213 = vset.pattern.permute.xlu0 0
  %3214 = vperm.xlu0 %3213, %v3175
  %v3215 = vpop.permute.xlu0 %3214
  %3216 = vset.pattern.permute.xlu0 0
  %3217 = vperm.xlu0 %3216, %v3176
  %v3218 = vpop.permute.xlu0 %3217
  %3219 = vset.pattern.permute.xlu0 0
  %3220 = vperm.xlu0 %3219, %v3177
  %v3221 = vpop.permute.xlu0 %3220
  %3222 = vset.pattern.permute.xlu0 0
  %3223 = vperm.xlu0 %3222, %v3178
  %v3224 = vpop.permute.xlu0 %3223
  %3225 = vset.pattern.permute.xlu0 0
  %3226 = vperm.xlu0 %3225, %v3179
  %v3227 = vpop.permute.xlu0 %3226
  %v3228 = vlaneseq
  %v3229 = vshrl.u32 %v3228, 7
  %v3230 = vsub.s32 %v968, %v3229
  %v3231 = vrot.slane %v3182, %v3230
  %v3232 = vlaneseq
  %v3233 = vshrl.u32 %v3232, 7
  %v3234 = vsub.s32 %v968, %v3233
  %v3235 = vrot.slane %v3185, %v3234
  %v3236 = vlaneseq
  %v3237 = vshrl.u32 %v3236, 7
  %v3238 = vsub.s32 %v968, %v3237
  %v3239 = vrot.slane %v3188, %v3238
  %v3240 = vlaneseq
  %v3241 = vshrl.u32 %v3240, 7
  %v3242 = vsub.s32 %v968, %v3241
  %v3243 = vrot.slane %v3191, %v3242
  %v3244 = vlaneseq
  %v3245 = vshrl.u32 %v3244, 7
  %v3246 = vsub.s32 %v968, %v3245
  %v3247 = vrot.slane %v3194, %v3246
  %v3248 = vlaneseq
  %v3249 = vshrl.u32 %v3248, 7
  %v3250 = vsub.s32 %v968, %v3249
  %v3251 = vrot.slane %v3197, %v3250
  %v3252 = vlaneseq
  %v3253 = vshrl.u32 %v3252, 7
  %v3254 = vsub.s32 %v968, %v3253
  %v3255 = vrot.slane %v3200, %v3254
  %v3256 = vlaneseq
  %v3257 = vshrl.u32 %v3256, 7
  %v3258 = vsub.s32 %v968, %v3257
  %v3259 = vrot.slane %v3203, %v3258
  %v3260 = vlaneseq
  %v3261 = vshrl.u32 %v3260, 7
  %v3262 = vsub.s32 %v968, %v3261
  %v3263 = vrot.slane %v3206, %v3262
  %v3264 = vlaneseq
  %v3265 = vshrl.u32 %v3264, 7
  %v3266 = vsub.s32 %v968, %v3265
  %v3267 = vrot.slane %v3209, %v3266
  %v3268 = vlaneseq
  %v3269 = vshrl.u32 %v3268, 7
  %v3270 = vsub.s32 %v968, %v3269
  %v3271 = vrot.slane %v3212, %v3270
  %v3272 = vlaneseq
  %v3273 = vshrl.u32 %v3272, 7
  %v3274 = vsub.s32 %v968, %v3273
  %v3275 = vrot.slane %v3215, %v3274
  %v3276 = vlaneseq
  %v3277 = vshrl.u32 %v3276, 7
  %v3278 = vsub.s32 %v968, %v3277
  %v3279 = vrot.slane %v3218, %v3278
  %v3280 = vlaneseq
  %v3281 = vshrl.u32 %v3280, 7
  %v3282 = vsub.s32 %v968, %v3281
  %v3283 = vrot.slane %v3221, %v3282
  %v3284 = vlaneseq
  %v3285 = vshrl.u32 %v3284, 7
  %v3286 = vsub.s32 %v968, %v3285
  %v3287 = vrot.slane %v3224, %v3286
  %v3288 = vlaneseq
  %v3289 = vshrl.u32 %v3288, 7
  %v3290 = vsub.s32 %v968, %v3289
  %v3291 = vrot.slane %v3227, %v3290
  %v3292 = vsel %vm1075, %v3235, %v3231
  %v3293 = vsel %vm1424, %v3239, %v3292
  %v3294 = vsel %vm1426, %v3243, %v3293
  %v3295 = vsel %vm1428, %v3247, %v3294
  %v3296 = vsel %vm1430, %v3251, %v3295
  %v3297 = vsel %vm1432, %v3255, %v3296
  %v3298 = vsel %vm1434, %v3259, %v3297
  %v3299 = vsel %vm1075, %v3267, %v3263
  %v3300 = vsel %vm1424, %v3271, %v3299
  %v3301 = vsel %vm1426, %v3275, %v3300
  %v3302 = vsel %vm1428, %v3279, %v3301
  %v3303 = vsel %vm1430, %v3283, %v3302
  %v3304 = vsel %vm1432, %v3287, %v3303
  %v3305 = vsel %vm1434, %v3291, %v3304
  %v3306 = vsel %vm963, %v3298, 2147483647
  %v3307 = vand.u32 %v3306, 65535
  %v3308 = vshra.s32 %v3306, 16
  %v3309 = vcvt.s32.f32 %v3307
  %v3310 = vcvt.s32.f32 %v3308
  %3311 = vmin.xlane.f32.xlu0 %v3310
  %v3312 = vpop.xlane.xlu0 %3311
  %vm3313 = vcmp.eq.f32.partialorder %v3310, %v3312
  %v3314 = vsel %vm3313, %v3309, inf
  %3315 = vmin.xlane.f32.xlu0 %v3314
  %v3316 = vpop.xlane.xlu0 %3315
  %v3317 = vcvt.f32.s32 %v3316
  %v3318 = vcvt.f32.s32 %v3312
  %v3319 = vshll.u32 %v3318, 16
  %v3320 = vadd.s32 %v3319, %v3317
  %v3321 = vsel %vm963, %v3305, 2147483647
  %v3322 = vand.u32 %v3321, 65535
  %v3323 = vshra.s32 %v3321, 16
  %v3324 = vcvt.s32.f32 %v3322
  %v3325 = vcvt.s32.f32 %v3323
  %3326 = vmin.xlane.f32.xlu0 %v3325
  %v3327 = vpop.xlane.xlu0 %3326
  %vm3328 = vcmp.eq.f32.partialorder %v3325, %v3327
  %v3329 = vsel %vm3328, %v3324, inf
  %3330 = vmin.xlane.f32.xlu0 %v3329
  %v3331 = vpop.xlane.xlu0 %3330
  %v3332 = vcvt.f32.s32 %v3331
  %v3333 = vcvt.f32.s32 %v3327
  %v3334 = vshll.u32 %v3333, 16
  %v3335 = vadd.s32 %v3334, %v3332
  %v3336 = vadd.f32 %v3062, %v2869
  %v3337 = vadd.f32 %v3065, %v2876
  %s3338 = scalar_lea.vmem %s2, 12
  %v3339 = vld [vmem:[%s3338] sm:$0x3]
  %v3342 = vunpack.c.l.s4 1966171168
  %v3343 = vunpack.c.0.s8 %v3342
  %v3344 = vlaneseq
  %v3345 = vshrl.u32 %v3344, 7
  %v3346 = vsub.s32 %v3343, %v3345
  %v3347 = vrot.slane %v2899, %v3346
  %v3348 = vcombine.high %v3347, %v3347
  %v3350 = vunpack.c.l.s4 1966171168
  %v3351 = vunpack.c.0.s8 %v3350
  %v3352 = vlaneseq
  %v3353 = vshrl.u32 %v3352, 7
  %v3354 = vsub.s32 %v3351, %v3353
  %v3355 = vrot.slane %v3347, %v3354
  %v3357 = vunpack.c.l.s4 1966171168
  %v3358 = vunpack.c.0.s8 %v3357
  %v3359 = vlaneseq
  %v3360 = vshrl.u32 %v3359, 7
  %v3361 = vsub.s32 %v3358, %v3360
  %v3362 = vrot.slane %v3348, %v3361
  %v3363 = vlaneseq
  %v3364 = vshrl.u32 %v3363, 7
  %v3365 = vsub.s32 0, %v3364
  %v3366 = vrot.slane %v3355, %v3365
  %v3367 = vlaneseq
  %v3368 = vshrl.u32 %v3367, 7
  %v3369 = vsub.s32 0, %v3368
  %v3370 = vrot.slane %v3362, %v3369
  %v3373 = vadd.f32 %v3366, %v966
  %v3374 = vadd.f32 %v3370, %v966
  %v3375 = vsel %vm963, %v3373, -inf
  %3376 = vmax.xlane.f32.xlu0 %v3375
  %v3377 = vpop.xlane.xlu0 %3376
  %v3378 = vsel %vm963, %v3374, -inf
  %3379 = vmax.xlane.f32.xlu0 %v3378
  %v3380 = vpop.xlane.xlu0 %3379
  %v3381 = vsub.f32 %v3373, %v3377
  %v3382 = vsub.f32 %v3374, %v3380
  %v3383 = vmul.f32 %v3381, 1.442695
  %v3384 = vpow.pop %v3383
  %v3385 = vmul.f32 %v3382, 1.442695
  %v3386 = vpow.pop %v3385
  %v3387 = vsel %vm963, %v3384, 0.0
  %3388 = vadd.xlane.f32.xlu0 %v3387
  %v3389 = vpop.xlane.xlu0 %3388
  %v3390 = vsel %vm963, %v3386, 0.0
  %3391 = vadd.xlane.f32.xlu0 %v3390
  %v3392 = vpop.xlane.xlu0 %3391
  %v3393 = vlog2.pop %v3389
  %v3394 = vmul.f32 %v3393, 0.6931472
  %v3395 = vlog2.pop %v3392
  %v3396 = vmul.f32 %v3395, 0.6931472
  %v3397 = vadd.f32 %v3377, %v3394
  %v3398 = vadd.f32 %v3380, %v3396
  %vm3399 = vcmp.gt.f32.partialorder %v3339, 0.5
  %v3400 = vlaneseq
  %v3401 = vshrl.u32 %v3400, 7
  %v3402 = vsub.s32 4, %v3401
  %v3403 = vrot.slane %v960, %v3402
  %3405 = vbcast.lane.b32.xlu0 %v3403, 256
  %v3406 = vpop.permute.xlu0 %3405
  %v3407 = vlaneseq
  %v3408 = vshrl.u32 %v3407, 7
  %v3409 = vsub.s32 5, %v3408
  %v3410 = vrot.slane %v960, %v3409
  %3412 = vbcast.lane.b32.xlu0 %v3410, 256
  %v3413 = vpop.permute.xlu0 %3412
  %v3416 = vadd.f32 %v3397, %v3406
  %v3417 = vadd.f32 %v3398, %v3413
  %3420 = vset.pattern.permute.xlu0 0
  %3421 = vperm.xlu0 %3420, %v3416
  %v3422 = vpop.permute.xlu0 %3421
  %3423 = vset.pattern.permute.xlu0 0
  %3424 = vperm.xlu0 %3423, %v3417
  %v3425 = vpop.permute.xlu0 %3424
  %v3426 = vlaneseq
  %v3427 = vshrl.u32 %v3426, 7
  %v3428 = vsub.s32 %v968, %v3427
  %v3429 = vrot.slane %v3422, %v3428
  %v3430 = vlaneseq
  %v3431 = vshrl.u32 %v3430, 7
  %v3432 = vsub.s32 %v968, %v3431
  %v3433 = vrot.slane %v3425, %v3432
  %v3434 = vsel %vm1075, %v3433, %v3429
  %v3436 = vsel %vm3399, %v3434, %v2899
  %v3437 = vadd.f32 %v3336, %v1221
  %v3438 = vadd.f32 %v3336, %v1228
  %v3439 = vadd.f32 %v3336, %v1235
  %v3440 = vadd.f32 %v3336, %v1242
  %v3441 = vadd.f32 %v3336, %v1249
  %v3442 = vadd.f32 %v3336, %v1256
  %v3443 = vadd.f32 %v3336, %v1263
  %v3444 = vadd.f32 %v3336, %v1270
  %v3445 = vadd.f32 %v3337, %v1221
  %v3446 = vadd.f32 %v3337, %v1228
  %v3447 = vadd.f32 %v3337, %v1235
  %v3448 = vadd.f32 %v3337, %v1242
  %v3449 = vadd.f32 %v3337, %v1249
  %v3450 = vadd.f32 %v3337, %v1256
  %v3451 = vadd.f32 %v3337, %v1263
  %v3452 = vadd.f32 %v3337, %v1270
  %3469 = vset.pattern.permute.xlu0 0
  %3470 = vperm.xlu0 %3469, %v3437
  %v3471 = vpop.permute.xlu0 %3470
  %3472 = vset.pattern.permute.xlu0 0
  %3473 = vperm.xlu0 %3472, %v3438
  %v3474 = vpop.permute.xlu0 %3473
  %3475 = vset.pattern.permute.xlu0 0
  %3476 = vperm.xlu0 %3475, %v3439
  %v3477 = vpop.permute.xlu0 %3476
  %3478 = vset.pattern.permute.xlu0 0
  %3479 = vperm.xlu0 %3478, %v3440
  %v3480 = vpop.permute.xlu0 %3479
  %3481 = vset.pattern.permute.xlu0 0
  %3482 = vperm.xlu0 %3481, %v3441
  %v3483 = vpop.permute.xlu0 %3482
  %3484 = vset.pattern.permute.xlu0 0
  %3485 = vperm.xlu0 %3484, %v3442
  %v3486 = vpop.permute.xlu0 %3485
  %3487 = vset.pattern.permute.xlu0 0
  %3488 = vperm.xlu0 %3487, %v3443
  %v3489 = vpop.permute.xlu0 %3488
  %3490 = vset.pattern.permute.xlu0 0
  %3491 = vperm.xlu0 %3490, %v3444
  %v3492 = vpop.permute.xlu0 %3491
  %3493 = vset.pattern.permute.xlu0 0
  %3494 = vperm.xlu0 %3493, %v3445
  %v3495 = vpop.permute.xlu0 %3494
  %3496 = vset.pattern.permute.xlu0 0
  %3497 = vperm.xlu0 %3496, %v3446
  %v3498 = vpop.permute.xlu0 %3497
  %3499 = vset.pattern.permute.xlu0 0
  %3500 = vperm.xlu0 %3499, %v3447
  %v3501 = vpop.permute.xlu0 %3500
  %3502 = vset.pattern.permute.xlu0 0
  %3503 = vperm.xlu0 %3502, %v3448
  %v3504 = vpop.permute.xlu0 %3503
  %3505 = vset.pattern.permute.xlu0 0
  %3506 = vperm.xlu0 %3505, %v3449
  %v3507 = vpop.permute.xlu0 %3506
  %3508 = vset.pattern.permute.xlu0 0
  %3509 = vperm.xlu0 %3508, %v3450
  %v3510 = vpop.permute.xlu0 %3509
  %3511 = vset.pattern.permute.xlu0 0
  %3512 = vperm.xlu0 %3511, %v3451
  %v3513 = vpop.permute.xlu0 %3512
  %3514 = vset.pattern.permute.xlu0 0
  %3515 = vperm.xlu0 %3514, %v3452
  %v3516 = vpop.permute.xlu0 %3515
  %v3517 = vlaneseq
  %v3518 = vshrl.u32 %v3517, 7
  %v3519 = vsub.s32 %v968, %v3518
  %v3520 = vrot.slane %v3471, %v3519
  %v3521 = vlaneseq
  %v3522 = vshrl.u32 %v3521, 7
  %v3523 = vsub.s32 %v968, %v3522
  %v3524 = vrot.slane %v3474, %v3523
  %v3525 = vlaneseq
  %v3526 = vshrl.u32 %v3525, 7
  %v3527 = vsub.s32 %v968, %v3526
  %v3528 = vrot.slane %v3477, %v3527
  %v3529 = vlaneseq
  %v3530 = vshrl.u32 %v3529, 7
  %v3531 = vsub.s32 %v968, %v3530
  %v3532 = vrot.slane %v3480, %v3531
  %v3533 = vlaneseq
  %v3534 = vshrl.u32 %v3533, 7
  %v3535 = vsub.s32 %v968, %v3534
  %v3536 = vrot.slane %v3483, %v3535
  %v3537 = vlaneseq
  %v3538 = vshrl.u32 %v3537, 7
  %v3539 = vsub.s32 %v968, %v3538
  %v3540 = vrot.slane %v3486, %v3539
  %v3541 = vlaneseq
  %v3542 = vshrl.u32 %v3541, 7
  %v3543 = vsub.s32 %v968, %v3542
  %v3544 = vrot.slane %v3489, %v3543
  %v3545 = vlaneseq
  %v3546 = vshrl.u32 %v3545, 7
  %v3547 = vsub.s32 %v968, %v3546
  %v3548 = vrot.slane %v3492, %v3547
  %v3549 = vlaneseq
  %v3550 = vshrl.u32 %v3549, 7
  %v3551 = vsub.s32 %v968, %v3550
  %v3552 = vrot.slane %v3495, %v3551
  %v3553 = vlaneseq
  %v3554 = vshrl.u32 %v3553, 7
  %v3555 = vsub.s32 %v968, %v3554
  %v3556 = vrot.slane %v3498, %v3555
  %v3557 = vlaneseq
  %v3558 = vshrl.u32 %v3557, 7
  %v3559 = vsub.s32 %v968, %v3558
  %v3560 = vrot.slane %v3501, %v3559
  %v3561 = vlaneseq
  %v3562 = vshrl.u32 %v3561, 7
  %v3563 = vsub.s32 %v968, %v3562
  %v3564 = vrot.slane %v3504, %v3563
  %v3565 = vlaneseq
  %v3566 = vshrl.u32 %v3565, 7
  %v3567 = vsub.s32 %v968, %v3566
  %v3568 = vrot.slane %v3507, %v3567
  %v3569 = vlaneseq
  %v3570 = vshrl.u32 %v3569, 7
  %v3571 = vsub.s32 %v968, %v3570
  %v3572 = vrot.slane %v3510, %v3571
  %v3573 = vlaneseq
  %v3574 = vshrl.u32 %v3573, 7
  %v3575 = vsub.s32 %v968, %v3574
  %v3576 = vrot.slane %v3513, %v3575
  %v3577 = vlaneseq
  %v3578 = vshrl.u32 %v3577, 7
  %v3579 = vsub.s32 %v968, %v3578
  %v3580 = vrot.slane %v3516, %v3579
  %v3581 = vsel %vm1075, %v3524, %v3520
  %v3582 = vsel %vm1424, %v3528, %v3581
  %v3583 = vsel %vm1426, %v3532, %v3582
  %v3584 = vsel %vm1428, %v3536, %v3583
  %v3585 = vsel %vm1430, %v3540, %v3584
  %v3586 = vsel %vm1432, %v3544, %v3585
  %v3587 = vsel %vm1434, %v3548, %v3586
  %v3588 = vsel %vm1075, %v3556, %v3552
  %v3589 = vsel %vm1424, %v3560, %v3588
  %v3590 = vsel %vm1426, %v3564, %v3589
  %v3591 = vsel %vm1428, %v3568, %v3590
  %v3592 = vsel %vm1430, %v3572, %v3591
  %v3593 = vsel %vm1432, %v3576, %v3592
  %v3594 = vsel %vm1434, %v3580, %v3593
  %v3597 = vsel %vm963, %v3587, -inf
  %3598 = vmax.xlane.f32.xlu0 %v3597
  %v3599 = vpop.xlane.xlu0 %3598
  %v3600 = vsel %vm963, %v3594, -inf
  %3601 = vmax.xlane.f32.xlu0 %v3600
  %v3602 = vpop.xlane.xlu0 %3601
  %v3605 = vlaneseq
  %v3606 = vshrl.u32 %v3605, 7
  %v3607 = vsub.s32 0, %v3606
  %v3608 = vrot.slane %v3599, %v3607
  %v3609 = vlaneseq
  %v3610 = vshrl.u32 %v3609, 7
  %v3611 = vsub.s32 1, %v3610
  %v3612 = vrot.slane %v3599, %v3611
  %v3613 = vlaneseq
  %v3614 = vshrl.u32 %v3613, 7
  %v3615 = vsub.s32 2, %v3614
  %v3616 = vrot.slane %v3599, %v3615
  %v3617 = vlaneseq
  %v3618 = vshrl.u32 %v3617, 7
  %v3619 = vsub.s32 3, %v3618
  %v3620 = vrot.slane %v3599, %v3619
  %v3621 = vlaneseq
  %v3622 = vshrl.u32 %v3621, 7
  %v3623 = vsub.s32 4, %v3622
  %v3624 = vrot.slane %v3599, %v3623
  %v3625 = vlaneseq
  %v3626 = vshrl.u32 %v3625, 7
  %v3627 = vsub.s32 5, %v3626
  %v3628 = vrot.slane %v3599, %v3627
  %v3629 = vlaneseq
  %v3630 = vshrl.u32 %v3629, 7
  %v3631 = vsub.s32 6, %v3630
  %v3632 = vrot.slane %v3599, %v3631
  %v3633 = vlaneseq
  %v3634 = vshrl.u32 %v3633, 7
  %v3635 = vsub.s32 7, %v3634
  %v3636 = vrot.slane %v3599, %v3635
  %v3637 = vlaneseq
  %v3638 = vshrl.u32 %v3637, 7
  %v3639 = vsub.s32 0, %v3638
  %v3640 = vrot.slane %v3602, %v3639
  %v3641 = vlaneseq
  %v3642 = vshrl.u32 %v3641, 7
  %v3643 = vsub.s32 1, %v3642
  %v3644 = vrot.slane %v3602, %v3643
  %v3645 = vlaneseq
  %v3646 = vshrl.u32 %v3645, 7
  %v3647 = vsub.s32 2, %v3646
  %v3648 = vrot.slane %v3602, %v3647
  %v3649 = vlaneseq
  %v3650 = vshrl.u32 %v3649, 7
  %v3651 = vsub.s32 3, %v3650
  %v3652 = vrot.slane %v3602, %v3651
  %v3653 = vlaneseq
  %v3654 = vshrl.u32 %v3653, 7
  %v3655 = vsub.s32 4, %v3654
  %v3656 = vrot.slane %v3602, %v3655
  %v3657 = vlaneseq
  %v3658 = vshrl.u32 %v3657, 7
  %v3659 = vsub.s32 5, %v3658
  %v3660 = vrot.slane %v3602, %v3659
  %v3661 = vlaneseq
  %v3662 = vshrl.u32 %v3661, 7
  %v3663 = vsub.s32 6, %v3662
  %v3664 = vrot.slane %v3602, %v3663
  %v3665 = vlaneseq
  %v3666 = vshrl.u32 %v3665, 7
  %v3667 = vsub.s32 7, %v3666
  %v3668 = vrot.slane %v3602, %v3667
  %vm3685 = vcmp.ge.f32.partialorder %v3437, %v3608
  %vm3686 = vcmp.ge.f32.partialorder %v3438, %v3612
  %vm3687 = vcmp.ge.f32.partialorder %v3439, %v3616
  %vm3688 = vcmp.ge.f32.partialorder %v3440, %v3620
  %vm3689 = vcmp.ge.f32.partialorder %v3441, %v3624
  %vm3690 = vcmp.ge.f32.partialorder %v3442, %v3628
  %vm3691 = vcmp.ge.f32.partialorder %v3443, %v3632
  %vm3692 = vcmp.ge.f32.partialorder %v3444, %v3636
  %vm3693 = vcmp.ge.f32.partialorder %v3445, %v3640
  %vm3694 = vcmp.ge.f32.partialorder %v3446, %v3644
  %vm3695 = vcmp.ge.f32.partialorder %v3447, %v3648
  %vm3696 = vcmp.ge.f32.partialorder %v3448, %v3652
  %vm3697 = vcmp.ge.f32.partialorder %v3449, %v3656
  %vm3698 = vcmp.ge.f32.partialorder %v3450, %v3660
  %vm3699 = vcmp.ge.f32.partialorder %v3451, %v3664
  %vm3700 = vcmp.ge.f32.partialorder %v3452, %v3668
  %v3701 = vsel %vm3685, %v1551, 1073741824
  %v3702 = vsel %vm3686, %v1551, 1073741824
  %v3703 = vsel %vm3687, %v1551, 1073741824
  %v3704 = vsel %vm3688, %v1551, 1073741824
  %v3705 = vsel %vm3689, %v1551, 1073741824
  %v3706 = vsel %vm3690, %v1551, 1073741824
  %v3707 = vsel %vm3691, %v1551, 1073741824
  %v3708 = vsel %vm3692, %v1551, 1073741824
  %v3709 = vsel %vm3693, %v1551, 1073741824
  %v3710 = vsel %vm3694, %v1551, 1073741824
  %v3711 = vsel %vm3695, %v1551, 1073741824
  %v3712 = vsel %vm3696, %v1551, 1073741824
  %v3713 = vsel %vm3697, %v1551, 1073741824
  %v3714 = vsel %vm3698, %v1551, 1073741824
  %v3715 = vsel %vm3699, %v1551, 1073741824
  %v3716 = vsel %vm3700, %v1551, 1073741824
  %3717 = vset.pattern.permute.xlu0 0
  %3718 = vperm.xlu0 %3717, %v3701
  %v3719 = vpop.permute.xlu0 %3718
  %3720 = vset.pattern.permute.xlu0 0
  %3721 = vperm.xlu0 %3720, %v3702
  %v3722 = vpop.permute.xlu0 %3721
  %3723 = vset.pattern.permute.xlu0 0
  %3724 = vperm.xlu0 %3723, %v3703
  %v3725 = vpop.permute.xlu0 %3724
  %3726 = vset.pattern.permute.xlu0 0
  %3727 = vperm.xlu0 %3726, %v3704
  %v3728 = vpop.permute.xlu0 %3727
  %3729 = vset.pattern.permute.xlu0 0
  %3730 = vperm.xlu0 %3729, %v3705
  %v3731 = vpop.permute.xlu0 %3730
  %3732 = vset.pattern.permute.xlu0 0
  %3733 = vperm.xlu0 %3732, %v3706
  %v3734 = vpop.permute.xlu0 %3733
  %3735 = vset.pattern.permute.xlu0 0
  %3736 = vperm.xlu0 %3735, %v3707
  %v3737 = vpop.permute.xlu0 %3736
  %3738 = vset.pattern.permute.xlu0 0
  %3739 = vperm.xlu0 %3738, %v3708
  %v3740 = vpop.permute.xlu0 %3739
  %3741 = vset.pattern.permute.xlu0 0
  %3742 = vperm.xlu0 %3741, %v3709
  %v3743 = vpop.permute.xlu0 %3742
  %3744 = vset.pattern.permute.xlu0 0
  %3745 = vperm.xlu0 %3744, %v3710
  %v3746 = vpop.permute.xlu0 %3745
  %3747 = vset.pattern.permute.xlu0 0
  %3748 = vperm.xlu0 %3747, %v3711
  %v3749 = vpop.permute.xlu0 %3748
  %3750 = vset.pattern.permute.xlu0 0
  %3751 = vperm.xlu0 %3750, %v3712
  %v3752 = vpop.permute.xlu0 %3751
  %3753 = vset.pattern.permute.xlu0 0
  %3754 = vperm.xlu0 %3753, %v3713
  %v3755 = vpop.permute.xlu0 %3754
  %3756 = vset.pattern.permute.xlu0 0
  %3757 = vperm.xlu0 %3756, %v3714
  %v3758 = vpop.permute.xlu0 %3757
  %3759 = vset.pattern.permute.xlu0 0
  %3760 = vperm.xlu0 %3759, %v3715
  %v3761 = vpop.permute.xlu0 %3760
  %3762 = vset.pattern.permute.xlu0 0
  %3763 = vperm.xlu0 %3762, %v3716
  %v3764 = vpop.permute.xlu0 %3763
  %v3765 = vlaneseq
  %v3766 = vshrl.u32 %v3765, 7
  %v3767 = vsub.s32 %v968, %v3766
  %v3768 = vrot.slane %v3719, %v3767
  %v3769 = vlaneseq
  %v3770 = vshrl.u32 %v3769, 7
  %v3771 = vsub.s32 %v968, %v3770
  %v3772 = vrot.slane %v3722, %v3771
  %v3773 = vlaneseq
  %v3774 = vshrl.u32 %v3773, 7
  %v3775 = vsub.s32 %v968, %v3774
  %v3776 = vrot.slane %v3725, %v3775
  %v3777 = vlaneseq
  %v3778 = vshrl.u32 %v3777, 7
  %v3779 = vsub.s32 %v968, %v3778
  %v3780 = vrot.slane %v3728, %v3779
  %v3781 = vlaneseq
  %v3782 = vshrl.u32 %v3781, 7
  %v3783 = vsub.s32 %v968, %v3782
  %v3784 = vrot.slane %v3731, %v3783
  %v3785 = vlaneseq
  %v3786 = vshrl.u32 %v3785, 7
  %v3787 = vsub.s32 %v968, %v3786
  %v3788 = vrot.slane %v3734, %v3787
  %v3789 = vlaneseq
  %v3790 = vshrl.u32 %v3789, 7
  %v3791 = vsub.s32 %v968, %v3790
  %v3792 = vrot.slane %v3737, %v3791
  %v3793 = vlaneseq
  %v3794 = vshrl.u32 %v3793, 7
  %v3795 = vsub.s32 %v968, %v3794
  %v3796 = vrot.slane %v3740, %v3795
  %v3797 = vlaneseq
  %v3798 = vshrl.u32 %v3797, 7
  %v3799 = vsub.s32 %v968, %v3798
  %v3800 = vrot.slane %v3743, %v3799
  %v3801 = vlaneseq
  %v3802 = vshrl.u32 %v3801, 7
  %v3803 = vsub.s32 %v968, %v3802
  %v3804 = vrot.slane %v3746, %v3803
  %v3805 = vlaneseq
  %v3806 = vshrl.u32 %v3805, 7
  %v3807 = vsub.s32 %v968, %v3806
  %v3808 = vrot.slane %v3749, %v3807
  %v3809 = vlaneseq
  %v3810 = vshrl.u32 %v3809, 7
  %v3811 = vsub.s32 %v968, %v3810
  %v3812 = vrot.slane %v3752, %v3811
  %v3813 = vlaneseq
  %v3814 = vshrl.u32 %v3813, 7
  %v3815 = vsub.s32 %v968, %v3814
  %v3816 = vrot.slane %v3755, %v3815
  %v3817 = vlaneseq
  %v3818 = vshrl.u32 %v3817, 7
  %v3819 = vsub.s32 %v968, %v3818
  %v3820 = vrot.slane %v3758, %v3819
  %v3821 = vlaneseq
  %v3822 = vshrl.u32 %v3821, 7
  %v3823 = vsub.s32 %v968, %v3822
  %v3824 = vrot.slane %v3761, %v3823
  %v3825 = vlaneseq
  %v3826 = vshrl.u32 %v3825, 7
  %v3827 = vsub.s32 %v968, %v3826
  %v3828 = vrot.slane %v3764, %v3827
  %v3829 = vsel %vm1075, %v3772, %v3768
  %v3830 = vsel %vm1424, %v3776, %v3829
  %v3831 = vsel %vm1426, %v3780, %v3830
  %v3832 = vsel %vm1428, %v3784, %v3831
  %v3833 = vsel %vm1430, %v3788, %v3832
  %v3834 = vsel %vm1432, %v3792, %v3833
  %v3835 = vsel %vm1434, %v3796, %v3834
  %v3836 = vsel %vm1075, %v3804, %v3800
  %v3837 = vsel %vm1424, %v3808, %v3836
  %v3838 = vsel %vm1426, %v3812, %v3837
  %v3839 = vsel %vm1428, %v3816, %v3838
  %v3840 = vsel %vm1430, %v3820, %v3839
  %v3841 = vsel %vm1432, %v3824, %v3840
  %v3842 = vsel %vm1434, %v3828, %v3841
  %v3843 = vsel %vm963, %v3835, 2147483647
  %v3844 = vand.u32 %v3843, 65535
  %v3845 = vshra.s32 %v3843, 16
  %v3846 = vcvt.s32.f32 %v3844
  %v3847 = vcvt.s32.f32 %v3845
  %3848 = vmin.xlane.f32.xlu0 %v3847
  %v3849 = vpop.xlane.xlu0 %3848
  %vm3850 = vcmp.eq.f32.partialorder %v3847, %v3849
  %v3851 = vsel %vm3850, %v3846, inf
  %3852 = vmin.xlane.f32.xlu0 %v3851
  %v3853 = vpop.xlane.xlu0 %3852
  %v3854 = vcvt.f32.s32 %v3853
  %v3855 = vcvt.f32.s32 %v3849
  %v3856 = vshll.u32 %v3855, 16
  %v3857 = vadd.s32 %v3856, %v3854
  %v3858 = vsel %vm963, %v3842, 2147483647
  %v3859 = vand.u32 %v3858, 65535
  %v3860 = vshra.s32 %v3858, 16
  %v3861 = vcvt.s32.f32 %v3859
  %v3862 = vcvt.s32.f32 %v3860
  %3863 = vmin.xlane.f32.xlu0 %v3862
  %v3864 = vpop.xlane.xlu0 %3863
  %vm3865 = vcmp.eq.f32.partialorder %v3862, %v3864
  %v3866 = vsel %vm3865, %v3861, inf
  %3867 = vmin.xlane.f32.xlu0 %v3866
  %v3868 = vpop.xlane.xlu0 %3867
  %v3869 = vcvt.f32.s32 %v3868
  %v3870 = vcvt.f32.s32 %v3864
  %v3871 = vshll.u32 %v3870, 16
  %v3872 = vadd.s32 %v3871, %v3869
  %v3873 = vadd.f32 %v3599, %v3406
  %v3874 = vadd.f32 %v3602, %v3413
  %s3875 = scalar_lea.vmem %s2, 14
  %v3876 = vld [vmem:[%s3875] sm:$0x3]
  %v3879 = vunpack.c.l.s4 1966171168
  %v3880 = vunpack.c.0.s8 %v3879
  %v3881 = vlaneseq
  %v3882 = vshrl.u32 %v3881, 7
  %v3883 = vsub.s32 %v3880, %v3882
  %v3884 = vrot.slane %v3436, %v3883
  %v3885 = vcombine.high %v3884, %v3884
  %v3887 = vunpack.c.l.s4 1966171168
  %v3888 = vunpack.c.0.s8 %v3887
  %v3889 = vlaneseq
  %v3890 = vshrl.u32 %v3889, 7
  %v3891 = vsub.s32 %v3888, %v3890
  %v3892 = vrot.slane %v3884, %v3891
  %v3894 = vunpack.c.l.s4 1966171168
  %v3895 = vunpack.c.0.s8 %v3894
  %v3896 = vlaneseq
  %v3897 = vshrl.u32 %v3896, 7
  %v3898 = vsub.s32 %v3895, %v3897
  %v3899 = vrot.slane %v3885, %v3898
  %v3900 = vlaneseq
  %v3901 = vshrl.u32 %v3900, 7
  %v3902 = vsub.s32 0, %v3901
  %v3903 = vrot.slane %v3892, %v3902
  %v3904 = vlaneseq
  %v3905 = vshrl.u32 %v3904, 7
  %v3906 = vsub.s32 0, %v3905
  %v3907 = vrot.slane %v3899, %v3906
  %v3910 = vadd.f32 %v3903, %v966
  %v3911 = vadd.f32 %v3907, %v966
  %v3912 = vsel %vm963, %v3910, -inf
  %3913 = vmax.xlane.f32.xlu0 %v3912
  %v3914 = vpop.xlane.xlu0 %3913
  %v3915 = vsel %vm963, %v3911, -inf
  %3916 = vmax.xlane.f32.xlu0 %v3915
  %v3917 = vpop.xlane.xlu0 %3916
  %v3918 = vsub.f32 %v3910, %v3914
  %v3919 = vsub.f32 %v3911, %v3917
  %v3920 = vmul.f32 %v3918, 1.442695
  %v3921 = vpow.pop %v3920
  %v3922 = vmul.f32 %v3919, 1.442695
  %v3923 = vpow.pop %v3922
  %v3924 = vsel %vm963, %v3921, 0.0
  %3925 = vadd.xlane.f32.xlu0 %v3924
  %v3926 = vpop.xlane.xlu0 %3925
  %v3927 = vsel %vm963, %v3923, 0.0
  %3928 = vadd.xlane.f32.xlu0 %v3927
  %v3929 = vpop.xlane.xlu0 %3928
  %v3930 = vlog2.pop %v3926
  %v3931 = vmul.f32 %v3930, 0.6931472
  %v3932 = vlog2.pop %v3929
  %v3933 = vmul.f32 %v3932, 0.6931472
  %v3934 = vadd.f32 %v3914, %v3931
  %v3935 = vadd.f32 %v3917, %v3933
  %vm3936 = vcmp.gt.f32.partialorder %v3876, 0.5
  %v3937 = vlaneseq
  %v3938 = vshrl.u32 %v3937, 7
  %v3939 = vsub.s32 6, %v3938
  %v3940 = vrot.slane %v960, %v3939
  %3942 = vbcast.lane.b32.xlu0 %v3940, 256
  %v3943 = vpop.permute.xlu0 %3942
  %v3944 = vlaneseq
  %v3945 = vshrl.u32 %v3944, 7
  %v3946 = vsub.s32 7, %v3945
  %v3947 = vrot.slane %v960, %v3946
  %3949 = vbcast.lane.b32.xlu0 %v3947, 256
  %v3950 = vpop.permute.xlu0 %3949
  %v3953 = vadd.f32 %v3934, %v3943
  %v3954 = vadd.f32 %v3935, %v3950
  %3957 = vset.pattern.permute.xlu0 0
  %3958 = vperm.xlu0 %3957, %v3953
  %v3959 = vpop.permute.xlu0 %3958
  %3960 = vset.pattern.permute.xlu0 0
  %3961 = vperm.xlu0 %3960, %v3954
  %v3962 = vpop.permute.xlu0 %3961
  %v3963 = vlaneseq
  %v3964 = vshrl.u32 %v3963, 7
  %v3965 = vsub.s32 %v968, %v3964
  %v3966 = vrot.slane %v3959, %v3965
  %v3967 = vlaneseq
  %v3968 = vshrl.u32 %v3967, 7
  %v3969 = vsub.s32 %v968, %v3968
  %v3970 = vrot.slane %v3962, %v3969
  %v3971 = vsel %vm1075, %v3970, %v3966
  %v3973 = vsel %vm3936, %v3971, %v3436
  %v3974 = vadd.f32 %v3873, %v1221
  %v3975 = vadd.f32 %v3873, %v1228
  %v3976 = vadd.f32 %v3873, %v1235
  %v3977 = vadd.f32 %v3873, %v1242
  %v3978 = vadd.f32 %v3873, %v1249
  %v3979 = vadd.f32 %v3873, %v1256
  %v3980 = vadd.f32 %v3873, %v1263
  %v3981 = vadd.f32 %v3873, %v1270
  %v3982 = vadd.f32 %v3874, %v1221
  %v3983 = vadd.f32 %v3874, %v1228
  %v3984 = vadd.f32 %v3874, %v1235
  %v3985 = vadd.f32 %v3874, %v1242
  %v3986 = vadd.f32 %v3874, %v1249
  %v3987 = vadd.f32 %v3874, %v1256
  %v3988 = vadd.f32 %v3874, %v1263
  %v3989 = vadd.f32 %v3874, %v1270
  %4006 = vset.pattern.permute.xlu0 0
  %4007 = vperm.xlu0 %4006, %v3974
  %v4008 = vpop.permute.xlu0 %4007
  %4009 = vset.pattern.permute.xlu0 0
  %4010 = vperm.xlu0 %4009, %v3975
  %v4011 = vpop.permute.xlu0 %4010
  %4012 = vset.pattern.permute.xlu0 0
  %4013 = vperm.xlu0 %4012, %v3976
  %v4014 = vpop.permute.xlu0 %4013
  %4015 = vset.pattern.permute.xlu0 0
  %4016 = vperm.xlu0 %4015, %v3977
  %v4017 = vpop.permute.xlu0 %4016
  %4018 = vset.pattern.permute.xlu0 0
  %4019 = vperm.xlu0 %4018, %v3978
  %v4020 = vpop.permute.xlu0 %4019
  %4021 = vset.pattern.permute.xlu0 0
  %4022 = vperm.xlu0 %4021, %v3979
  %v4023 = vpop.permute.xlu0 %4022
  %4024 = vset.pattern.permute.xlu0 0
  %4025 = vperm.xlu0 %4024, %v3980
  %v4026 = vpop.permute.xlu0 %4025
  %4027 = vset.pattern.permute.xlu0 0
  %4028 = vperm.xlu0 %4027, %v3981
  %v4029 = vpop.permute.xlu0 %4028
  %4030 = vset.pattern.permute.xlu0 0
  %4031 = vperm.xlu0 %4030, %v3982
  %v4032 = vpop.permute.xlu0 %4031
  %4033 = vset.pattern.permute.xlu0 0
  %4034 = vperm.xlu0 %4033, %v3983
  %v4035 = vpop.permute.xlu0 %4034
  %4036 = vset.pattern.permute.xlu0 0
  %4037 = vperm.xlu0 %4036, %v3984
  %v4038 = vpop.permute.xlu0 %4037
  %4039 = vset.pattern.permute.xlu0 0
  %4040 = vperm.xlu0 %4039, %v3985
  %v4041 = vpop.permute.xlu0 %4040
  %4042 = vset.pattern.permute.xlu0 0
  %4043 = vperm.xlu0 %4042, %v3986
  %v4044 = vpop.permute.xlu0 %4043
  %4045 = vset.pattern.permute.xlu0 0
  %4046 = vperm.xlu0 %4045, %v3987
  %v4047 = vpop.permute.xlu0 %4046
  %4048 = vset.pattern.permute.xlu0 0
  %4049 = vperm.xlu0 %4048, %v3988
  %v4050 = vpop.permute.xlu0 %4049
  %4051 = vset.pattern.permute.xlu0 0
  %4052 = vperm.xlu0 %4051, %v3989
  %v4053 = vpop.permute.xlu0 %4052
  %v4054 = vlaneseq
  %v4055 = vshrl.u32 %v4054, 7
  %v4056 = vsub.s32 %v968, %v4055
  %v4057 = vrot.slane %v4008, %v4056
  %v4058 = vlaneseq
  %v4059 = vshrl.u32 %v4058, 7
  %v4060 = vsub.s32 %v968, %v4059
  %v4061 = vrot.slane %v4011, %v4060
  %v4062 = vlaneseq
  %v4063 = vshrl.u32 %v4062, 7
  %v4064 = vsub.s32 %v968, %v4063
  %v4065 = vrot.slane %v4014, %v4064
  %v4066 = vlaneseq
  %v4067 = vshrl.u32 %v4066, 7
  %v4068 = vsub.s32 %v968, %v4067
  %v4069 = vrot.slane %v4017, %v4068
  %v4070 = vlaneseq
  %v4071 = vshrl.u32 %v4070, 7
  %v4072 = vsub.s32 %v968, %v4071
  %v4073 = vrot.slane %v4020, %v4072
  %v4074 = vlaneseq
  %v4075 = vshrl.u32 %v4074, 7
  %v4076 = vsub.s32 %v968, %v4075
  %v4077 = vrot.slane %v4023, %v4076
  %v4078 = vlaneseq
  %v4079 = vshrl.u32 %v4078, 7
  %v4080 = vsub.s32 %v968, %v4079
  %v4081 = vrot.slane %v4026, %v4080
  %v4082 = vlaneseq
  %v4083 = vshrl.u32 %v4082, 7
  %v4084 = vsub.s32 %v968, %v4083
  %v4085 = vrot.slane %v4029, %v4084
  %v4086 = vlaneseq
  %v4087 = vshrl.u32 %v4086, 7
  %v4088 = vsub.s32 %v968, %v4087
  %v4089 = vrot.slane %v4032, %v4088
  %v4090 = vlaneseq
  %v4091 = vshrl.u32 %v4090, 7
  %v4092 = vsub.s32 %v968, %v4091
  %v4093 = vrot.slane %v4035, %v4092
  %v4094 = vlaneseq
  %v4095 = vshrl.u32 %v4094, 7
  %v4096 = vsub.s32 %v968, %v4095
  %v4097 = vrot.slane %v4038, %v4096
  %v4098 = vlaneseq
  %v4099 = vshrl.u32 %v4098, 7
  %v4100 = vsub.s32 %v968, %v4099
  %v4101 = vrot.slane %v4041, %v4100
  %v4102 = vlaneseq
  %v4103 = vshrl.u32 %v4102, 7
  %v4104 = vsub.s32 %v968, %v4103
  %v4105 = vrot.slane %v4044, %v4104
  %v4106 = vlaneseq
  %v4107 = vshrl.u32 %v4106, 7
  %v4108 = vsub.s32 %v968, %v4107
  %v4109 = vrot.slane %v4047, %v4108
  %v4110 = vlaneseq
  %v4111 = vshrl.u32 %v4110, 7
  %v4112 = vsub.s32 %v968, %v4111
  %v4113 = vrot.slane %v4050, %v4112
  %v4114 = vlaneseq
  %v4115 = vshrl.u32 %v4114, 7
  %v4116 = vsub.s32 %v968, %v4115
  %v4117 = vrot.slane %v4053, %v4116
  %v4118 = vsel %vm1075, %v4061, %v4057
  %v4119 = vsel %vm1424, %v4065, %v4118
  %v4120 = vsel %vm1426, %v4069, %v4119
  %v4121 = vsel %vm1428, %v4073, %v4120
  %v4122 = vsel %vm1430, %v4077, %v4121
  %v4123 = vsel %vm1432, %v4081, %v4122
  %v4124 = vsel %vm1434, %v4085, %v4123
  %v4125 = vsel %vm1075, %v4093, %v4089
  %v4126 = vsel %vm1424, %v4097, %v4125
  %v4127 = vsel %vm1426, %v4101, %v4126
  %v4128 = vsel %vm1428, %v4105, %v4127
  %v4129 = vsel %vm1430, %v4109, %v4128
  %v4130 = vsel %vm1432, %v4113, %v4129
  %v4131 = vsel %vm1434, %v4117, %v4130
  %v4134 = vsel %vm963, %v4124, -inf
  %4135 = vmax.xlane.f32.xlu0 %v4134
  %v4136 = vpop.xlane.xlu0 %4135
  %v4137 = vsel %vm963, %v4131, -inf
  %4138 = vmax.xlane.f32.xlu0 %v4137
  %v4139 = vpop.xlane.xlu0 %4138
  %v4142 = vlaneseq
  %v4143 = vshrl.u32 %v4142, 7
  %v4144 = vsub.s32 0, %v4143
  %v4145 = vrot.slane %v4136, %v4144
  %v4146 = vlaneseq
  %v4147 = vshrl.u32 %v4146, 7
  %v4148 = vsub.s32 1, %v4147
  %v4149 = vrot.slane %v4136, %v4148
  %v4150 = vlaneseq
  %v4151 = vshrl.u32 %v4150, 7
  %v4152 = vsub.s32 2, %v4151
  %v4153 = vrot.slane %v4136, %v4152
  %v4154 = vlaneseq
  %v4155 = vshrl.u32 %v4154, 7
  %v4156 = vsub.s32 3, %v4155
  %v4157 = vrot.slane %v4136, %v4156
  %v4158 = vlaneseq
  %v4159 = vshrl.u32 %v4158, 7
  %v4160 = vsub.s32 4, %v4159
  %v4161 = vrot.slane %v4136, %v4160
  %v4162 = vlaneseq
  %v4163 = vshrl.u32 %v4162, 7
  %v4164 = vsub.s32 5, %v4163
  %v4165 = vrot.slane %v4136, %v4164
  %v4166 = vlaneseq
  %v4167 = vshrl.u32 %v4166, 7
  %v4168 = vsub.s32 6, %v4167
  %v4169 = vrot.slane %v4136, %v4168
  %v4170 = vlaneseq
  %v4171 = vshrl.u32 %v4170, 7
  %v4172 = vsub.s32 7, %v4171
  %v4173 = vrot.slane %v4136, %v4172
  %v4174 = vlaneseq
  %v4175 = vshrl.u32 %v4174, 7
  %v4176 = vsub.s32 0, %v4175
  %v4177 = vrot.slane %v4139, %v4176
  %v4178 = vlaneseq
  %v4179 = vshrl.u32 %v4178, 7
  %v4180 = vsub.s32 1, %v4179
  %v4181 = vrot.slane %v4139, %v4180
  %v4182 = vlaneseq
  %v4183 = vshrl.u32 %v4182, 7
  %v4184 = vsub.s32 2, %v4183
  %v4185 = vrot.slane %v4139, %v4184
  %v4186 = vlaneseq
  %v4187 = vshrl.u32 %v4186, 7
  %v4188 = vsub.s32 3, %v4187
  %v4189 = vrot.slane %v4139, %v4188
  %v4190 = vlaneseq
  %v4191 = vshrl.u32 %v4190, 7
  %v4192 = vsub.s32 4, %v4191
  %v4193 = vrot.slane %v4139, %v4192
  %v4194 = vlaneseq
  %v4195 = vshrl.u32 %v4194, 7
  %v4196 = vsub.s32 5, %v4195
  %v4197 = vrot.slane %v4139, %v4196
  %v4198 = vlaneseq
  %v4199 = vshrl.u32 %v4198, 7
  %v4200 = vsub.s32 6, %v4199
  %v4201 = vrot.slane %v4139, %v4200
  %v4202 = vlaneseq
  %v4203 = vshrl.u32 %v4202, 7
  %v4204 = vsub.s32 7, %v4203
  %v4205 = vrot.slane %v4139, %v4204
  %vm4222 = vcmp.ge.f32.partialorder %v3974, %v4145
  %vm4223 = vcmp.ge.f32.partialorder %v3975, %v4149
  %vm4224 = vcmp.ge.f32.partialorder %v3976, %v4153
  %vm4225 = vcmp.ge.f32.partialorder %v3977, %v4157
  %vm4226 = vcmp.ge.f32.partialorder %v3978, %v4161
  %vm4227 = vcmp.ge.f32.partialorder %v3979, %v4165
  %vm4228 = vcmp.ge.f32.partialorder %v3980, %v4169
  %vm4229 = vcmp.ge.f32.partialorder %v3981, %v4173
  %vm4230 = vcmp.ge.f32.partialorder %v3982, %v4177
  %vm4231 = vcmp.ge.f32.partialorder %v3983, %v4181
  %vm4232 = vcmp.ge.f32.partialorder %v3984, %v4185
  %vm4233 = vcmp.ge.f32.partialorder %v3985, %v4189
  %vm4234 = vcmp.ge.f32.partialorder %v3986, %v4193
  %vm4235 = vcmp.ge.f32.partialorder %v3987, %v4197
  %vm4236 = vcmp.ge.f32.partialorder %v3988, %v4201
  %vm4237 = vcmp.ge.f32.partialorder %v3989, %v4205
  %v4238 = vsel %vm4222, %v1551, 1073741824
  %v4239 = vsel %vm4223, %v1551, 1073741824
  %v4240 = vsel %vm4224, %v1551, 1073741824
  %v4241 = vsel %vm4225, %v1551, 1073741824
  %v4242 = vsel %vm4226, %v1551, 1073741824
  %v4243 = vsel %vm4227, %v1551, 1073741824
  %v4244 = vsel %vm4228, %v1551, 1073741824
  %v4245 = vsel %vm4229, %v1551, 1073741824
  %v4246 = vsel %vm4230, %v1551, 1073741824
  %v4247 = vsel %vm4231, %v1551, 1073741824
  %v4248 = vsel %vm4232, %v1551, 1073741824
  %v4249 = vsel %vm4233, %v1551, 1073741824
  %v4250 = vsel %vm4234, %v1551, 1073741824
  %v4251 = vsel %vm4235, %v1551, 1073741824
  %v4252 = vsel %vm4236, %v1551, 1073741824
  %v4253 = vsel %vm4237, %v1551, 1073741824
  %4254 = vset.pattern.permute.xlu0 0
  %4255 = vperm.xlu0 %4254, %v4238
  %v4256 = vpop.permute.xlu0 %4255
  %4257 = vset.pattern.permute.xlu0 0
  %4258 = vperm.xlu0 %4257, %v4239
  %v4259 = vpop.permute.xlu0 %4258
  %4260 = vset.pattern.permute.xlu0 0
  %4261 = vperm.xlu0 %4260, %v4240
  %v4262 = vpop.permute.xlu0 %4261
  %4263 = vset.pattern.permute.xlu0 0
  %4264 = vperm.xlu0 %4263, %v4241
  %v4265 = vpop.permute.xlu0 %4264
  %4266 = vset.pattern.permute.xlu0 0
  %4267 = vperm.xlu0 %4266, %v4242
  %v4268 = vpop.permute.xlu0 %4267
  %4269 = vset.pattern.permute.xlu0 0
  %4270 = vperm.xlu0 %4269, %v4243
  %v4271 = vpop.permute.xlu0 %4270
  %4272 = vset.pattern.permute.xlu0 0
  %4273 = vperm.xlu0 %4272, %v4244
  %v4274 = vpop.permute.xlu0 %4273
  %4275 = vset.pattern.permute.xlu0 0
  %4276 = vperm.xlu0 %4275, %v4245
  %v4277 = vpop.permute.xlu0 %4276
  %4278 = vset.pattern.permute.xlu0 0
  %4279 = vperm.xlu0 %4278, %v4246
  %v4280 = vpop.permute.xlu0 %4279
  %4281 = vset.pattern.permute.xlu0 0
  %4282 = vperm.xlu0 %4281, %v4247
  %v4283 = vpop.permute.xlu0 %4282
  %4284 = vset.pattern.permute.xlu0 0
  %4285 = vperm.xlu0 %4284, %v4248
  %v4286 = vpop.permute.xlu0 %4285
  %4287 = vset.pattern.permute.xlu0 0
  %4288 = vperm.xlu0 %4287, %v4249
  %v4289 = vpop.permute.xlu0 %4288
  %4290 = vset.pattern.permute.xlu0 0
  %4291 = vperm.xlu0 %4290, %v4250
  %v4292 = vpop.permute.xlu0 %4291
  %4293 = vset.pattern.permute.xlu0 0
  %4294 = vperm.xlu0 %4293, %v4251
  %v4295 = vpop.permute.xlu0 %4294
  %4296 = vset.pattern.permute.xlu0 0
  %4297 = vperm.xlu0 %4296, %v4252
  %v4298 = vpop.permute.xlu0 %4297
  %4299 = vset.pattern.permute.xlu0 0
  %4300 = vperm.xlu0 %4299, %v4253
  %v4301 = vpop.permute.xlu0 %4300
  %v4302 = vlaneseq
  %v4303 = vshrl.u32 %v4302, 7
  %v4304 = vsub.s32 %v968, %v4303
  %v4305 = vrot.slane %v4256, %v4304
  %v4306 = vlaneseq
  %v4307 = vshrl.u32 %v4306, 7
  %v4308 = vsub.s32 %v968, %v4307
  %v4309 = vrot.slane %v4259, %v4308
  %v4310 = vlaneseq
  %v4311 = vshrl.u32 %v4310, 7
  %v4312 = vsub.s32 %v968, %v4311
  %v4313 = vrot.slane %v4262, %v4312
  %v4314 = vlaneseq
  %v4315 = vshrl.u32 %v4314, 7
  %v4316 = vsub.s32 %v968, %v4315
  %v4317 = vrot.slane %v4265, %v4316
  %v4318 = vlaneseq
  %v4319 = vshrl.u32 %v4318, 7
  %v4320 = vsub.s32 %v968, %v4319
  %v4321 = vrot.slane %v4268, %v4320
  %v4322 = vlaneseq
  %v4323 = vshrl.u32 %v4322, 7
  %v4324 = vsub.s32 %v968, %v4323
  %v4325 = vrot.slane %v4271, %v4324
  %v4326 = vlaneseq
  %v4327 = vshrl.u32 %v4326, 7
  %v4328 = vsub.s32 %v968, %v4327
  %v4329 = vrot.slane %v4274, %v4328
  %v4330 = vlaneseq
  %v4331 = vshrl.u32 %v4330, 7
  %v4332 = vsub.s32 %v968, %v4331
  %v4333 = vrot.slane %v4277, %v4332
  %v4334 = vlaneseq
  %v4335 = vshrl.u32 %v4334, 7
  %v4336 = vsub.s32 %v968, %v4335
  %v4337 = vrot.slane %v4280, %v4336
  %v4338 = vlaneseq
  %v4339 = vshrl.u32 %v4338, 7
  %v4340 = vsub.s32 %v968, %v4339
  %v4341 = vrot.slane %v4283, %v4340
  %v4342 = vlaneseq
  %v4343 = vshrl.u32 %v4342, 7
  %v4344 = vsub.s32 %v968, %v4343
  %v4345 = vrot.slane %v4286, %v4344
  %v4346 = vlaneseq
  %v4347 = vshrl.u32 %v4346, 7
  %v4348 = vsub.s32 %v968, %v4347
  %v4349 = vrot.slane %v4289, %v4348
  %v4350 = vlaneseq
  %v4351 = vshrl.u32 %v4350, 7
  %v4352 = vsub.s32 %v968, %v4351
  %v4353 = vrot.slane %v4292, %v4352
  %v4354 = vlaneseq
  %v4355 = vshrl.u32 %v4354, 7
  %v4356 = vsub.s32 %v968, %v4355
  %v4357 = vrot.slane %v4295, %v4356
  %v4358 = vlaneseq
  %v4359 = vshrl.u32 %v4358, 7
  %v4360 = vsub.s32 %v968, %v4359
  %v4361 = vrot.slane %v4298, %v4360
  %v4362 = vlaneseq
  %v4363 = vshrl.u32 %v4362, 7
  %v4364 = vsub.s32 %v968, %v4363
  %v4365 = vrot.slane %v4301, %v4364
  %v4366 = vsel %vm1075, %v4309, %v4305
  %v4367 = vsel %vm1424, %v4313, %v4366
  %v4368 = vsel %vm1426, %v4317, %v4367
  %v4369 = vsel %vm1428, %v4321, %v4368
  %v4370 = vsel %vm1430, %v4325, %v4369
  %v4371 = vsel %vm1432, %v4329, %v4370
  %v4372 = vsel %vm1434, %v4333, %v4371
  %v4373 = vsel %vm1075, %v4341, %v4337
  %v4374 = vsel %vm1424, %v4345, %v4373
  %v4375 = vsel %vm1426, %v4349, %v4374
  %v4376 = vsel %vm1428, %v4353, %v4375
  %v4377 = vsel %vm1430, %v4357, %v4376
  %v4378 = vsel %vm1432, %v4361, %v4377
  %v4379 = vsel %vm1434, %v4365, %v4378
  %v4380 = vsel %vm963, %v4372, 2147483647
  %v4381 = vand.u32 %v4380, 65535
  %v4382 = vshra.s32 %v4380, 16
  %v4383 = vcvt.s32.f32 %v4381
  %v4384 = vcvt.s32.f32 %v4382
  %4385 = vmin.xlane.f32.xlu0 %v4384
  %v4386 = vpop.xlane.xlu0 %4385
  %vm4387 = vcmp.eq.f32.partialorder %v4384, %v4386
  %v4388 = vsel %vm4387, %v4383, inf
  %4389 = vmin.xlane.f32.xlu0 %v4388
  %v4390 = vpop.xlane.xlu0 %4389
  %v4391 = vcvt.f32.s32 %v4390
  %v4392 = vcvt.f32.s32 %v4386
  %v4393 = vshll.u32 %v4392, 16
  %v4394 = vadd.s32 %v4393, %v4391
  %v4395 = vsel %vm963, %v4379, 2147483647
  %v4396 = vand.u32 %v4395, 65535
  %v4397 = vshra.s32 %v4395, 16
  %v4398 = vcvt.s32.f32 %v4396
  %v4399 = vcvt.s32.f32 %v4397
  %4400 = vmin.xlane.f32.xlu0 %v4399
  %v4401 = vpop.xlane.xlu0 %4400
  %vm4402 = vcmp.eq.f32.partialorder %v4399, %v4401
  %v4403 = vsel %vm4402, %v4398, inf
  %4404 = vmin.xlane.f32.xlu0 %v4403
  %v4405 = vpop.xlane.xlu0 %4404
  %v4406 = vcvt.f32.s32 %v4405
  %v4407 = vcvt.f32.s32 %v4401
  %v4408 = vshll.u32 %v4407, 16
  %v4409 = vadd.s32 %v4408, %v4406
  %v4410 = vadd.f32 %v4136, %v3943
  %v4411 = vadd.f32 %v4139, %v3950
  %v4412 = vlaneseq
  %v4413 = vshrl.u32 %v4412, 7
  %v4414 = vsub.s32 %v968, %v4413
  %v4415 = vrot.slane %v1097, %v4414
  %v4416 = vlaneseq
  %v4417 = vshrl.u32 %v4416, 7
  %v4418 = vsub.s32 %v968, %v4417
  %v4419 = vrot.slane %v1112, %v4418
  %v4420 = vsel %vm1426, %v4419, %v4415
  %v4421 = vlaneseq
  %v4422 = vshrl.u32 %v4421, 7
  %v4423 = vsub.s32 %v968, %v4422
  %v4424 = vrot.slane %v1708, %v4423
  %v4425 = vlaneseq
  %v4426 = vshrl.u32 %v4425, 7
  %v4427 = vsub.s32 %v968, %v4426
  %v4428 = vrot.slane %v1723, %v4427
  %v4429 = vsel %vm1430, %v4428, %v4424
  %v4430 = vlaneseq
  %v4431 = vshrl.u32 %v4430, 7
  %v4432 = vsub.s32 %v968, %v4431
  %v4433 = vrot.slane %v2245, %v4432
  %v4434 = vlaneseq
  %v4435 = vshrl.u32 %v4434, 7
  %v4436 = vsub.s32 %v968, %v4435
  %v4437 = vrot.slane %v2260, %v4436
  %v4438 = vsel %vm1434, %v4437, %v4433
  %v4439 = vlaneseq
  %v4440 = vshrl.u32 %v4439, 7
  %v4441 = vsub.s32 %v968, %v4440
  %v4442 = vrot.slane %v2783, %v4441
  %v4443 = vlaneseq
  %v4444 = vshrl.u32 %v4443, 7
  %v4445 = vsub.s32 %v968, %v4444
  %v4446 = vrot.slane %v2798, %v4445
  %v4447 = vsel %vm1075, %v4446, %v4442
  %v4448 = vlaneseq
  %v4449 = vshrl.u32 %v4448, 7
  %v4450 = vsub.s32 %v968, %v4449
  %v4451 = vrot.slane %v3320, %v4450
  %v4452 = vlaneseq
  %v4453 = vshrl.u32 %v4452, 7
  %v4454 = vsub.s32 %v968, %v4453
  %v4455 = vrot.slane %v3335, %v4454
  %v4456 = vsel %vm1426, %v4455, %v4451
  %v4457 = vlaneseq
  %v4458 = vshrl.u32 %v4457, 7
  %v4459 = vsub.s32 %v968, %v4458
  %v4460 = vrot.slane %v3857, %v4459
  %v4461 = vlaneseq
  %v4462 = vshrl.u32 %v4461, 7
  %v4463 = vsub.s32 %v968, %v4462
  %v4464 = vrot.slane %v3872, %v4463
  %v4465 = vsel %vm1430, %v4464, %v4460
  %v4466 = vlaneseq
  %v4467 = vshrl.u32 %v4466, 7
  %v4468 = vsub.s32 %v968, %v4467
  %v4469 = vrot.slane %v4394, %v4468
  %v4470 = vlaneseq
  %v4471 = vshrl.u32 %v4470, 7
  %v4472 = vsub.s32 %v968, %v4471
  %v4473 = vrot.slane %v4409, %v4472
  %v4474 = vsel %vm1434, %v4473, %v4469
  %v4475 = vsel %vm886, 0, %v4420
  %v4476 = vsel %vm888, %v4475, %v4429
  %v4477 = vsel %vm890, %v4476, %v4438
  %v4478 = vsel %vm886, %v4447, %v4456
  %v4479 = vsel %vm888, %v4478, %v4465
  %v4480 = vsel %vm890, %v4479, %v4474
  %4481 = vst.msk [vmem:[%s14] sm:$0xff] %vm963, %v4477
  %4482 = vst.msk [vmem:[%s14 + $0x8] sm:$0xff] %vm963, %v4480
  %v4484 = vlaneseq
  %v4485 = vshrl.u32 %v4484, 7
  %v4486 = vsub.s32 0, %v4485
  %v4487 = vrot.slane %v970, %v4486
  %v4489 = vadd.f32 %v3973, %v4487
  %vm4490 = vcmask 58368
  %v4491 = vsel %vm4490, %v4489, -inf
  %4492 = vmax.xlane.f32.xlu0 %v4491
  %v4493 = vpop.xlane.xlu0 %4492
  %v4494 = vsub.f32 %v4489, %v4493
  %v4495 = vmul.f32 %v4494, 1.442695
  %v4496 = vpow.pop %v4495
  %v4497 = vsel %vm4490, %v4496, 0.0
  %4498 = vadd.xlane.f32.xlu0 %v4497
  %v4499 = vpop.xlane.xlu0 %4498
  %v4500 = vlog2.pop %v4499
  %v4501 = vmul.f32 %v4500, 0.6931472
  %v4502 = vadd.f32 %v4493, %v4501
  %4503 = vst.msk [vmem:[%s13] sm:$0x3] %vm4490, %v4502
  %4505 = vbcast.lane.b32.xlu0 %v4487, 256
  %v4506 = vpop.permute.xlu0 %4505
  %v4508 = vadd.f32 %v4410, %v4506
  %v4509 = vadd.f32 %v4411, %v4506
  %4512 = vset.pattern.permute.xlu0 0
  %4513 = vperm.xlu0 %4512, %v4508
  %v4514 = vpop.permute.xlu0 %4513
  %4515 = vset.pattern.permute.xlu0 0
  %4516 = vperm.xlu0 %4515, %v4509
  %v4517 = vpop.permute.xlu0 %4516
  %v4518 = vlaneseq
  %v4519 = vshrl.u32 %v4518, 7
  %v4520 = vsub.s32 %v968, %v4519
  %v4521 = vrot.slane %v4514, %v4520
  %v4522 = vlaneseq
  %v4523 = vshrl.u32 %v4522, 7
  %v4524 = vsub.s32 %v968, %v4523
  %v4525 = vrot.slane %v4517, %v4524
  %v4526 = vsel %vm1075, %v4525, %v4521
  %4528 = vst.msk [vmem:[%s15] sm:$0x3] %vm4490, %v4526
  // Predicated region
  $region50: #{gru_crf_forward.1} parent=0 // pred_check
    _
  $region51: #{gru_crf_forward.1} parent=0 // pred_check_branch
    %4530 = sbr.rel (0) target = $region53
  $region52: #{gru_crf_forward.1} parent=0 // pred_region
    _
  $region53: #{gru_crf_forward.1} parent=0 // pred_fallthru
    _
  // Predicated region
  $region54: #{gru_crf_forward.1} parent=0 // pred_check
    _
  $region55: #{gru_crf_forward.1} parent=0 // pred_check_branch
    %4532 = sbr.rel (0) target = $region57
  $region56: #{gru_crf_forward.1} parent=0 // pred_region
    _
  $region57: #{gru_crf_forward.1} parent=0 // pred_fallthru
    _
  // Predicated region
  $region58: #{gru_crf_forward.1} parent=0 // pred_check
    _
  $region59: #{gru_crf_forward.1} parent=0 // pred_check_branch
    %4534 = sbr.rel (0) target = $region61
  $region60: #{gru_crf_forward.1} parent=0 // pred_region
    _
  $region61: #{gru_crf_forward.1} parent=0 // pred_fallthru
    _
  // Predicated region
  $region62: #{gru_crf_forward.1} parent=0 // pred_check
    _
  $region63: #{gru_crf_forward.1} parent=0 // pred_check_branch
    %4536 = sbr.rel (0) target = $region65
  $region64: #{gru_crf_forward.1} parent=0 // pred_region
    _
  $region65: #{gru_crf_forward.1} parent=0 // pred_fallthru
    _
  // Predicated region
  $region66: #{gru_crf_forward.1} parent=0 // pred_check
    _
  $region67: #{gru_crf_forward.1} parent=0 // pred_check_branch
    %4538 = sbr.rel (0) target = $region69
  $region68: #{gru_crf_forward.1} parent=0 // pred_region
    _
  $region69: #{gru_crf_forward.1} parent=0 // pred_fallthru
    _
  // Predicated region
  $region70: #{gru_crf_forward.1} parent=0 // pred_check
    _
  $region71: #{gru_crf_forward.1} parent=0 // pred_check_branch
    %4540 = sbr.rel (0) target = $region73
  $region72: #{gru_crf_forward.1} parent=0 // pred_region
    _
  $region73: #{gru_crf_forward.1} parent=0 // pred_fallthru
    _
  // Predicated region
  $region74: #{gru_crf_forward.1} parent=0 // pred_check
    _
  $region75: #{gru_crf_forward.1} parent=0 // pred_check_branch
    %4542 = sbr.rel (0) target = $region77
  $region76: #{gru_crf_forward.1} parent=0 // pred_region
    _
  $region77: #{gru_crf_forward.1} parent=0 // pred_fallthru
    _
  // Predicated region
  $region78: #{gru_crf_forward.1} parent=0 // pred_check
    _
  $region79: #{gru_crf_forward.1} parent=0 // pred_check_branch
    %4544 = sbr.rel (0) target = $region81
  $region80: #{gru_crf_forward.1} parent=0 // pred_region
    _
  $region81: #{gru_crf_forward.1} parent=0 // pred_fallthru
    _

</llo_original>
